<compile_context>
chip_gen: v7x
topology: tpu7x:2x2x1
jax: 0.10.0
libtpu: 0.0.40
codegen_flags: <defaults>
</compile_context>

<pallas_src>
import jax
import jax.numpy as jnp
from jax.experimental import pallas as pl
from jax.experimental.pallas import tpu as pltpu

BN_EPS = 1e-5


def _deformnet_kernel(x_ref,
                      w1_ref, g1_ref, be1_ref,
                      w2_ref, g2_ref, be2_ref,
                      w3_ref, g3_ref, be3_ref,
                      w4_ref, g4_ref, be4_ref,
                      w5_ref, b5_ref,
                      o_ref):
    """x_ref: (B, C, N) bf16.  w1..w4: (Cout, Cin) bf16.  g/be: (Cout, 1) f32.
    w5_ref: (3, C//4) f32, b5_ref: (3, 1) f32.  o_ref: (3, B*N) f32 (lane-dense slab)."""
    B, _, N = x_ref.shape
    inv_cnt = 1.0 / float(B * N)

    # Fold batch into lanes once at entry (a few vreg copies, zero extra HBM traffic):
    # every layer below is a single lane-dense matmul on a (C, B*N) operand.
    h = jnp.concatenate([x_ref[b] for b in range(B)], axis=-1)          # (C, B*N) bf16

    def conv_bn_relu(h, w_ref, g_ref, be_ref, out_dtype):
        # 1x1 Conv1d == one MXU matmul per layer (bf16 in, f32 accumulate).
        y = jnp.dot(w_ref[...], h, preferred_element_type=jnp.float32)  # (Cout, B*N) f32
        # Training-mode BatchNorm1d stats over (batch, points) == the lane axis.
        # Cancellation-safe two-pass form: mean first, then centered sum-of-squares.
        mean = y.sum(axis=1, keepdims=True) * inv_cnt                   # (Cout, 1)
        d = y - mean
        var = (d * d).sum(axis=1, keepdims=True) * inv_cnt              # (Cout, 1)
        # Fold BN into one per-channel scale/shift.  Conv bias cancels under training-mode BN.
        scale = g_ref[...] * jax.lax.rsqrt(var + BN_EPS)                # (Cout, 1)
        shift = be_ref[...] - mean * scale                              # (Cout, 1)
        return jnp.maximum(y * scale + shift, 0.0).astype(out_dtype)

    h = conv_bn_relu(h, w1_ref, g1_ref, be1_ref, jnp.bfloat16)
    h = conv_bn_relu(h, w2_ref, g2_ref, be2_ref, jnp.bfloat16)
    h = conv_bn_relu(h, w3_ref, g3_ref, be3_ref, jnp.bfloat16)
    h = conv_bn_relu(h, w4_ref, g4_ref, be4_ref, jnp.float32)           # no bf16 matmul follows

    # conv5 (C//4 -> 3) + bias + Tanh: one tiny matmul on the now-idle MXU, written as a single
    # lane-dense (3, B*N) slab (no per-batch masked stores).
    y5 = jnp.dot(w5_ref[...], h, preferred_element_type=jnp.float32) + b5_ref[...]
    o_ref[...] = jnp.tanh(y5).astype(o_ref.dtype)


def _vmem_limit_bytes():
    """Generation-aware VMEM budget: ~half of physical VMEM, capped at 64 MiB.
    v7x has 64 MiB physical VMEM per TC (-> 32 MiB budget); v5e/v6e have 128 MiB (-> 64 MiB)."""
    cap = 128 * 1024 * 1024
    try:
        cap = int(getattr(pltpu.get_tpu_info(), "vmem_capacity_bytes", cap))
    except Exception:
        pass
    return max(16 * 1024 * 1024, min(cap // 2, 64 * 1024 * 1024))


@jax.jit
def deformnet_forward(x_ncw, params):
    """DeformNet forward.  x_ncw: (B, C, N) in PyTorch Conv1d NCW layout.
    (The module's `drp_idx` argument is unused by its forward, so it is omitted here.)"""
    B, C, N = x_ncw.shape
    (w1, g1, be1, w2, g2, be2, w3, g3, be3, w4, g4, be4, w5, b5) = params

    vmem = pl.BlockSpec(memory_space=pltpu.MemorySpace.VMEM)
    kernel_args = (
        # bf16 activations halve the input DMA bytes; the MXU consumed bf16 anyway.
        x_ncw.astype(jnp.bfloat16),
        w1.astype(jnp.bfloat16), g1.reshape(-1, 1), be1.reshape(-1, 1),
        w2.astype(jnp.bfloat16), g2.reshape(-1, 1), be2.reshape(-1, 1),
        w3.astype(jnp.bfloat16), g3.reshape(-1, 1), be3.reshape(-1, 1),
        w4.astype(jnp.bfloat16), g4.reshape(-1, 1), be4.reshape(-1, 1),
        w5, b5.reshape(-1, 1),
    )

    # TODO(synk): production point counts (N in the thousands+) need a multi-pass structure
    # because every layer's training-mode BN requires GLOBAL (batch, points) statistics before
    # the next matmul: grid over the point axis (tile a multiple of 128, >=512 on v5e) with
    # per-layer two-pass BN (pass 1: matmul + pl.when-init/finalize sum/sumsq accumulation;
    # pass 2: apply global scale/shift fused with the next layer's matmul), intermediates staged
    # through HBM with double-buffered BlockSpecs, and dimension_semantics=("parallel", ...) on
    # the point-tile axis plus a cross-core stat combine to use both v7x TensorCores.  At the
    # demo size everything is VMEM-resident in a single grid-less step, where tiling is pure
    # overhead.
    out_slab = pl.pallas_call(
        _deformnet_kernel,
        out_shape=jax.ShapeDtypeStruct((3, B * N), jnp.float32),   # lane-dense output slab
        in_specs=[vmem] * len(kernel_args),
        out_specs=vmem,
        compiler_params=pltpu.CompilerParams(vmem_limit_bytes=_vmem_limit_bytes()),
    )(*kernel_args)

    # Cheap (3, B*N) -> (B, 3, N) rearrangement on a tiny array, outside the kernel.
    return out_slab.reshape(3, B, N).transpose(1, 0, 2)


def init_params(key, bottleneck_size):
    """Parameters mirroring the PyTorch module's shapes.

    Conv weights are stored in their natural (Cout, Cin) layout.  Conv biases for layers 1-4 are
    omitted because they cancel exactly under training-mode BatchNorm.  BN gamma/beta get
    non-trivial values so the affine BN path is exercised.
    """
    bs = bottleneck_size
    dims = [(bs, bs),                       # conv1 / bn1
            (bs // 2 + bs // 4, bs),        # conv2 / bn2
            (bs // 2, bs // 2 + bs // 4),   # conv3 / bn3
            (bs // 4, bs // 2),             # conv4 / bn4
            (3, bs // 4)]                   # conv5 (+ bias, tanh)
    params = []
    for i, (cout, cin) in enumerate(dims):
        key, kw, kb, kg, kbe = jax.random.split(key, 5)
        bound = 1.0 / (cin ** 0.5)
        w = jax.random.uniform(kw, (cout, cin), jnp.float32, -bound, bound)
        params.append(w)
        if i < 4:
            g = 1.0 + 0.1 * jax.random.normal(kg, (cout,), jnp.float32)
            be = 0.1 * jax.random.normal(kbe, (cout,), jnp.float32)
            params += [g, be]
        else:
            b = jax.random.uniform(kb, (cout,), jnp.float32, -bound, bound)
            params.append(b)
    return tuple(params)


def reference_forward(x_ncw, params):
    """Pure-JAX reference of the PyTorch forward (training-mode BN), with the same
    bf16-input / f32-accumulate matmul numerics the kernel uses on the MXU."""
    (w1, g1, be1, w2, g2, be2, w3, g3, be3, w4, g4, be4, w5, b5) = params

    def conv_bn_relu(h, w, g, be):
        y = jnp.einsum('oc,bcn->bon', w.astype(jnp.bfloat16), h.astype(jnp.bfloat16),
                       preferred_element_type=jnp.float32)
        mean = jnp.mean(y, axis=(0, 2), keepdims=True)
        var = jnp.mean((y - mean) ** 2, axis=(0, 2), keepdims=True)
        y_bn = (y - mean) * jax.lax.rsqrt(var + BN_EPS) * g.reshape(1, -1, 1) + be.reshape(1, -1, 1)
        return jnp.maximum(y_bn, 0.0)

    h = conv_bn_relu(x_ncw, w1, g1, be1)
    h = conv_bn_relu(h, w2, g2, be2)
    h = conv_bn_relu(h, w3, g3, be3)
    h = conv_bn_relu(h, w4, g4, be4)
    y5 = jnp.einsum('oc,bcn->bon', w5, h) + b5.reshape(1, -1, 1)
    return jnp.tanh(y5)


if __name__ == "__main__":
    # Small, shape-consistent config: bottleneck_size=256 gives the channel chain
    # 256 -> 256 -> 192 -> 128 -> 64 -> 3; 2 point clouds x 64 points => B*N = 128, so the
    # batch-stacked operands are exactly one lane tile wide.
    bottleneck_size = 256
    B, N = 2, 64

    key = jax.random.PRNGKey(0)
    kx, kp = jax.random.split(key)
    x = jax.random.normal(kx, (B, bottleneck_size, N), jnp.float32)
    params = init_params(kp, bottleneck_size)

    out = jax.block_until_ready(deformnet_forward(x, params))
    ref = reference_forward(x, params)

    assert out.shape == (B, 3, N), out.shape
    assert jnp.allclose(out, ref, atol=2e-3, rtol=2e-3), (
        "mismatch vs JAX reference, max abs diff = %e" % float(jnp.max(jnp.abs(out - ref))))

    print("KERNEL_OK")
</pallas_src>

<mosaic_0001>
module attributes {stable_mosaic.version = 11 : i64} {
  func.func @_deformnet_kernel(%arg0: memref<2x256x64xbf16, #tpu.memory_space<vmem>>, %arg1: memref<256x256xbf16, #tpu.memory_space<vmem>>, %arg2: memref<256x1xf32, #tpu.memory_space<vmem>>, %arg3: memref<256x1xf32, #tpu.memory_space<vmem>>, %arg4: memref<192x256xbf16, #tpu.memory_space<vmem>>, %arg5: memref<192x1xf32, #tpu.memory_space<vmem>>, %arg6: memref<192x1xf32, #tpu.memory_space<vmem>>, %arg7: memref<128x192xbf16, #tpu.memory_space<vmem>>, %arg8: memref<128x1xf32, #tpu.memory_space<vmem>>, %arg9: memref<128x1xf32, #tpu.memory_space<vmem>>, %arg10: memref<64x128xbf16, #tpu.memory_space<vmem>>, %arg11: memref<64x1xf32, #tpu.memory_space<vmem>>, %arg12: memref<64x1xf32, #tpu.memory_space<vmem>>, %arg13: memref<3x64xf32, #tpu.memory_space<vmem>>, %arg14: memref<3x1xf32, #tpu.memory_space<vmem>>, %arg15: memref<3x128xf32, #tpu.memory_space<vmem>>) attributes {dimension_semantics = [], scalar_prefetch = 0 : i64, scratch_operands = 0 : i64, tpu.core_type = #tpu.core_type<tc>} {
    %c0 = arith.constant 0 : index
    %c0_0 = arith.constant 0 : index
    %c0_1 = arith.constant 0 : index
    %0 = vector.load %arg0[%c0, %c0_0, %c0_1] : memref<2x256x64xbf16, #tpu.memory_space<vmem>>, vector<1x256x64xbf16>
    %1 = vector.shape_cast %0 : vector<1x256x64xbf16> to vector<256x64xbf16>
    %c1 = arith.constant 1 : index
    %c0_2 = arith.constant 0 : index
    %c0_3 = arith.constant 0 : index
    %2 = vector.load %arg0[%c1, %c0_2, %c0_3] : memref<2x256x64xbf16, #tpu.memory_space<vmem>>, vector<1x256x64xbf16>
    %3 = vector.shape_cast %2 : vector<1x256x64xbf16> to vector<256x64xbf16>
    %4 = tpu.concatenate %1, %3 in 1 : vector<256x64xbf16>, vector<256x64xbf16> -> vector<256x128xbf16>
    %c0_4 = arith.constant 0 : index
    %c0_5 = arith.constant 0 : index
    %5 = vector.load %arg1[%c0_4, %c0_5] : memref<256x256xbf16, #tpu.memory_space<vmem>>, vector<256x256xbf16>
    %cst = arith.constant dense<0.000000e+00> : vector<256x128xf32>
    %6 = tpu.matmul %5, %4, %cst {dimension_numbers = #tpu.dot_dimension_numbers<[1], [0], [0], [1], [0, 0, 1, 1], [], []>} : vector<256x256xbf16>, vector<256x128xbf16>, vector<256x128xf32> -> vector<256x128xf32>
    %cst_6 = arith.constant dense<0.000000e+00> : vector<256xf32>
    %7 = vector.multi_reduction <add>, %6, %cst_6 [1] : vector<256x128xf32> to vector<256xf32>
    %8 = vector.shape_cast %7 : vector<256xf32> to vector<256x1xf32>
    %cst_7 = arith.constant 7.812500e-03 : f32
    %9 = vector.broadcast %cst_7 : f32 to vector<256x1xf32>
    %10 = arith.mulf %8, %9 : vector<256x1xf32>
    %11 = vector.broadcast %10 : vector<256x1xf32> to vector<256x128xf32>
    %12 = arith.subf %6, %11 : vector<256x128xf32>
    %13 = arith.mulf %12, %12 : vector<256x128xf32>
    %cst_8 = arith.constant dense<0.000000e+00> : vector<256xf32>
    %14 = vector.multi_reduction <add>, %13, %cst_8 [1] : vector<256x128xf32> to vector<256xf32>
    %15 = vector.shape_cast %14 : vector<256xf32> to vector<256x1xf32>
    %cst_9 = arith.constant 7.812500e-03 : f32
    %16 = vector.broadcast %cst_9 : f32 to vector<256x1xf32>
    %17 = arith.mulf %15, %16 : vector<256x1xf32>
    %c0_10 = arith.constant 0 : index
    %c0_11 = arith.constant 0 : index
    %18 = vector.load %arg2[%c0_10, %c0_11] : memref<256x1xf32, #tpu.memory_space<vmem>>, vector<256x1xf32>
    %cst_12 = arith.constant 9.99999974E-6 : f32
    %19 = vector.broadcast %cst_12 : f32 to vector<256x1xf32>
    %20 = arith.addf %17, %19 : vector<256x1xf32>
    %21 = math.rsqrt %20 : vector<256x1xf32>
    %22 = arith.mulf %18, %21 : vector<256x1xf32>
    %c0_13 = arith.constant 0 : index
    %c0_14 = arith.constant 0 : index
    %23 = vector.load %arg3[%c0_13, %c0_14] : memref<256x1xf32, #tpu.memory_space<vmem>>, vector<256x1xf32>
    %24 = arith.mulf %10, %22 : vector<256x1xf32>
    %25 = arith.subf %23, %24 : vector<256x1xf32>
    %26 = vector.broadcast %22 : vector<256x1xf32> to vector<256x128xf32>
    %27 = arith.mulf %6, %26 : vector<256x128xf32>
    %28 = vector.broadcast %25 : vector<256x1xf32> to vector<256x128xf32>
    %29 = arith.addf %27, %28 : vector<256x128xf32>
    %cst_15 = arith.constant 0.000000e+00 : f32
    %30 = vector.broadcast %cst_15 : f32 to vector<256x128xf32>
    %31 = arith.maximumf %29, %30 : vector<256x128xf32>
    %32 = arith.truncf %31 : vector<256x128xf32> to vector<256x128xbf16>
    %c0_16 = arith.constant 0 : index
    %c0_17 = arith.constant 0 : index
    %33 = vector.load %arg4[%c0_16, %c0_17] : memref<192x256xbf16, #tpu.memory_space<vmem>>, vector<192x256xbf16>
    %cst_18 = arith.constant dense<0.000000e+00> : vector<192x128xf32>
    %34 = tpu.matmul %33, %32, %cst_18 {dimension_numbers = #tpu.dot_dimension_numbers<[1], [0], [0], [1], [0, 0, 1, 1], [], []>} : vector<192x256xbf16>, vector<256x128xbf16>, vector<192x128xf32> -> vector<192x128xf32>
    %cst_19 = arith.constant dense<0.000000e+00> : vector<192xf32>
    %35 = vector.multi_reduction <add>, %34, %cst_19 [1] : vector<192x128xf32> to vector<192xf32>
    %36 = vector.shape_cast %35 : vector<192xf32> to vector<192x1xf32>
    %cst_20 = arith.constant 7.812500e-03 : f32
    %37 = vector.broadcast %cst_20 : f32 to vector<192x1xf32>
    %38 = arith.mulf %36, %37 : vector<192x1xf32>
    %39 = vector.broadcast %38 : vector<192x1xf32> to vector<192x128xf32>
    %40 = arith.subf %34, %39 : vector<192x128xf32>
    %41 = arith.mulf %40, %40 : vector<192x128xf32>
    %cst_21 = arith.constant dense<0.000000e+00> : vector<192xf32>
    %42 = vector.multi_reduction <add>, %41, %cst_21 [1] : vector<192x128xf32> to vector<192xf32>
    %43 = vector.shape_cast %42 : vector<192xf32> to vector<192x1xf32>
    %cst_22 = arith.constant 7.812500e-03 : f32
    %44 = vector.broadcast %cst_22 : f32 to vector<192x1xf32>
    %45 = arith.mulf %43, %44 : vector<192x1xf32>
    %c0_23 = arith.constant 0 : index
    %c0_24 = arith.constant 0 : index
    %46 = vector.load %arg5[%c0_23, %c0_24] : memref<192x1xf32, #tpu.memory_space<vmem>>, vector<192x1xf32>
    %cst_25 = arith.constant 9.99999974E-6 : f32
    %47 = vector.broadcast %cst_25 : f32 to vector<192x1xf32>
    %48 = arith.addf %45, %47 : vector<192x1xf32>
    %49 = math.rsqrt %48 : vector<192x1xf32>
    %50 = arith.mulf %46, %49 : vector<192x1xf32>
    %c0_26 = arith.constant 0 : index
    %c0_27 = arith.constant 0 : index
    %51 = vector.load %arg6[%c0_26, %c0_27] : memref<192x1xf32, #tpu.memory_space<vmem>>, vector<192x1xf32>
    %52 = arith.mulf %38, %50 : vector<192x1xf32>
    %53 = arith.subf %51, %52 : vector<192x1xf32>
    %54 = vector.broadcast %50 : vector<192x1xf32> to vector<192x128xf32>
    %55 = arith.mulf %34, %54 : vector<192x128xf32>
    %56 = vector.broadcast %53 : vector<192x1xf32> to vector<192x128xf32>
    %57 = arith.addf %55, %56 : vector<192x128xf32>
    %cst_28 = arith.constant 0.000000e+00 : f32
    %58 = vector.broadcast %cst_28 : f32 to vector<192x128xf32>
    %59 = arith.maximumf %57, %58 : vector<192x128xf32>
    %60 = arith.truncf %59 : vector<192x128xf32> to vector<192x128xbf16>
    %c0_29 = arith.constant 0 : index
    %c0_30 = arith.constant 0 : index
    %61 = vector.load %arg7[%c0_29, %c0_30] : memref<128x192xbf16, #tpu.memory_space<vmem>>, vector<128x192xbf16>
    %cst_31 = arith.constant dense<0.000000e+00> : vector<128x128xf32>
    %62 = tpu.matmul %61, %60, %cst_31 {dimension_numbers = #tpu.dot_dimension_numbers<[1], [0], [0], [1], [0, 0, 1, 1], [], []>} : vector<128x192xbf16>, vector<192x128xbf16>, vector<128x128xf32> -> vector<128x128xf32>
    %cst_32 = arith.constant dense<0.000000e+00> : vector<128xf32>
    %63 = vector.multi_reduction <add>, %62, %cst_32 [1] : vector<128x128xf32> to vector<128xf32>
    %64 = vector.shape_cast %63 : vector<128xf32> to vector<128x1xf32>
    %cst_33 = arith.constant 7.812500e-03 : f32
    %65 = vector.broadcast %cst_33 : f32 to vector<128x1xf32>
    %66 = arith.mulf %64, %65 : vector<128x1xf32>
    %67 = vector.broadcast %66 : vector<128x1xf32> to vector<128x128xf32>
    %68 = arith.subf %62, %67 : vector<128x128xf32>
    %69 = arith.mulf %68, %68 : vector<128x128xf32>
    %cst_34 = arith.constant dense<0.000000e+00> : vector<128xf32>
    %70 = vector.multi_reduction <add>, %69, %cst_34 [1] : vector<128x128xf32> to vector<128xf32>
    %71 = vector.shape_cast %70 : vector<128xf32> to vector<128x1xf32>
    %cst_35 = arith.constant 7.812500e-03 : f32
    %72 = vector.broadcast %cst_35 : f32 to vector<128x1xf32>
    %73 = arith.mulf %71, %72 : vector<128x1xf32>
    %c0_36 = arith.constant 0 : index
    %c0_37 = arith.constant 0 : index
    %74 = vector.load %arg8[%c0_36, %c0_37] : memref<128x1xf32, #tpu.memory_space<vmem>>, vector<128x1xf32>
    %cst_38 = arith.constant 9.99999974E-6 : f32
    %75 = vector.broadcast %cst_38 : f32 to vector<128x1xf32>
    %76 = arith.addf %73, %75 : vector<128x1xf32>
    %77 = math.rsqrt %76 : vector<128x1xf32>
    %78 = arith.mulf %74, %77 : vector<128x1xf32>
    %c0_39 = arith.constant 0 : index
    %c0_40 = arith.constant 0 : index
    %79 = vector.load %arg9[%c0_39, %c0_40] : memref<128x1xf32, #tpu.memory_space<vmem>>, vector<128x1xf32>
    %80 = arith.mulf %66, %78 : vector<128x1xf32>
    %81 = arith.subf %79, %80 : vector<128x1xf32>
    %82 = vector.broadcast %78 : vector<128x1xf32> to vector<128x128xf32>
    %83 = arith.mulf %62, %82 : vector<128x128xf32>
    %84 = vector.broadcast %81 : vector<128x1xf32> to vector<128x128xf32>
    %85 = arith.addf %83, %84 : vector<128x128xf32>
    %cst_41 = arith.constant 0.000000e+00 : f32
    %86 = vector.broadcast %cst_41 : f32 to vector<128x128xf32>
    %87 = arith.maximumf %85, %86 : vector<128x128xf32>
    %88 = arith.truncf %87 : vector<128x128xf32> to vector<128x128xbf16>
    %c0_42 = arith.constant 0 : index
    %c0_43 = arith.constant 0 : index
    %89 = vector.load %arg10[%c0_42, %c0_43] : memref<64x128xbf16, #tpu.memory_space<vmem>>, vector<64x128xbf16>
    %cst_44 = arith.constant dense<0.000000e+00> : vector<64x128xf32>
    %90 = tpu.matmul %89, %88, %cst_44 {dimension_numbers = #tpu.dot_dimension_numbers<[1], [0], [0], [1], [0, 0, 1, 1], [], []>} : vector<64x128xbf16>, vector<128x128xbf16>, vector<64x128xf32> -> vector<64x128xf32>
    %cst_45 = arith.constant dense<0.000000e+00> : vector<64xf32>
    %91 = vector.multi_reduction <add>, %90, %cst_45 [1] : vector<64x128xf32> to vector<64xf32>
    %92 = vector.shape_cast %91 : vector<64xf32> to vector<64x1xf32>
    %cst_46 = arith.constant 7.812500e-03 : f32
    %93 = vector.broadcast %cst_46 : f32 to vector<64x1xf32>
    %94 = arith.mulf %92, %93 : vector<64x1xf32>
    %95 = vector.broadcast %94 : vector<64x1xf32> to vector<64x128xf32>
    %96 = arith.subf %90, %95 : vector<64x128xf32>
    %97 = arith.mulf %96, %96 : vector<64x128xf32>
    %cst_47 = arith.constant dense<0.000000e+00> : vector<64xf32>
    %98 = vector.multi_reduction <add>, %97, %cst_47 [1] : vector<64x128xf32> to vector<64xf32>
    %99 = vector.shape_cast %98 : vector<64xf32> to vector<64x1xf32>
    %cst_48 = arith.constant 7.812500e-03 : f32
    %100 = vector.broadcast %cst_48 : f32 to vector<64x1xf32>
    %101 = arith.mulf %99, %100 : vector<64x1xf32>
    %c0_49 = arith.constant 0 : index
    %c0_50 = arith.constant 0 : index
    %102 = vector.load %arg11[%c0_49, %c0_50] : memref<64x1xf32, #tpu.memory_space<vmem>>, vector<64x1xf32>
    %cst_51 = arith.constant 9.99999974E-6 : f32
    %103 = vector.broadcast %cst_51 : f32 to vector<64x1xf32>
    %104 = arith.addf %101, %103 : vector<64x1xf32>
    %105 = math.rsqrt %104 : vector<64x1xf32>
    %106 = arith.mulf %102, %105 : vector<64x1xf32>
    %c0_52 = arith.constant 0 : index
    %c0_53 = arith.constant 0 : index
    %107 = vector.load %arg12[%c0_52, %c0_53] : memref<64x1xf32, #tpu.memory_space<vmem>>, vector<64x1xf32>
    %108 = arith.mulf %94, %106 : vector<64x1xf32>
    %109 = arith.subf %107, %108 : vector<64x1xf32>
    %110 = vector.broadcast %106 : vector<64x1xf32> to vector<64x128xf32>
    %111 = arith.mulf %90, %110 : vector<64x128xf32>
    %112 = vector.broadcast %109 : vector<64x1xf32> to vector<64x128xf32>
    %113 = arith.addf %111, %112 : vector<64x128xf32>
    %cst_54 = arith.constant 0.000000e+00 : f32
    %114 = vector.broadcast %cst_54 : f32 to vector<64x128xf32>
    %115 = arith.maximumf %113, %114 : vector<64x128xf32>
    %c0_55 = arith.constant 0 : index
    %c0_56 = arith.constant 0 : index
    %116 = vector.load %arg13[%c0_55, %c0_56] : memref<3x64xf32, #tpu.memory_space<vmem>>, vector<3x64xf32>
    %cst_57 = arith.constant dense<0.000000e+00> : vector<3x128xf32>
    %117 = tpu.matmul %116, %115, %cst_57 {dimension_numbers = #tpu.dot_dimension_numbers<[1], [0], [0], [1], [0, 0, 1, 1], [], []>} : vector<3x64xf32>, vector<64x128xf32>, vector<3x128xf32> -> vector<3x128xf32>
    %c0_58 = arith.constant 0 : index
    %c0_59 = arith.constant 0 : index
    %118 = vector.load %arg14[%c0_58, %c0_59] : memref<3x1xf32, #tpu.memory_space<vmem>>, vector<3x1xf32>
    %119 = vector.broadcast %118 : vector<3x1xf32> to vector<3x128xf32>
    %120 = arith.addf %117, %119 : vector<3x128xf32>
    %121 = math.tanh %120 : vector<3x128xf32>
    %c0_60 = arith.constant 0 : index
    %c0_61 = arith.constant 0 : index
    %122 = vector.load %arg15[%c0_60, %c0_61] : memref<3x128xf32, #tpu.memory_space<vmem>>, vector<3x128xf32>
    tpu.vector_store %arg15[%c0_60, %c0_61], %121 {strides = array<i32>} : memref<3x128xf32, #tpu.memory_space<vmem>>, vector<3x128xf32>,
    return
  }
}

</mosaic_0001>

<llo_original>
// kernel: deformnet_forward.1
$region0: #{deformnet_forward.1}
  #allocation0 [shape = 'u32[]', space=smem, size = 0x4, offset = 0x4, fixed_abs, tag = 'smem constant byte address 0x4 - core index']
  #allocation1 [shape = 'u32[144,128]{1,0:T(1,128)}', space=vmem, size = 0x12000, scoped, tag = 'internal scratch']
  %s0 = inlined_call_operand.hbm [shape: bf16[2,256,64], index: 0, kind: input, shape index: {}]
  %s1 = inlined_call_operand.hbm [shape: bf16[256,256], index: 1, kind: input, shape index: {}]
  %s2 = inlined_call_operand.hbm [shape: f32[256,1], index: 2, kind: input, shape index: {}]
  %s3 = inlined_call_operand.hbm [shape: f32[256,1], index: 3, kind: input, shape index: {}]
  %s4 = inlined_call_operand.hbm [shape: bf16[192,256], index: 4, kind: input, shape index: {}]
  %s5 = inlined_call_operand.hbm [shape: f32[192,1], index: 5, kind: input, shape index: {}]
  %s6 = inlined_call_operand.hbm [shape: f32[192,1], index: 6, kind: input, shape index: {}]
  %s7 = inlined_call_operand.hbm [shape: bf16[128,192], index: 7, kind: input, shape index: {}]
  %s8 = inlined_call_operand.hbm [shape: f32[128,1], index: 8, kind: input, shape index: {}]
  %s9 = inlined_call_operand.hbm [shape: f32[128,1], index: 9, kind: input, shape index: {}]
  %s10 = inlined_call_operand.hbm [shape: bf16[64,128], index: 10, kind: input, shape index: {}]
  %s11 = inlined_call_operand.hbm [shape: f32[64,1], index: 11, kind: input, shape index: {}]
  %s12 = inlined_call_operand.hbm [shape: f32[64,1], index: 12, kind: input, shape index: {}]
  %s13 = inlined_call_operand.hbm [shape: f32[3,64], index: 13, kind: input, shape index: {}]
  %s14 = inlined_call_operand.hbm [shape: f32[3,1], index: 14, kind: input, shape index: {}]
  %s15 = inlined_call_operand.hbm [shape: f32[3,128], index: 15, kind: output, shape index: {}]
  %s16 = sld [smem:[#allocation0]]
  $region130: #{deformnet_forward.1} parent=0
    _
  %s18 = ssub.s32 1, %s16
  %s19 = scalar_select 0, %s18, %s16
  $region1: #{deformnet_forward.1} parent=0
    #allocation2 [shape = 'u8[131072]{0}', space=vmem, size = 0x20000, scoped, tag = 'input window, operand 0, single buffered']
    #allocation3 [shape = 's32[1]{0}', space=sflag, size = 0x4, scoped, tag = 'scoped memory for deformnet_forward.1']
    #allocation4 [shape = 's32[1]{0}', space=sflag, size = 0x4, scoped, tag = 'scoped memory for deformnet_forward.1']
    #allocation5 [shape = 'u8[131072]{0}', space=vmem, size = 0x20000, scoped, tag = 'input window, operand 1, single buffered']
    #allocation6 [shape = 's32[1]{0}', space=sflag, size = 0x4, scoped, tag = 'scoped memory for deformnet_forward.1']
    #allocation7 [shape = 'u8[131072]{0}', space=vmem, size = 0x20000, scoped, tag = 'input window, operand 2, single buffered']
    #allocation8 [shape = 'u8[131072]{0}', space=vmem, size = 0x20000, scoped, tag = 'input window, operand 3, single buffered']
    #allocation9 [shape = 's32[1]{0}', space=sflag, size = 0x4, scoped, tag = 'scoped memory for deformnet_forward.1']
    #allocation10 [shape = 'u8[98304]{0}', space=vmem, size = 0x18000, scoped, tag = 'input window, operand 4, single buffered']
    #allocation11 [shape = 'u8[98304]{0}', space=vmem, size = 0x18000, scoped, tag = 'input window, operand 5, single buffered']
    #allocation12 [shape = 's32[1]{0}', space=sflag, size = 0x4, scoped, tag = 'scoped memory for deformnet_forward.1']
    #allocation13 [shape = 'u8[98304]{0}', space=vmem, size = 0x18000, scoped, tag = 'input window, operand 6, single buffered']
    #allocation14 [shape = 'u8[65536]{0}', space=vmem, size = 0x10000, scoped, tag = 'input window, operand 7, single buffered']
    #allocation15 [shape = 's32[1]{0}', space=sflag, size = 0x4, scoped, tag = 'scoped memory for deformnet_forward.1']
    #allocation16 [shape = 'u8[65536]{0}', space=vmem, size = 0x10000, scoped, tag = 'input window, operand 8, single buffered']
    #allocation17 [shape = 'u8[65536]{0}', space=vmem, size = 0x10000, scoped, tag = 'input window, operand 9, single buffered']
    #allocation18 [shape = 's32[1]{0}', space=sflag, size = 0x4, scoped, tag = 'scoped memory for deformnet_forward.1']
    #allocation19 [shape = 'u8[16384]{0}', space=vmem, size = 0x4000, scoped, tag = 'input window, operand 10, single buffered']
    #allocation20 [shape = 'u8[32768]{0}', space=vmem, size = 0x8000, scoped, tag = 'input window, operand 11, single buffered']
    #allocation21 [shape = 's32[1]{0}', space=sflag, size = 0x4, scoped, tag = 'scoped memory for deformnet_forward.1']
    #allocation22 [shape = 'u8[32768]{0}', space=vmem, size = 0x8000, scoped, tag = 'input window, operand 12, single buffered']
    #allocation23 [shape = 'u8[2048]{0}', space=vmem, size = 0x800, scoped, tag = 'input window, operand 13, single buffered']
    #allocation24 [shape = 's32[1]{0}', space=sflag, size = 0x4, scoped, tag = 'scoped memory for deformnet_forward.1']
    #allocation25 [shape = 'u8[2048]{0}', space=vmem, size = 0x800, scoped, tag = 'input window, operand 14, single buffered']
    #allocation26 [shape = 'u8[2048]{0}', space=vmem, size = 0x800, scoped, tag = 'output window, operand 0, single buffered']
    %20 = vsyncpa [#allocation3], 0
    %21 = vsyncpa [#allocation6], 0
    %22 = vsyncpa [#allocation9], 0
    %23 = vsyncpa [#allocation12], 0
    %24 = vsyncpa [#allocation15], 0
    %25 = vsyncpa [#allocation18], 0
    %26 = vsyncpa [#allocation21], 0
    %27 = vsyncpa [#allocation24], 0
    %28 = vsyncpa [#allocation4], 0
    // Predicated region
    $region2: #{deformnet_forward.1} parent=1 // pred_check
      _
    $region3: #{deformnet_forward.1} parent=1 // pred_check_branch
      %30 = sbr.rel (0) target = $region5
    $region4: #{deformnet_forward.1} parent=1 // pred_region
      %s32 = ssub.s32 4096, 4096
      %33 = vsyncadd [#allocation3], %s32
      %s34 = sshll.u32 [#allocation2], 4
      %s35 = int_to_ptr.vmem [resolvable:$true] %s34
      %40 = dma.hbm_to_vmem [thread:$0]  %s0, 4096, %s35, [#allocation3], 64, 64, 4
    $region5: #{deformnet_forward.1} parent=1 // pred_fallthru
      _
    // Predicated region
    $region6: #{deformnet_forward.1} parent=1 // pred_check
      _
    $region7: #{deformnet_forward.1} parent=1 // pred_check_branch
      %42 = sbr.rel (0) target = $region9
    $region8: #{deformnet_forward.1} parent=1 // pred_region
      %s44 = ssub.s32 4096, 4096
      %45 = vsyncadd [#allocation6], %s44
      %s46 = sshll.u32 [#allocation5], 4
      %s47 = int_to_ptr.vmem [resolvable:$true] %s46
      %52 = dma.hbm_to_vmem [thread:$0]  %s1, 4096, %s47, [#allocation6], 128, 128, 8
    $region9: #{deformnet_forward.1} parent=1 // pred_fallthru
      _
    // Predicated region
    $region10: #{deformnet_forward.1} parent=1 // pred_check
      _
    $region11: #{deformnet_forward.1} parent=1 // pred_check_branch
      %54 = sbr.rel (0) target = $region13
    $region12: #{deformnet_forward.1} parent=1 // pred_region
      %s56 = ssub.s32 4096, 4096
      %57 = vsyncadd [#allocation6], %s56
      %s58 = sshll.u32 [#allocation7], 4
      %s59 = int_to_ptr.vmem [resolvable:$true] %s58
      %64 = dma.hbm_to_vmem [thread:$0]  %s2, 4096, %s59, [#allocation6], 128, 128, 8
    $region13: #{deformnet_forward.1} parent=1 // pred_fallthru
      _
    // Predicated region
    $region14: #{deformnet_forward.1} parent=1 // pred_check
      _
    $region15: #{deformnet_forward.1} parent=1 // pred_check_branch
      %66 = sbr.rel (0) target = $region17
    $region16: #{deformnet_forward.1} parent=1 // pred_region
      %s68 = ssub.s32 4096, 4096
      %69 = vsyncadd [#allocation9], %s68
      %s70 = sshll.u32 [#allocation8], 4
      %s71 = int_to_ptr.vmem [resolvable:$true] %s70
      %76 = dma.hbm_to_vmem [thread:$0]  %s3, 4096, %s71, [#allocation9], 128, 128, 8
    $region17: #{deformnet_forward.1} parent=1 // pred_fallthru
      _
    // Predicated region
    $region18: #{deformnet_forward.1} parent=1 // pred_check
      _
    $region19: #{deformnet_forward.1} parent=1 // pred_check_branch
      %78 = sbr.rel (0) target = $region21
    $region20: #{deformnet_forward.1} parent=1 // pred_region
      %s80 = ssub.s32 3072, 3072
      %81 = vsyncadd [#allocation9], %s80
      %s82 = sshll.u32 [#allocation10], 4
      %s83 = int_to_ptr.vmem [resolvable:$true] %s82
      %88 = dma.hbm_to_vmem [thread:$0]  %s4, 3072, %s83, [#allocation9], 128, 128, 8
    $region21: #{deformnet_forward.1} parent=1 // pred_fallthru
      _
    // Predicated region
    $region22: #{deformnet_forward.1} parent=1 // pred_check
      _
    $region23: #{deformnet_forward.1} parent=1 // pred_check_branch
      %90 = sbr.rel (0) target = $region25
    $region24: #{deformnet_forward.1} parent=1 // pred_region
      %s92 = ssub.s32 3072, 3072
      %93 = vsyncadd [#allocation12], %s92
      %s94 = sshll.u32 [#allocation11], 4
      %s95 = int_to_ptr.vmem [resolvable:$true] %s94
      %100 = dma.hbm_to_vmem [thread:$0]  %s5, 3072, %s95, [#allocation12], 128, 128, 8
    $region25: #{deformnet_forward.1} parent=1 // pred_fallthru
      _
    // Predicated region
    $region26: #{deformnet_forward.1} parent=1 // pred_check
      _
    $region27: #{deformnet_forward.1} parent=1 // pred_check_branch
      %102 = sbr.rel (0) target = $region29
    $region28: #{deformnet_forward.1} parent=1 // pred_region
      %s104 = ssub.s32 3072, 3072
      %105 = vsyncadd [#allocation12], %s104
      %s106 = sshll.u32 [#allocation13], 4
      %s107 = int_to_ptr.vmem [resolvable:$true] %s106
      %112 = dma.hbm_to_vmem [thread:$0]  %s6, 3072, %s107, [#allocation12], 128, 128, 8
    $region29: #{deformnet_forward.1} parent=1 // pred_fallthru
      _
    // Predicated region
    $region30: #{deformnet_forward.1} parent=1 // pred_check
      _
    $region31: #{deformnet_forward.1} parent=1 // pred_check_branch
      %114 = sbr.rel (0) target = $region33
    $region32: #{deformnet_forward.1} parent=1 // pred_region
      %s116 = ssub.s32 2048, 2048
      %117 = vsyncadd [#allocation15], %s116
      %s118 = sshll.u32 [#allocation14], 4
      %s119 = int_to_ptr.vmem [resolvable:$true] %s118
      %124 = dma.hbm_to_vmem [thread:$0]  %s7, 2048, %s119, [#allocation15], 128, 128, 8
    $region33: #{deformnet_forward.1} parent=1 // pred_fallthru
      _
    // Predicated region
    $region34: #{deformnet_forward.1} parent=1 // pred_check
      _
    $region35: #{deformnet_forward.1} parent=1 // pred_check_branch
      %126 = sbr.rel (0) target = $region37
    $region36: #{deformnet_forward.1} parent=1 // pred_region
      %s128 = ssub.s32 2048, 2048
      %129 = vsyncadd [#allocation15], %s128
      %s130 = sshll.u32 [#allocation16], 4
      %s131 = int_to_ptr.vmem [resolvable:$true] %s130
      %136 = dma.hbm_to_vmem [thread:$0]  %s8, 2048, %s131, [#allocation15], 128, 128, 8
    $region37: #{deformnet_forward.1} parent=1 // pred_fallthru
      _
    // Predicated region
    $region38: #{deformnet_forward.1} parent=1 // pred_check
      _
    $region39: #{deformnet_forward.1} parent=1 // pred_check_branch
      %138 = sbr.rel (0) target = $region41
    $region40: #{deformnet_forward.1} parent=1 // pred_region
      %s140 = ssub.s32 2048, 2048
      %141 = vsyncadd [#allocation18], %s140
      %s142 = sshll.u32 [#allocation17], 4
      %s143 = int_to_ptr.vmem [resolvable:$true] %s142
      %148 = dma.hbm_to_vmem [thread:$0]  %s9, 2048, %s143, [#allocation18], 128, 128, 8
    $region41: #{deformnet_forward.1} parent=1 // pred_fallthru
      _
    // Predicated region
    $region42: #{deformnet_forward.1} parent=1 // pred_check
      _
    $region43: #{deformnet_forward.1} parent=1 // pred_check_branch
      %150 = sbr.rel (0) target = $region45
    $region44: #{deformnet_forward.1} parent=1 // pred_region
      %s152 = ssub.s32 512, 512
      %153 = vsyncadd [#allocation18], %s152
      %s154 = sshll.u32 [#allocation19], 4
      %s155 = int_to_ptr.vmem [resolvable:$true] %s154
      %160 = dma.hbm_to_vmem [thread:$0]  %s10, 512, %s155, [#allocation18], 64, 64, 4
    $region45: #{deformnet_forward.1} parent=1 // pred_fallthru
      _
    // Predicated region
    $region46: #{deformnet_forward.1} parent=1 // pred_check
      _
    $region47: #{deformnet_forward.1} parent=1 // pred_check_branch
      %162 = sbr.rel (0) target = $region49
    $region48: #{deformnet_forward.1} parent=1 // pred_region
      %s164 = ssub.s32 1024, 1024
      %165 = vsyncadd [#allocation21], %s164
      %s166 = sshll.u32 [#allocation20], 4
      %s167 = int_to_ptr.vmem [resolvable:$true] %s166
      %172 = dma.hbm_to_vmem [thread:$0]  %s11, 1024, %s167, [#allocation21], 128, 128, 8
    $region49: #{deformnet_forward.1} parent=1 // pred_fallthru
      _
    // Predicated region
    $region50: #{deformnet_forward.1} parent=1 // pred_check
      _
    $region51: #{deformnet_forward.1} parent=1 // pred_check_branch
      %174 = sbr.rel (0) target = $region53
    $region52: #{deformnet_forward.1} parent=1 // pred_region
      %s176 = ssub.s32 1024, 1024
      %177 = vsyncadd [#allocation21], %s176
      %s178 = sshll.u32 [#allocation22], 4
      %s179 = int_to_ptr.vmem [resolvable:$true] %s178
      %184 = dma.hbm_to_vmem [thread:$0]  %s12, 1024, %s179, [#allocation21], 128, 128, 8
    $region53: #{deformnet_forward.1} parent=1 // pred_fallthru
      _
    // Predicated region
    $region54: #{deformnet_forward.1} parent=1 // pred_check
      _
    $region55: #{deformnet_forward.1} parent=1 // pred_check_branch
      %186 = sbr.rel (0) target = $region57
    $region56: #{deformnet_forward.1} parent=1 // pred_region
      %s188 = ssub.s32 64, 64
      %189 = vsyncadd [#allocation24], %s188
      %s191 = sshll.u32 [#allocation23], 4
      %s192 = int_to_ptr.vmem [resolvable:$true] %s191
      %194 = dma.hbm_to_vmem [thread:$0]  %s13, 64, %s192, [#allocation24]
    $region57: #{deformnet_forward.1} parent=1 // pred_fallthru
      _
    // Predicated region
    $region58: #{deformnet_forward.1} parent=1 // pred_check
      _
    $region59: #{deformnet_forward.1} parent=1 // pred_check_branch
      %196 = sbr.rel (0) target = $region61
    $region60: #{deformnet_forward.1} parent=1 // pred_region
      %s198 = ssub.s32 64, 64
      %199 = vsyncadd [#allocation24], %s198
      %s201 = sshll.u32 [#allocation25], 4
      %s202 = int_to_ptr.vmem [resolvable:$true] %s201
      %204 = dma.hbm_to_vmem [thread:$0]  %s14, 64, %s202, [#allocation24]
    $region61: #{deformnet_forward.1} parent=1 // pred_fallthru
      _
    // Predicated region
    $region62: #{deformnet_forward.1} parent=1 // pred_check
      _
    $region63: #{deformnet_forward.1} parent=1 // pred_check_branch
      %206 = sbr.rel (0) target = $region65
    $region64: #{deformnet_forward.1} parent=1 // pred_region
      %207 = dma.done [#allocation3], 4096
    $region65: #{deformnet_forward.1} parent=1 // pred_fallthru
      _
    // Predicated region
    $region66: #{deformnet_forward.1} parent=1 // pred_check
      _
    $region67: #{deformnet_forward.1} parent=1 // pred_check_branch
      %209 = sbr.rel (0) target = $region69
    $region68: #{deformnet_forward.1} parent=1 // pred_region
      %210 = dma.done [#allocation6], 4096
    $region69: #{deformnet_forward.1} parent=1 // pred_fallthru
      _
    // Predicated region
    $region70: #{deformnet_forward.1} parent=1 // pred_check
      _
    $region71: #{deformnet_forward.1} parent=1 // pred_check_branch
      %212 = sbr.rel (0) target = $region73
    $region72: #{deformnet_forward.1} parent=1 // pred_region
      %213 = dma.done [#allocation6], 4096
    $region73: #{deformnet_forward.1} parent=1 // pred_fallthru
      _
    // Predicated region
    $region74: #{deformnet_forward.1} parent=1 // pred_check
      _
    $region75: #{deformnet_forward.1} parent=1 // pred_check_branch
      %215 = sbr.rel (0) target = $region77
    $region76: #{deformnet_forward.1} parent=1 // pred_region
      %216 = dma.done [#allocation9], 4096
    $region77: #{deformnet_forward.1} parent=1 // pred_fallthru
      _
    // Predicated region
    $region78: #{deformnet_forward.1} parent=1 // pred_check
      _
    $region79: #{deformnet_forward.1} parent=1 // pred_check_branch
      %218 = sbr.rel (0) target = $region81
    $region80: #{deformnet_forward.1} parent=1 // pred_region
      %219 = dma.done [#allocation9], 3072
    $region81: #{deformnet_forward.1} parent=1 // pred_fallthru
      _
    // Predicated region
    $region82: #{deformnet_forward.1} parent=1 // pred_check
      _
    $region83: #{deformnet_forward.1} parent=1 // pred_check_branch
      %221 = sbr.rel (0) target = $region85
    $region84: #{deformnet_forward.1} parent=1 // pred_region
      %222 = dma.done [#allocation12], 3072
    $region85: #{deformnet_forward.1} parent=1 // pred_fallthru
      _
    // Predicated region
    $region86: #{deformnet_forward.1} parent=1 // pred_check
      _
    $region87: #{deformnet_forward.1} parent=1 // pred_check_branch
      %224 = sbr.rel (0) target = $region89
    $region88: #{deformnet_forward.1} parent=1 // pred_region
      %225 = dma.done [#allocation12], 3072
    $region89: #{deformnet_forward.1} parent=1 // pred_fallthru
      _
    // Predicated region
    $region90: #{deformnet_forward.1} parent=1 // pred_check
      _
    $region91: #{deformnet_forward.1} parent=1 // pred_check_branch
      %227 = sbr.rel (0) target = $region93
    $region92: #{deformnet_forward.1} parent=1 // pred_region
      %228 = dma.done [#allocation15], 2048
    $region93: #{deformnet_forward.1} parent=1 // pred_fallthru
      _
    // Predicated region
    $region94: #{deformnet_forward.1} parent=1 // pred_check
      _
    $region95: #{deformnet_forward.1} parent=1 // pred_check_branch
      %230 = sbr.rel (0) target = $region97
    $region96: #{deformnet_forward.1} parent=1 // pred_region
      %231 = dma.done [#allocation15], 2048
    $region97: #{deformnet_forward.1} parent=1 // pred_fallthru
      _
    // Predicated region
    $region98: #{deformnet_forward.1} parent=1 // pred_check
      _
    $region99: #{deformnet_forward.1} parent=1 // pred_check_branch
      %233 = sbr.rel (0) target = $region101
    $region100: #{deformnet_forward.1} parent=1 // pred_region
      %234 = dma.done [#allocation18], 2048
    $region101: #{deformnet_forward.1} parent=1 // pred_fallthru
      _
    // Predicated region
    $region102: #{deformnet_forward.1} parent=1 // pred_check
      _
    $region103: #{deformnet_forward.1} parent=1 // pred_check_branch
      %236 = sbr.rel (0) target = $region105
    $region104: #{deformnet_forward.1} parent=1 // pred_region
      %237 = dma.done [#allocation18], 512
    $region105: #{deformnet_forward.1} parent=1 // pred_fallthru
      _
    // Predicated region
    $region106: #{deformnet_forward.1} parent=1 // pred_check
      _
    $region107: #{deformnet_forward.1} parent=1 // pred_check_branch
      %239 = sbr.rel (0) target = $region109
    $region108: #{deformnet_forward.1} parent=1 // pred_region
      %240 = dma.done [#allocation21], 1024
    $region109: #{deformnet_forward.1} parent=1 // pred_fallthru
      _
    // Predicated region
    $region110: #{deformnet_forward.1} parent=1 // pred_check
      _
    $region111: #{deformnet_forward.1} parent=1 // pred_check_branch
      %242 = sbr.rel (0) target = $region113
    $region112: #{deformnet_forward.1} parent=1 // pred_region
      %243 = dma.done [#allocation21], 1024
    $region113: #{deformnet_forward.1} parent=1 // pred_fallthru
      _
    // Predicated region
    $region114: #{deformnet_forward.1} parent=1 // pred_check
      _
    $region115: #{deformnet_forward.1} parent=1 // pred_check_branch
      %245 = sbr.rel (0) target = $region117
    $region116: #{deformnet_forward.1} parent=1 // pred_region
      %246 = dma.done [#allocation24], 64
    $region117: #{deformnet_forward.1} parent=1 // pred_fallthru
      _
    // Predicated region
    $region118: #{deformnet_forward.1} parent=1 // pred_check
      _
    $region119: #{deformnet_forward.1} parent=1 // pred_check_branch
      %248 = sbr.rel (0) target = $region121
    $region120: #{deformnet_forward.1} parent=1 // pred_region
      %249 = dma.done [#allocation24], 64
    $region121: #{deformnet_forward.1} parent=1 // pred_fallthru
      _
    %v251 = vld [vmem:[#allocation2] sm:$0xf]
    %v252 = vld [vmem:[#allocation2 + $0x4] sm:$0xf]
    %v253 = vld [vmem:[#allocation2 + $0x8] sm:$0xf]
    %v254 = vld [vmem:[#allocation2 + $0xc] sm:$0xf]
    %v255 = vld [vmem:[#allocation2 + $0x10] sm:$0xf]
    %v256 = vld [vmem:[#allocation2 + $0x14] sm:$0xf]
    %v257 = vld [vmem:[#allocation2 + $0x18] sm:$0xf]
    %v258 = vld [vmem:[#allocation2 + $0x1c] sm:$0xf]
    %v259 = vld [vmem:[#allocation2 + $0x20] sm:$0xf]
    %v260 = vld [vmem:[#allocation2 + $0x24] sm:$0xf]
    %v261 = vld [vmem:[#allocation2 + $0x28] sm:$0xf]
    %v262 = vld [vmem:[#allocation2 + $0x2c] sm:$0xf]
    %v263 = vld [vmem:[#allocation2 + $0x30] sm:$0xf]
    %v264 = vld [vmem:[#allocation2 + $0x34] sm:$0xf]
    %v265 = vld [vmem:[#allocation2 + $0x38] sm:$0xf]
    %v266 = vld [vmem:[#allocation2 + $0x3c] sm:$0xf]
    %v267 = vld [vmem:[#allocation2 + $0x40] sm:$0xf]
    %v268 = vld [vmem:[#allocation2 + $0x44] sm:$0xf]
    %v269 = vld [vmem:[#allocation2 + $0x48] sm:$0xf]
    %v270 = vld [vmem:[#allocation2 + $0x4c] sm:$0xf]
    %v271 = vld [vmem:[#allocation2 + $0x50] sm:$0xf]
    %v272 = vld [vmem:[#allocation2 + $0x54] sm:$0xf]
    %v273 = vld [vmem:[#allocation2 + $0x58] sm:$0xf]
    %v274 = vld [vmem:[#allocation2 + $0x5c] sm:$0xf]
    %v275 = vld [vmem:[#allocation2 + $0x60] sm:$0xf]
    %v276 = vld [vmem:[#allocation2 + $0x64] sm:$0xf]
    %v277 = vld [vmem:[#allocation2 + $0x68] sm:$0xf]
    %v278 = vld [vmem:[#allocation2 + $0x6c] sm:$0xf]
    %v279 = vld [vmem:[#allocation2 + $0x70] sm:$0xf]
    %v280 = vld [vmem:[#allocation2 + $0x74] sm:$0xf]
    %v281 = vld [vmem:[#allocation2 + $0x78] sm:$0xf]
    %v282 = vld [vmem:[#allocation2 + $0x7c] sm:$0xf]
    %s283 = scalar_lea.vmem [#allocation2], 128
    %v284 = vld [vmem:[%s283] sm:$0xf]
    %v285 = vld [vmem:[%s283 + $0x4] sm:$0xf]
    %v286 = vld [vmem:[%s283 + $0x8] sm:$0xf]
    %v287 = vld [vmem:[%s283 + $0xc] sm:$0xf]
    %v288 = vld [vmem:[%s283 + $0x10] sm:$0xf]
    %v289 = vld [vmem:[%s283 + $0x14] sm:$0xf]
    %v290 = vld [vmem:[%s283 + $0x18] sm:$0xf]
    %v291 = vld [vmem:[%s283 + $0x1c] sm:$0xf]
    %v292 = vld [vmem:[%s283 + $0x20] sm:$0xf]
    %v293 = vld [vmem:[%s283 + $0x24] sm:$0xf]
    %v294 = vld [vmem:[%s283 + $0x28] sm:$0xf]
    %v295 = vld [vmem:[%s283 + $0x2c] sm:$0xf]
    %v296 = vld [vmem:[%s283 + $0x30] sm:$0xf]
    %v297 = vld [vmem:[%s283 + $0x34] sm:$0xf]
    %v298 = vld [vmem:[%s283 + $0x38] sm:$0xf]
    %v299 = vld [vmem:[%s283 + $0x3c] sm:$0xf]
    %v300 = vld [vmem:[%s283 + $0x40] sm:$0xf]
    %v301 = vld [vmem:[%s283 + $0x44] sm:$0xf]
    %v302 = vld [vmem:[%s283 + $0x48] sm:$0xf]
    %v303 = vld [vmem:[%s283 + $0x4c] sm:$0xf]
    %v304 = vld [vmem:[%s283 + $0x50] sm:$0xf]
    %v305 = vld [vmem:[%s283 + $0x54] sm:$0xf]
    %v306 = vld [vmem:[%s283 + $0x58] sm:$0xf]
    %v307 = vld [vmem:[%s283 + $0x5c] sm:$0xf]
    %v308 = vld [vmem:[%s283 + $0x60] sm:$0xf]
    %v309 = vld [vmem:[%s283 + $0x64] sm:$0xf]
    %v310 = vld [vmem:[%s283 + $0x68] sm:$0xf]
    %v311 = vld [vmem:[%s283 + $0x6c] sm:$0xf]
    %v312 = vld [vmem:[%s283 + $0x70] sm:$0xf]
    %v313 = vld [vmem:[%s283 + $0x74] sm:$0xf]
    %v314 = vld [vmem:[%s283 + $0x78] sm:$0xf]
    %v315 = vld [vmem:[%s283 + $0x7c] sm:$0xf]
    %v348 = vunpack.c.l.b16 %v251
    %v349 = vunpack.c.l.b16 %v252
    %v350 = vunpack.c.l.b16 %v253
    %v351 = vunpack.c.l.b16 %v254
    %v352 = vunpack.c.l.b16 %v255
    %v353 = vunpack.c.l.b16 %v256
    %v354 = vunpack.c.l.b16 %v257
    %v355 = vunpack.c.l.b16 %v258
    %v356 = vunpack.c.l.b16 %v259
    %v357 = vunpack.c.l.b16 %v260
    %v358 = vunpack.c.l.b16 %v261
    %v359 = vunpack.c.l.b16 %v262
    %v360 = vunpack.c.l.b16 %v263
    %v361 = vunpack.c.l.b16 %v264
    %v362 = vunpack.c.l.b16 %v265
    %v363 = vunpack.c.l.b16 %v266
    %v364 = vunpack.c.l.b16 %v267
    %v365 = vunpack.c.l.b16 %v268
    %v366 = vunpack.c.l.b16 %v269
    %v367 = vunpack.c.l.b16 %v270
    %v368 = vunpack.c.l.b16 %v271
    %v369 = vunpack.c.l.b16 %v272
    %v370 = vunpack.c.l.b16 %v273
    %v371 = vunpack.c.l.b16 %v274
    %v372 = vunpack.c.l.b16 %v275
    %v373 = vunpack.c.l.b16 %v276
    %v374 = vunpack.c.l.b16 %v277
    %v375 = vunpack.c.l.b16 %v278
    %v376 = vunpack.c.l.b16 %v279
    %v377 = vunpack.c.l.b16 %v280
    %v378 = vunpack.c.l.b16 %v281
    %v379 = vunpack.c.l.b16 %v282
    %v380 = vpack.c.b16 %v349, %v348
    %v381 = vpack.c.b16 %v351, %v350
    %v382 = vpack.c.b16 %v353, %v352
    %v383 = vpack.c.b16 %v355, %v354
    %v384 = vpack.c.b16 %v357, %v356
    %v385 = vpack.c.b16 %v359, %v358
    %v386 = vpack.c.b16 %v361, %v360
    %v387 = vpack.c.b16 %v363, %v362
    %v388 = vpack.c.b16 %v365, %v364
    %v389 = vpack.c.b16 %v367, %v366
    %v390 = vpack.c.b16 %v369, %v368
    %v391 = vpack.c.b16 %v371, %v370
    %v392 = vpack.c.b16 %v373, %v372
    %v393 = vpack.c.b16 %v375, %v374
    %v394 = vpack.c.b16 %v377, %v376
    %v395 = vpack.c.b16 %v379, %v378
    %v428 = vunpack.c.l.b16 %v284
    %v429 = vunpack.c.l.b16 %v285
    %v430 = vunpack.c.l.b16 %v286
    %v431 = vunpack.c.l.b16 %v287
    %v432 = vunpack.c.l.b16 %v288
    %v433 = vunpack.c.l.b16 %v289
    %v434 = vunpack.c.l.b16 %v290
    %v435 = vunpack.c.l.b16 %v291
    %v436 = vunpack.c.l.b16 %v292
    %v437 = vunpack.c.l.b16 %v293
    %v438 = vunpack.c.l.b16 %v294
    %v439 = vunpack.c.l.b16 %v295
    %v440 = vunpack.c.l.b16 %v296
    %v441 = vunpack.c.l.b16 %v297
    %v442 = vunpack.c.l.b16 %v298
    %v443 = vunpack.c.l.b16 %v299
    %v444 = vunpack.c.l.b16 %v300
    %v445 = vunpack.c.l.b16 %v301
    %v446 = vunpack.c.l.b16 %v302
    %v447 = vunpack.c.l.b16 %v303
    %v448 = vunpack.c.l.b16 %v304
    %v449 = vunpack.c.l.b16 %v305
    %v450 = vunpack.c.l.b16 %v306
    %v451 = vunpack.c.l.b16 %v307
    %v452 = vunpack.c.l.b16 %v308
    %v453 = vunpack.c.l.b16 %v309
    %v454 = vunpack.c.l.b16 %v310
    %v455 = vunpack.c.l.b16 %v311
    %v456 = vunpack.c.l.b16 %v312
    %v457 = vunpack.c.l.b16 %v313
    %v458 = vunpack.c.l.b16 %v314
    %v459 = vunpack.c.l.b16 %v315
    %v460 = vpack.c.b16 %v429, %v428
    %v461 = vpack.c.b16 %v431, %v430
    %v462 = vpack.c.b16 %v433, %v432
    %v463 = vpack.c.b16 %v435, %v434
    %v464 = vpack.c.b16 %v437, %v436
    %v465 = vpack.c.b16 %v439, %v438
    %v466 = vpack.c.b16 %v441, %v440
    %v467 = vpack.c.b16 %v443, %v442
    %v468 = vpack.c.b16 %v445, %v444
    %v469 = vpack.c.b16 %v447, %v446
    %v470 = vpack.c.b16 %v449, %v448
    %v471 = vpack.c.b16 %v451, %v450
    %v472 = vpack.c.b16 %v453, %v452
    %v473 = vpack.c.b16 %v455, %v454
    %v474 = vpack.c.b16 %v457, %v456
    %v475 = vpack.c.b16 %v459, %v458
    %476 = vrot.lane.b32.xlu0 %v460, 64
    %v477 = vpop.permute.xlu0 %476
    %478 = vrot.lane.b32.xlu0 %v461, 64
    %v479 = vpop.permute.xlu0 %478
    %480 = vrot.lane.b32.xlu0 %v462, 64
    %v481 = vpop.permute.xlu0 %480
    %482 = vrot.lane.b32.xlu0 %v463, 64
    %v483 = vpop.permute.xlu0 %482
    %484 = vrot.lane.b32.xlu0 %v464, 64
    %v485 = vpop.permute.xlu0 %484
    %486 = vrot.lane.b32.xlu0 %v465, 64
    %v487 = vpop.permute.xlu0 %486
    %488 = vrot.lane.b32.xlu0 %v466, 64
    %v489 = vpop.permute.xlu0 %488
    %490 = vrot.lane.b32.xlu0 %v467, 64
    %v491 = vpop.permute.xlu0 %490
    %492 = vrot.lane.b32.xlu0 %v468, 64
    %v493 = vpop.permute.xlu0 %492
    %494 = vrot.lane.b32.xlu0 %v469, 64
    %v495 = vpop.permute.xlu0 %494
    %496 = vrot.lane.b32.xlu0 %v470, 64
    %v497 = vpop.permute.xlu0 %496
    %498 = vrot.lane.b32.xlu0 %v471, 64
    %v499 = vpop.permute.xlu0 %498
    %500 = vrot.lane.b32.xlu0 %v472, 64
    %v501 = vpop.permute.xlu0 %500
    %502 = vrot.lane.b32.xlu0 %v473, 64
    %v503 = vpop.permute.xlu0 %502
    %504 = vrot.lane.b32.xlu0 %v474, 64
    %v505 = vpop.permute.xlu0 %504
    %506 = vrot.lane.b32.xlu0 %v475, 64
    %v507 = vpop.permute.xlu0 %506
    %vm508 = vcmask 523264
    %v511 = vsel %vm508, %v380, %v477
    %v515 = vsel %vm508, %v381, %v479
    %v519 = vsel %vm508, %v382, %v481
    %v523 = vsel %vm508, %v383, %v483
    %v527 = vsel %vm508, %v384, %v485
    %v531 = vsel %vm508, %v385, %v487
    %v535 = vsel %vm508, %v386, %v489
    %v539 = vsel %vm508, %v387, %v491
    %v543 = vsel %vm508, %v388, %v493
    %v547 = vsel %vm508, %v389, %v495
    %v551 = vsel %vm508, %v390, %v497
    %v555 = vsel %vm508, %v391, %v499
    %v559 = vsel %vm508, %v392, %v501
    %v563 = vsel %vm508, %v393, %v503
    %v567 = vsel %vm508, %v394, %v505
    %v571 = vsel %vm508, %v395, %v507
    %v573 = vld [vmem:[#allocation5] sm:$0xff]
    %v574 = vld [vmem:[#allocation5 + $0x8] sm:$0xff]
    %v575 = vld [vmem:[#allocation5 + $0x10] sm:$0xff]
    %v576 = vld [vmem:[#allocation5 + $0x18] sm:$0xff]
    %v577 = vld [vmem:[#allocation5 + $0x20] sm:$0xff]
    %v578 = vld [vmem:[#allocation5 + $0x28] sm:$0xff]
    %v579 = vld [vmem:[#allocation5 + $0x30] sm:$0xff]
    %v580 = vld [vmem:[#allocation5 + $0x38] sm:$0xff]
    %v581 = vld [vmem:[#allocation5 + $0x40] sm:$0xff]
    %v582 = vld [vmem:[#allocation5 + $0x48] sm:$0xff]
    %v583 = vld [vmem:[#allocation5 + $0x50] sm:$0xff]
    %v584 = vld [vmem:[#allocation5 + $0x58] sm:$0xff]
    %v585 = vld [vmem:[#allocation5 + $0x60] sm:$0xff]
    %v586 = vld [vmem:[#allocation5 + $0x68] sm:$0xff]
    %v587 = vld [vmem:[#allocation5 + $0x70] sm:$0xff]
    %v588 = vld [vmem:[#allocation5 + $0x78] sm:$0xff]
    %v589 = vld [vmem:[#allocation5 + $0x80] sm:$0xff]
    %v590 = vld [vmem:[#allocation5 + $0x88] sm:$0xff]
    %v591 = vld [vmem:[#allocation5 + $0x90] sm:$0xff]
    %v592 = vld [vmem:[#allocation5 + $0x98] sm:$0xff]
    %v593 = vld [vmem:[#allocation5 + $0xa0] sm:$0xff]
    %v594 = vld [vmem:[#allocation5 + $0xa8] sm:$0xff]
    %v595 = vld [vmem:[#allocation5 + $0xb0] sm:$0xff]
    %v596 = vld [vmem:[#allocation5 + $0xb8] sm:$0xff]
    %v597 = vld [vmem:[#allocation5 + $0xc0] sm:$0xff]
    %v598 = vld [vmem:[#allocation5 + $0xc8] sm:$0xff]
    %v599 = vld [vmem:[#allocation5 + $0xd0] sm:$0xff]
    %v600 = vld [vmem:[#allocation5 + $0xd8] sm:$0xff]
    %v601 = vld [vmem:[#allocation5 + $0xe0] sm:$0xff]
    %v602 = vld [vmem:[#allocation5 + $0xe8] sm:$0xff]
    %v603 = vld [vmem:[#allocation5 + $0xf0] sm:$0xff]
    %v604 = vld [vmem:[#allocation5 + $0xf8] sm:$0xff]
    %v637 = vunpack.c.l.b16 %v573
    %v638 = vunpack.c.h.b16 %v573
    %v639 = vunpack.c.l.b16 %v574
    %v640 = vunpack.c.h.b16 %v574
    %v641 = vunpack.c.l.b16 %v575
    %v642 = vunpack.c.h.b16 %v575
    %v643 = vunpack.c.l.b16 %v576
    %v644 = vunpack.c.h.b16 %v576
    %v645 = vunpack.c.l.b16 %v577
    %v646 = vunpack.c.h.b16 %v577
    %v647 = vunpack.c.l.b16 %v578
    %v648 = vunpack.c.h.b16 %v578
    %v649 = vunpack.c.l.b16 %v579
    %v650 = vunpack.c.h.b16 %v579
    %v651 = vunpack.c.l.b16 %v580
    %v652 = vunpack.c.h.b16 %v580
    %v653 = vunpack.c.l.b16 %v581
    %v654 = vunpack.c.h.b16 %v581
    %v655 = vunpack.c.l.b16 %v582
    %v656 = vunpack.c.h.b16 %v582
    %v657 = vunpack.c.l.b16 %v583
    %v658 = vunpack.c.h.b16 %v583
    %v659 = vunpack.c.l.b16 %v584
    %v660 = vunpack.c.h.b16 %v584
    %v661 = vunpack.c.l.b16 %v585
    %v662 = vunpack.c.h.b16 %v585
    %v663 = vunpack.c.l.b16 %v586
    %v664 = vunpack.c.h.b16 %v586
    %v665 = vunpack.c.l.b16 %v587
    %v666 = vunpack.c.h.b16 %v587
    %v667 = vunpack.c.l.b16 %v588
    %v668 = vunpack.c.h.b16 %v588
    %v669 = vunpack.c.l.b16 %v589
    %v670 = vunpack.c.h.b16 %v589
    %v671 = vunpack.c.l.b16 %v590
    %v672 = vunpack.c.h.b16 %v590
    %v673 = vunpack.c.l.b16 %v591
    %v674 = vunpack.c.h.b16 %v591
    %v675 = vunpack.c.l.b16 %v592
    %v676 = vunpack.c.h.b16 %v592
    %v677 = vunpack.c.l.b16 %v593
    %v678 = vunpack.c.h.b16 %v593
    %v679 = vunpack.c.l.b16 %v594
    %v680 = vunpack.c.h.b16 %v594
    %v681 = vunpack.c.l.b16 %v595
    %v682 = vunpack.c.h.b16 %v595
    %v683 = vunpack.c.l.b16 %v596
    %v684 = vunpack.c.h.b16 %v596
    %v685 = vunpack.c.l.b16 %v597
    %v686 = vunpack.c.h.b16 %v597
    %v687 = vunpack.c.l.b16 %v598
    %v688 = vunpack.c.h.b16 %v598
    %v689 = vunpack.c.l.b16 %v599
    %v690 = vunpack.c.h.b16 %v599
    %v691 = vunpack.c.l.b16 %v600
    %v692 = vunpack.c.h.b16 %v600
    %v693 = vunpack.c.l.b16 %v601
    %v694 = vunpack.c.h.b16 %v601
    %v695 = vunpack.c.l.b16 %v602
    %v696 = vunpack.c.h.b16 %v602
    %v697 = vunpack.c.l.b16 %v603
    %v698 = vunpack.c.h.b16 %v603
    %v699 = vunpack.c.l.b16 %v604
    %v700 = vunpack.c.h.b16 %v604
    %v701 = vpack.c.b16 %v639, %v637
    %v702 = vpack.c.b16 %v640, %v638
    %v703 = vpack.c.b16 %v643, %v641
    %v704 = vpack.c.b16 %v644, %v642
    %v705 = vpack.c.b16 %v647, %v645
    %v706 = vpack.c.b16 %v648, %v646
    %v707 = vpack.c.b16 %v651, %v649
    %v708 = vpack.c.b16 %v652, %v650
    %v709 = vpack.c.b16 %v655, %v653
    %v710 = vpack.c.b16 %v656, %v654
    %v711 = vpack.c.b16 %v659, %v657
    %v712 = vpack.c.b16 %v660, %v658
    %v713 = vpack.c.b16 %v663, %v661
    %v714 = vpack.c.b16 %v664, %v662
    %v715 = vpack.c.b16 %v667, %v665
    %v716 = vpack.c.b16 %v668, %v666
    %v717 = vpack.c.b16 %v671, %v669
    %v718 = vpack.c.b16 %v672, %v670
    %v719 = vpack.c.b16 %v675, %v673
    %v720 = vpack.c.b16 %v676, %v674
    %v721 = vpack.c.b16 %v679, %v677
    %v722 = vpack.c.b16 %v680, %v678
    %v723 = vpack.c.b16 %v683, %v681
    %v724 = vpack.c.b16 %v684, %v682
    %v725 = vpack.c.b16 %v687, %v685
    %v726 = vpack.c.b16 %v688, %v686
    %v727 = vpack.c.b16 %v691, %v689
    %v728 = vpack.c.b16 %v692, %v690
    %v729 = vpack.c.b16 %v695, %v693
    %v730 = vpack.c.b16 %v696, %v694
    %v731 = vpack.c.b16 %v699, %v697
    %v732 = vpack.c.b16 %v700, %v698
    %765 = vmatprep.subr.bf16.mxu0 0
    %766 = vmatpush1.bf16.msra.mxu0 %v511
    %767 = vmatprep.subr.bf16.mxu0 0
    %768 = vmatpush1.bf16.msra.mxu0 %v515
    %769 = vmatprep.subr.bf16.mxu0 0
    %770 = vmatpush1.bf16.msra.mxu0 %v519
    %771 = vmatprep.subr.bf16.mxu0 0
    %772 = vmatpush1.bf16.msra.mxu0 %v523
    %773 = vmatprep.subr.bf16.mxu0 0
    %774 = vmatpush1.bf16.msra.mxu0 %v527
    %775 = vmatprep.subr.bf16.mxu0 0
    %776 = vmatpush1.bf16.msra.mxu0 %v531
    %777 = vmatprep.subr.bf16.mxu0 0
    %778 = vmatpush1.bf16.msra.mxu0 %v535
    %779 = vmatprep.subr.bf16.mxu0 0
    %780 = vmatpush1.bf16.msra.mxu0 %v539
    %781 = vmatprep.subr.bf16.mxu0 0
    %782 = vmatpush1.bf16.msra.mxu0 %v543
    %783 = vmatprep.subr.bf16.mxu0 0
    %784 = vmatpush1.bf16.msra.mxu0 %v547
    %785 = vmatprep.subr.bf16.mxu0 0
    %786 = vmatpush1.bf16.msra.mxu0 %v551
    %787 = vmatprep.subr.bf16.mxu0 0
    %788 = vmatpush1.bf16.msra.mxu0 %v555
    %789 = vmatprep.subr.bf16.mxu0 0
    %790 = vmatpush1.bf16.msra.mxu0 %v559
    %791 = vmatprep.subr.bf16.mxu0 0
    %792 = vmatpush1.bf16.msra.mxu0 %v563
    %793 = vmatprep.subr.bf16.mxu0 0
    %794 = vmatpush1.bf16.msra.mxu0 %v567
    %795 = vmatprep.subr.bf16.mxu0 0
    %796 = vmatpush1.bf16.msra.mxu0 %v571
    %797 = vmatprep.mubr.bf16.mxu0 %v702
    %798 = vmatmul.mubr.bf16.gmra.mrb[0].mxu0 %v701
    %v799 = vpop.f32.mrb[0].mxu0
    %v800 = vadd.f32 0.0, %v799
    %v801 = vpop.f32.mrb[0].mxu0
    %v802 = vpop.f32.mrb[0].mxu0
    %v803 = vadd.f32 0.0, %v802
    %v804 = vpop.f32.mrb[0].mxu0
    %805 = vmatprep.mubr.bf16.mxu0 %v704
    %806 = vmatmul.mubr.bf16.gmra.mrb[0].mxu0 %v703
    %v807 = vpop.f32.mrb[0].mxu0
    %v808 = vadd.f32 0.0, %v807
    %v809 = vpop.f32.mrb[0].mxu0
    %v810 = vpop.f32.mrb[0].mxu0
    %v811 = vadd.f32 0.0, %v810
    %v812 = vpop.f32.mrb[0].mxu0
    %813 = vmatprep.mubr.bf16.mxu0 %v706
    %814 = vmatmul.mubr.bf16.gmra.mrb[0].mxu0 %v705
    %v815 = vpop.f32.mrb[0].mxu0
    %v816 = vadd.f32 0.0, %v815
    %v817 = vpop.f32.mrb[0].mxu0
    %v818 = vpop.f32.mrb[0].mxu0
    %v819 = vadd.f32 0.0, %v818
    %v820 = vpop.f32.mrb[0].mxu0
    %821 = vmatprep.mubr.bf16.mxu0 %v708
    %822 = vmatmul.mubr.bf16.gmra.mrb[0].mxu0 %v707
    %v823 = vpop.f32.mrb[0].mxu0
    %v824 = vadd.f32 0.0, %v823
    %v825 = vpop.f32.mrb[0].mxu0
    %v826 = vpop.f32.mrb[0].mxu0
    %v827 = vadd.f32 0.0, %v826
    %v828 = vpop.f32.mrb[0].mxu0
    %829 = vmatprep.mubr.bf16.mxu0 %v710
    %830 = vmatmul.mubr.bf16.gmra.mrb[0].mxu0 %v709
    %v831 = vpop.f32.mrb[0].mxu0
    %v832 = vadd.f32 0.0, %v831
    %v833 = vpop.f32.mrb[0].mxu0
    %v834 = vpop.f32.mrb[0].mxu0
    %v835 = vadd.f32 0.0, %v834
    %v836 = vpop.f32.mrb[0].mxu0
    %837 = vmatprep.mubr.bf16.mxu0 %v712
    %838 = vmatmul.mubr.bf16.gmra.mrb[0].mxu0 %v711
    %v839 = vpop.f32.mrb[0].mxu0
    %v840 = vadd.f32 0.0, %v839
    %v841 = vpop.f32.mrb[0].mxu0
    %v842 = vpop.f32.mrb[0].mxu0
    %v843 = vadd.f32 0.0, %v842
    %v844 = vpop.f32.mrb[0].mxu0
    %845 = vmatprep.mubr.bf16.mxu0 %v714
    %846 = vmatmul.mubr.bf16.gmra.mrb[0].mxu0 %v713
    %v847 = vpop.f32.mrb[0].mxu0
    %v848 = vadd.f32 0.0, %v847
    %v849 = vpop.f32.mrb[0].mxu0
    %v850 = vpop.f32.mrb[0].mxu0
    %v851 = vadd.f32 0.0, %v850
    %v852 = vpop.f32.mrb[0].mxu0
    %853 = vmatprep.mubr.bf16.mxu0 %v716
    %854 = vmatmul.mubr.bf16.gmra.mrb[0].mxu0 %v715
    %v855 = vpop.f32.mrb[0].mxu0
    %v856 = vadd.f32 0.0, %v855
    %v857 = vpop.f32.mrb[0].mxu0
    %v858 = vpop.f32.mrb[0].mxu0
    %v859 = vadd.f32 0.0, %v858
    %v860 = vpop.f32.mrb[0].mxu0
    %861 = vmatprep.mubr.bf16.mxu0 %v718
    %862 = vmatmul.mubr.bf16.gmra.mrb[0].mxu0 %v717
    %v863 = vpop.f32.mrb[0].mxu0
    %v864 = vadd.f32 0.0, %v863
    %v865 = vpop.f32.mrb[0].mxu0
    %v866 = vpop.f32.mrb[0].mxu0
    %v867 = vadd.f32 0.0, %v866
    %v868 = vpop.f32.mrb[0].mxu0
    %869 = vmatprep.mubr.bf16.mxu0 %v720
    %870 = vmatmul.mubr.bf16.gmra.mrb[0].mxu0 %v719
    %v871 = vpop.f32.mrb[0].mxu0
    %v872 = vadd.f32 0.0, %v871
    %v873 = vpop.f32.mrb[0].mxu0
    %v874 = vpop.f32.mrb[0].mxu0
    %v875 = vadd.f32 0.0, %v874
    %v876 = vpop.f32.mrb[0].mxu0
    %877 = vmatprep.mubr.bf16.mxu0 %v722
    %878 = vmatmul.mubr.bf16.gmra.mrb[0].mxu0 %v721
    %v879 = vpop.f32.mrb[0].mxu0
    %v880 = vadd.f32 0.0, %v879
    %v881 = vpop.f32.mrb[0].mxu0
    %v882 = vpop.f32.mrb[0].mxu0
    %v883 = vadd.f32 0.0, %v882
    %v884 = vpop.f32.mrb[0].mxu0
    %885 = vmatprep.mubr.bf16.mxu0 %v724
    %886 = vmatmul.mubr.bf16.gmra.mrb[0].mxu0 %v723
    %v887 = vpop.f32.mrb[0].mxu0
    %v888 = vadd.f32 0.0, %v887
    %v889 = vpop.f32.mrb[0].mxu0
    %v890 = vpop.f32.mrb[0].mxu0
    %v891 = vadd.f32 0.0, %v890
    %v892 = vpop.f32.mrb[0].mxu0
    %893 = vmatprep.mubr.bf16.mxu0 %v726
    %894 = vmatmul.mubr.bf16.gmra.mrb[0].mxu0 %v725
    %v895 = vpop.f32.mrb[0].mxu0
    %v896 = vadd.f32 0.0, %v895
    %v897 = vpop.f32.mrb[0].mxu0
    %v898 = vpop.f32.mrb[0].mxu0
    %v899 = vadd.f32 0.0, %v898
    %v900 = vpop.f32.mrb[0].mxu0
    %901 = vmatprep.mubr.bf16.mxu0 %v728
    %902 = vmatmul.mubr.bf16.gmra.mrb[0].mxu0 %v727
    %v903 = vpop.f32.mrb[0].mxu0
    %v904 = vadd.f32 0.0, %v903
    %v905 = vpop.f32.mrb[0].mxu0
    %v906 = vpop.f32.mrb[0].mxu0
    %v907 = vadd.f32 0.0, %v906
    %v908 = vpop.f32.mrb[0].mxu0
    %909 = vmatprep.mubr.bf16.mxu0 %v730
    %910 = vmatmul.mubr.bf16.gmra.mrb[0].mxu0 %v729
    %v911 = vpop.f32.mrb[0].mxu0
    %v912 = vadd.f32 0.0, %v911
    %v913 = vpop.f32.mrb[0].mxu0
    %v914 = vpop.f32.mrb[0].mxu0
    %v915 = vadd.f32 0.0, %v914
    %v916 = vpop.f32.mrb[0].mxu0
    %917 = vmatprep.mubr.bf16.mxu0 %v732
    %918 = vmatmul.mubr.bf16.gmra.mrb[0].mxu0 %v731
    %v919 = vpop.f32.mrb[0].mxu0
    %v920 = vadd.f32 0.0, %v919
    %v921 = vpop.f32.mrb[0].mxu0
    %v922 = vpop.f32.mrb[0].mxu0
    %v923 = vadd.f32 0.0, %v922
    %v924 = vpop.f32.mrb[0].mxu0
    %925 = vdwg.mxu0
    %926 = vadd.xlane.f32.xlu0 %v800
    %v927 = vpop.xlane.xlu0 %926
    %928 = vadd.xlane.f32.xlu0 %v803
    %v929 = vpop.xlane.xlu0 %928
    %930 = vadd.xlane.f32.xlu0 %v808
    %v931 = vpop.xlane.xlu0 %930
    %932 = vadd.xlane.f32.xlu0 %v811
    %v933 = vpop.xlane.xlu0 %932
    %934 = vadd.xlane.f32.xlu0 %v816
    %v935 = vpop.xlane.xlu0 %934
    %936 = vadd.xlane.f32.xlu0 %v819
    %v937 = vpop.xlane.xlu0 %936
    %938 = vadd.xlane.f32.xlu0 %v824
    %v939 = vpop.xlane.xlu0 %938
    %940 = vadd.xlane.f32.xlu0 %v827
    %v941 = vpop.xlane.xlu0 %940
    %942 = vadd.xlane.f32.xlu0 %v832
    %v943 = vpop.xlane.xlu0 %942
    %944 = vadd.xlane.f32.xlu0 %v835
    %v945 = vpop.xlane.xlu0 %944
    %946 = vadd.xlane.f32.xlu0 %v840
    %v947 = vpop.xlane.xlu0 %946
    %948 = vadd.xlane.f32.xlu0 %v843
    %v949 = vpop.xlane.xlu0 %948
    %950 = vadd.xlane.f32.xlu0 %v848
    %v951 = vpop.xlane.xlu0 %950
    %952 = vadd.xlane.f32.xlu0 %v851
    %v953 = vpop.xlane.xlu0 %952
    %954 = vadd.xlane.f32.xlu0 %v856
    %v955 = vpop.xlane.xlu0 %954
    %956 = vadd.xlane.f32.xlu0 %v859
    %v957 = vpop.xlane.xlu0 %956
    %958 = vadd.xlane.f32.xlu0 %v864
    %v959 = vpop.xlane.xlu0 %958
    %960 = vadd.xlane.f32.xlu0 %v867
    %v961 = vpop.xlane.xlu0 %960
    %962 = vadd.xlane.f32.xlu0 %v872
    %v963 = vpop.xlane.xlu0 %962
    %964 = vadd.xlane.f32.xlu0 %v875
    %v965 = vpop.xlane.xlu0 %964
    %966 = vadd.xlane.f32.xlu0 %v880
    %v967 = vpop.xlane.xlu0 %966
    %968 = vadd.xlane.f32.xlu0 %v883
    %v969 = vpop.xlane.xlu0 %968
    %970 = vadd.xlane.f32.xlu0 %v888
    %v971 = vpop.xlane.xlu0 %970
    %972 = vadd.xlane.f32.xlu0 %v891
    %v973 = vpop.xlane.xlu0 %972
    %974 = vadd.xlane.f32.xlu0 %v896
    %v975 = vpop.xlane.xlu0 %974
    %976 = vadd.xlane.f32.xlu0 %v899
    %v977 = vpop.xlane.xlu0 %976
    %978 = vadd.xlane.f32.xlu0 %v904
    %v979 = vpop.xlane.xlu0 %978
    %980 = vadd.xlane.f32.xlu0 %v907
    %v981 = vpop.xlane.xlu0 %980
    %982 = vadd.xlane.f32.xlu0 %v912
    %v983 = vpop.xlane.xlu0 %982
    %984 = vadd.xlane.f32.xlu0 %v915
    %v985 = vpop.xlane.xlu0 %984
    %986 = vadd.xlane.f32.xlu0 %v920
    %v987 = vpop.xlane.xlu0 %986
    %988 = vadd.xlane.f32.xlu0 %v923
    %v989 = vpop.xlane.xlu0 %988
    %v990 = vmul.f32 %v927, 0.0078125
    %v991 = vmul.f32 %v929, 0.0078125
    %v992 = vmul.f32 %v931, 0.0078125
    %v993 = vmul.f32 %v933, 0.0078125
    %v994 = vmul.f32 %v935, 0.0078125
    %v995 = vmul.f32 %v937, 0.0078125
    %v996 = vmul.f32 %v939, 0.0078125
    %v997 = vmul.f32 %v941, 0.0078125
    %v998 = vmul.f32 %v943, 0.0078125
    %v999 = vmul.f32 %v945, 0.0078125
    %v1000 = vmul.f32 %v947, 0.0078125
    %v1001 = vmul.f32 %v949, 0.0078125
    %v1002 = vmul.f32 %v951, 0.0078125
    %v1003 = vmul.f32 %v953, 0.0078125
    %v1004 = vmul.f32 %v955, 0.0078125
    %v1005 = vmul.f32 %v957, 0.0078125
    %v1006 = vmul.f32 %v959, 0.0078125
    %v1007 = vmul.f32 %v961, 0.0078125
    %v1008 = vmul.f32 %v963, 0.0078125
    %v1009 = vmul.f32 %v965, 0.0078125
    %v1010 = vmul.f32 %v967, 0.0078125
    %v1011 = vmul.f32 %v969, 0.0078125
    %v1012 = vmul.f32 %v971, 0.0078125
    %v1013 = vmul.f32 %v973, 0.0078125
    %v1014 = vmul.f32 %v975, 0.0078125
    %v1015 = vmul.f32 %v977, 0.0078125
    %v1016 = vmul.f32 %v979, 0.0078125
    %v1017 = vmul.f32 %v981, 0.0078125
    %v1018 = vmul.f32 %v983, 0.0078125
    %v1019 = vmul.f32 %v985, 0.0078125
    %v1020 = vmul.f32 %v987, 0.0078125
    %v1021 = vmul.f32 %v989, 0.0078125
    %v1022 = vsub.f32 %v800, %v990
    %v1023 = vsub.f32 %v803, %v991
    %v1024 = vsub.f32 %v808, %v992
    %v1025 = vsub.f32 %v811, %v993
    %v1026 = vsub.f32 %v816, %v994
    %v1027 = vsub.f32 %v819, %v995
    %v1028 = vsub.f32 %v824, %v996
    %v1029 = vsub.f32 %v827, %v997
    %v1030 = vsub.f32 %v832, %v998
    %v1031 = vsub.f32 %v835, %v999
    %v1032 = vsub.f32 %v840, %v1000
    %v1033 = vsub.f32 %v843, %v1001
    %v1034 = vsub.f32 %v848, %v1002
    %v1035 = vsub.f32 %v851, %v1003
    %v1036 = vsub.f32 %v856, %v1004
    %v1037 = vsub.f32 %v859, %v1005
    %v1038 = vsub.f32 %v864, %v1006
    %v1039 = vsub.f32 %v867, %v1007
    %v1040 = vsub.f32 %v872, %v1008
    %v1041 = vsub.f32 %v875, %v1009
    %v1042 = vsub.f32 %v880, %v1010
    %v1043 = vsub.f32 %v883, %v1011
    %v1044 = vsub.f32 %v888, %v1012
    %v1045 = vsub.f32 %v891, %v1013
    %v1046 = vsub.f32 %v896, %v1014
    %v1047 = vsub.f32 %v899, %v1015
    %v1048 = vsub.f32 %v904, %v1016
    %v1049 = vsub.f32 %v907, %v1017
    %v1050 = vsub.f32 %v912, %v1018
    %v1051 = vsub.f32 %v915, %v1019
    %v1052 = vsub.f32 %v920, %v1020
    %v1053 = vsub.f32 %v923, %v1021
    %v1054 = vmul.f32 %v1022, %v1022
    %v1055 = vmul.f32 %v1023, %v1023
    %v1056 = vmul.f32 %v1024, %v1024
    %v1057 = vmul.f32 %v1025, %v1025
    %v1058 = vmul.f32 %v1026, %v1026
    %v1059 = vmul.f32 %v1027, %v1027
    %v1060 = vmul.f32 %v1028, %v1028
    %v1061 = vmul.f32 %v1029, %v1029
    %v1062 = vmul.f32 %v1030, %v1030
    %v1063 = vmul.f32 %v1031, %v1031
    %v1064 = vmul.f32 %v1032, %v1032
    %v1065 = vmul.f32 %v1033, %v1033
    %v1066 = vmul.f32 %v1034, %v1034
    %v1067 = vmul.f32 %v1035, %v1035
    %v1068 = vmul.f32 %v1036, %v1036
    %v1069 = vmul.f32 %v1037, %v1037
    %v1070 = vmul.f32 %v1038, %v1038
    %v1071 = vmul.f32 %v1039, %v1039
    %v1072 = vmul.f32 %v1040, %v1040
    %v1073 = vmul.f32 %v1041, %v1041
    %v1074 = vmul.f32 %v1042, %v1042
    %v1075 = vmul.f32 %v1043, %v1043
    %v1076 = vmul.f32 %v1044, %v1044
    %v1077 = vmul.f32 %v1045, %v1045
    %v1078 = vmul.f32 %v1046, %v1046
    %v1079 = vmul.f32 %v1047, %v1047
    %v1080 = vmul.f32 %v1048, %v1048
    %v1081 = vmul.f32 %v1049, %v1049
    %v1082 = vmul.f32 %v1050, %v1050
    %v1083 = vmul.f32 %v1051, %v1051
    %v1084 = vmul.f32 %v1052, %v1052
    %v1085 = vmul.f32 %v1053, %v1053
    %1086 = vadd.xlane.f32.xlu0 %v1054
    %v1087 = vpop.xlane.xlu0 %1086
    %1088 = vadd.xlane.f32.xlu0 %v1055
    %v1089 = vpop.xlane.xlu0 %1088
    %1090 = vadd.xlane.f32.xlu0 %v1056
    %v1091 = vpop.xlane.xlu0 %1090
    %1092 = vadd.xlane.f32.xlu0 %v1057
    %v1093 = vpop.xlane.xlu0 %1092
    %1094 = vadd.xlane.f32.xlu0 %v1058
    %v1095 = vpop.xlane.xlu0 %1094
    %1096 = vadd.xlane.f32.xlu0 %v1059
    %v1097 = vpop.xlane.xlu0 %1096
    %1098 = vadd.xlane.f32.xlu0 %v1060
    %v1099 = vpop.xlane.xlu0 %1098
    %1100 = vadd.xlane.f32.xlu0 %v1061
    %v1101 = vpop.xlane.xlu0 %1100
    %1102 = vadd.xlane.f32.xlu0 %v1062
    %v1103 = vpop.xlane.xlu0 %1102
    %1104 = vadd.xlane.f32.xlu0 %v1063
    %v1105 = vpop.xlane.xlu0 %1104
    %1106 = vadd.xlane.f32.xlu0 %v1064
    %v1107 = vpop.xlane.xlu0 %1106
    %1108 = vadd.xlane.f32.xlu0 %v1065
    %v1109 = vpop.xlane.xlu0 %1108
    %1110 = vadd.xlane.f32.xlu0 %v1066
    %v1111 = vpop.xlane.xlu0 %1110
    %1112 = vadd.xlane.f32.xlu0 %v1067
    %v1113 = vpop.xlane.xlu0 %1112
    %1114 = vadd.xlane.f32.xlu0 %v1068
    %v1115 = vpop.xlane.xlu0 %1114
    %1116 = vadd.xlane.f32.xlu0 %v1069
    %v1117 = vpop.xlane.xlu0 %1116
    %1118 = vadd.xlane.f32.xlu0 %v1070
    %v1119 = vpop.xlane.xlu0 %1118
    %1120 = vadd.xlane.f32.xlu0 %v1071
    %v1121 = vpop.xlane.xlu0 %1120
    %1122 = vadd.xlane.f32.xlu0 %v1072
    %v1123 = vpop.xlane.xlu0 %1122
    %1124 = vadd.xlane.f32.xlu0 %v1073
    %v1125 = vpop.xlane.xlu0 %1124
    %1126 = vadd.xlane.f32.xlu0 %v1074
    %v1127 = vpop.xlane.xlu0 %1126
    %1128 = vadd.xlane.f32.xlu0 %v1075
    %v1129 = vpop.xlane.xlu0 %1128
    %1130 = vadd.xlane.f32.xlu0 %v1076
    %v1131 = vpop.xlane.xlu0 %1130
    %1132 = vadd.xlane.f32.xlu0 %v1077
    %v1133 = vpop.xlane.xlu0 %1132
    %1134 = vadd.xlane.f32.xlu0 %v1078
    %v1135 = vpop.xlane.xlu0 %1134
    %1136 = vadd.xlane.f32.xlu0 %v1079
    %v1137 = vpop.xlane.xlu0 %1136
    %1138 = vadd.xlane.f32.xlu0 %v1080
    %v1139 = vpop.xlane.xlu0 %1138
    %1140 = vadd.xlane.f32.xlu0 %v1081
    %v1141 = vpop.xlane.xlu0 %1140
    %1142 = vadd.xlane.f32.xlu0 %v1082
    %v1143 = vpop.xlane.xlu0 %1142
    %1144 = vadd.xlane.f32.xlu0 %v1083
    %v1145 = vpop.xlane.xlu0 %1144
    %1146 = vadd.xlane.f32.xlu0 %v1084
    %v1147 = vpop.xlane.xlu0 %1146
    %1148 = vadd.xlane.f32.xlu0 %v1085
    %v1149 = vpop.xlane.xlu0 %1148
    %v1150 = vmul.f32 %v1087, 0.0078125
    %v1151 = vmul.f32 %v1089, 0.0078125
    %v1152 = vmul.f32 %v1091, 0.0078125
    %v1153 = vmul.f32 %v1093, 0.0078125
    %v1154 = vmul.f32 %v1095, 0.0078125
    %v1155 = vmul.f32 %v1097, 0.0078125
    %v1156 = vmul.f32 %v1099, 0.0078125
    %v1157 = vmul.f32 %v1101, 0.0078125
    %v1158 = vmul.f32 %v1103, 0.0078125
    %v1159 = vmul.f32 %v1105, 0.0078125
    %v1160 = vmul.f32 %v1107, 0.0078125
    %v1161 = vmul.f32 %v1109, 0.0078125
    %v1162 = vmul.f32 %v1111, 0.0078125
    %v1163 = vmul.f32 %v1113, 0.0078125
    %v1164 = vmul.f32 %v1115, 0.0078125
    %v1165 = vmul.f32 %v1117, 0.0078125
    %v1166 = vmul.f32 %v1119, 0.0078125
    %v1167 = vmul.f32 %v1121, 0.0078125
    %v1168 = vmul.f32 %v1123, 0.0078125
    %v1169 = vmul.f32 %v1125, 0.0078125
    %v1170 = vmul.f32 %v1127, 0.0078125
    %v1171 = vmul.f32 %v1129, 0.0078125
    %v1172 = vmul.f32 %v1131, 0.0078125
    %v1173 = vmul.f32 %v1133, 0.0078125
    %v1174 = vmul.f32 %v1135, 0.0078125
    %v1175 = vmul.f32 %v1137, 0.0078125
    %v1176 = vmul.f32 %v1139, 0.0078125
    %v1177 = vmul.f32 %v1141, 0.0078125
    %v1178 = vmul.f32 %v1143, 0.0078125
    %v1179 = vmul.f32 %v1145, 0.0078125
    %v1180 = vmul.f32 %v1147, 0.0078125
    %v1181 = vmul.f32 %v1149, 0.0078125
    %v1182 = vld [vmem:[#allocation7] sm:$0xff]
    %v1183 = vld [vmem:[#allocation7 + $0x8] sm:$0xff]
    %v1184 = vld [vmem:[#allocation7 + $0x10] sm:$0xff]
    %v1185 = vld [vmem:[#allocation7 + $0x18] sm:$0xff]
    %v1186 = vld [vmem:[#allocation7 + $0x20] sm:$0xff]
    %v1187 = vld [vmem:[#allocation7 + $0x28] sm:$0xff]
    %v1188 = vld [vmem:[#allocation7 + $0x30] sm:$0xff]
    %v1189 = vld [vmem:[#allocation7 + $0x38] sm:$0xff]
    %v1190 = vld [vmem:[#allocation7 + $0x40] sm:$0xff]
    %v1191 = vld [vmem:[#allocation7 + $0x48] sm:$0xff]
    %v1192 = vld [vmem:[#allocation7 + $0x50] sm:$0xff]
    %v1193 = vld [vmem:[#allocation7 + $0x58] sm:$0xff]
    %v1194 = vld [vmem:[#allocation7 + $0x60] sm:$0xff]
    %v1195 = vld [vmem:[#allocation7 + $0x68] sm:$0xff]
    %v1196 = vld [vmem:[#allocation7 + $0x70] sm:$0xff]
    %v1197 = vld [vmem:[#allocation7 + $0x78] sm:$0xff]
    %v1198 = vld [vmem:[#allocation7 + $0x80] sm:$0xff]
    %v1199 = vld [vmem:[#allocation7 + $0x88] sm:$0xff]
    %v1200 = vld [vmem:[#allocation7 + $0x90] sm:$0xff]
    %v1201 = vld [vmem:[#allocation7 + $0x98] sm:$0xff]
    %v1202 = vld [vmem:[#allocation7 + $0xa0] sm:$0xff]
    %v1203 = vld [vmem:[#allocation7 + $0xa8] sm:$0xff]
    %v1204 = vld [vmem:[#allocation7 + $0xb0] sm:$0xff]
    %v1205 = vld [vmem:[#allocation7 + $0xb8] sm:$0xff]
    %v1206 = vld [vmem:[#allocation7 + $0xc0] sm:$0xff]
    %v1207 = vld [vmem:[#allocation7 + $0xc8] sm:$0xff]
    %v1208 = vld [vmem:[#allocation7 + $0xd0] sm:$0xff]
    %v1209 = vld [vmem:[#allocation7 + $0xd8] sm:$0xff]
    %v1210 = vld [vmem:[#allocation7 + $0xe0] sm:$0xff]
    %v1211 = vld [vmem:[#allocation7 + $0xe8] sm:$0xff]
    %v1212 = vld [vmem:[#allocation7 + $0xf0] sm:$0xff]
    %v1213 = vld [vmem:[#allocation7 + $0xf8] sm:$0xff]
    %v1214 = vadd.f32 %v1150, 1e-05
    %v1215 = vadd.f32 %v1151, 1e-05
    %v1216 = vadd.f32 %v1152, 1e-05
    %v1217 = vadd.f32 %v1153, 1e-05
    %v1218 = vadd.f32 %v1154, 1e-05
    %v1219 = vadd.f32 %v1155, 1e-05
    %v1220 = vadd.f32 %v1156, 1e-05
    %v1221 = vadd.f32 %v1157, 1e-05
    %v1222 = vadd.f32 %v1158, 1e-05
    %v1223 = vadd.f32 %v1159, 1e-05
    %v1224 = vadd.f32 %v1160, 1e-05
    %v1225 = vadd.f32 %v1161, 1e-05
    %v1226 = vadd.f32 %v1162, 1e-05
    %v1227 = vadd.f32 %v1163, 1e-05
    %v1228 = vadd.f32 %v1164, 1e-05
    %v1229 = vadd.f32 %v1165, 1e-05
    %v1230 = vadd.f32 %v1166, 1e-05
    %v1231 = vadd.f32 %v1167, 1e-05
    %v1232 = vadd.f32 %v1168, 1e-05
    %v1233 = vadd.f32 %v1169, 1e-05
    %v1234 = vadd.f32 %v1170, 1e-05
    %v1235 = vadd.f32 %v1171, 1e-05
    %v1236 = vadd.f32 %v1172, 1e-05
    %v1237 = vadd.f32 %v1173, 1e-05
    %v1238 = vadd.f32 %v1174, 1e-05
    %v1239 = vadd.f32 %v1175, 1e-05
    %v1240 = vadd.f32 %v1176, 1e-05
    %v1241 = vadd.f32 %v1177, 1e-05
    %v1242 = vadd.f32 %v1178, 1e-05
    %v1243 = vadd.f32 %v1179, 1e-05
    %v1244 = vadd.f32 %v1180, 1e-05
    %v1245 = vadd.f32 %v1181, 1e-05
    %v1246 = vrsqrt.pop %v1214
    %v1247 = vrsqrt.pop %v1215
    %v1248 = vrsqrt.pop %v1216
    %v1249 = vrsqrt.pop %v1217
    %v1250 = vrsqrt.pop %v1218
    %v1251 = vrsqrt.pop %v1219
    %v1252 = vrsqrt.pop %v1220
    %v1253 = vrsqrt.pop %v1221
    %v1254 = vrsqrt.pop %v1222
    %v1255 = vrsqrt.pop %v1223
    %v1256 = vrsqrt.pop %v1224
    %v1257 = vrsqrt.pop %v1225
    %v1258 = vrsqrt.pop %v1226
    %v1259 = vrsqrt.pop %v1227
    %v1260 = vrsqrt.pop %v1228
    %v1261 = vrsqrt.pop %v1229
    %v1262 = vrsqrt.pop %v1230
    %v1263 = vrsqrt.pop %v1231
    %v1264 = vrsqrt.pop %v1232
    %v1265 = vrsqrt.pop %v1233
    %v1266 = vrsqrt.pop %v1234
    %v1267 = vrsqrt.pop %v1235
    %v1268 = vrsqrt.pop %v1236
    %v1269 = vrsqrt.pop %v1237
    %v1270 = vrsqrt.pop %v1238
    %v1271 = vrsqrt.pop %v1239
    %v1272 = vrsqrt.pop %v1240
    %v1273 = vrsqrt.pop %v1241
    %v1274 = vrsqrt.pop %v1242
    %v1275 = vrsqrt.pop %v1243
    %v1276 = vrsqrt.pop %v1244
    %v1277 = vrsqrt.pop %v1245
    %v1278 = vmul.f32 %v1182, %v1246
    %v1279 = vmul.f32 %v1183, %v1247
    %v1280 = vmul.f32 %v1184, %v1248
    %v1281 = vmul.f32 %v1185, %v1249
    %v1282 = vmul.f32 %v1186, %v1250
    %v1283 = vmul.f32 %v1187, %v1251
    %v1284 = vmul.f32 %v1188, %v1252
    %v1285 = vmul.f32 %v1189, %v1253
    %v1286 = vmul.f32 %v1190, %v1254
    %v1287 = vmul.f32 %v1191, %v1255
    %v1288 = vmul.f32 %v1192, %v1256
    %v1289 = vmul.f32 %v1193, %v1257
    %v1290 = vmul.f32 %v1194, %v1258
    %v1291 = vmul.f32 %v1195, %v1259
    %v1292 = vmul.f32 %v1196, %v1260
    %v1293 = vmul.f32 %v1197, %v1261
    %v1294 = vmul.f32 %v1198, %v1262
    %v1295 = vmul.f32 %v1199, %v1263
    %v1296 = vmul.f32 %v1200, %v1264
    %v1297 = vmul.f32 %v1201, %v1265
    %v1298 = vmul.f32 %v1202, %v1266
    %v1299 = vmul.f32 %v1203, %v1267
    %v1300 = vmul.f32 %v1204, %v1268
    %v1301 = vmul.f32 %v1205, %v1269
    %v1302 = vmul.f32 %v1206, %v1270
    %v1303 = vmul.f32 %v1207, %v1271
    %v1304 = vmul.f32 %v1208, %v1272
    %v1305 = vmul.f32 %v1209, %v1273
    %v1306 = vmul.f32 %v1210, %v1274
    %v1307 = vmul.f32 %v1211, %v1275
    %v1308 = vmul.f32 %v1212, %v1276
    %v1309 = vmul.f32 %v1213, %v1277
    %v1310 = vld [vmem:[#allocation8] sm:$0xff]
    %v1311 = vld [vmem:[#allocation8 + $0x8] sm:$0xff]
    %v1312 = vld [vmem:[#allocation8 + $0x10] sm:$0xff]
    %v1313 = vld [vmem:[#allocation8 + $0x18] sm:$0xff]
    %v1314 = vld [vmem:[#allocation8 + $0x20] sm:$0xff]
    %v1315 = vld [vmem:[#allocation8 + $0x28] sm:$0xff]
    %v1316 = vld [vmem:[#allocation8 + $0x30] sm:$0xff]
    %v1317 = vld [vmem:[#allocation8 + $0x38] sm:$0xff]
    %v1318 = vld [vmem:[#allocation8 + $0x40] sm:$0xff]
    %v1319 = vld [vmem:[#allocation8 + $0x48] sm:$0xff]
    %v1320 = vld [vmem:[#allocation8 + $0x50] sm:$0xff]
    %v1321 = vld [vmem:[#allocation8 + $0x58] sm:$0xff]
    %v1322 = vld [vmem:[#allocation8 + $0x60] sm:$0xff]
    %v1323 = vld [vmem:[#allocation8 + $0x68] sm:$0xff]
    %v1324 = vld [vmem:[#allocation8 + $0x70] sm:$0xff]
    %v1325 = vld [vmem:[#allocation8 + $0x78] sm:$0xff]
    %v1326 = vld [vmem:[#allocation8 + $0x80] sm:$0xff]
    %v1327 = vld [vmem:[#allocation8 + $0x88] sm:$0xff]
    %v1328 = vld [vmem:[#allocation8 + $0x90] sm:$0xff]
    %v1329 = vld [vmem:[#allocation8 + $0x98] sm:$0xff]
    %v1330 = vld [vmem:[#allocation8 + $0xa0] sm:$0xff]
    %v1331 = vld [vmem:[#allocation8 + $0xa8] sm:$0xff]
    %v1332 = vld [vmem:[#allocation8 + $0xb0] sm:$0xff]
    %v1333 = vld [vmem:[#allocation8 + $0xb8] sm:$0xff]
    %v1334 = vld [vmem:[#allocation8 + $0xc0] sm:$0xff]
    %v1335 = vld [vmem:[#allocation8 + $0xc8] sm:$0xff]
    %v1336 = vld [vmem:[#allocation8 + $0xd0] sm:$0xff]
    %v1337 = vld [vmem:[#allocation8 + $0xd8] sm:$0xff]
    %v1338 = vld [vmem:[#allocation8 + $0xe0] sm:$0xff]
    %v1339 = vld [vmem:[#allocation8 + $0xe8] sm:$0xff]
    %v1340 = vld [vmem:[#allocation8 + $0xf0] sm:$0xff]
    %v1341 = vld [vmem:[#allocation8 + $0xf8] sm:$0xff]
    %v1342 = vmul.f32 %v990, %v1278
    %v1343 = vmul.f32 %v991, %v1279
    %v1344 = vmul.f32 %v992, %v1280
    %v1345 = vmul.f32 %v993, %v1281
    %v1346 = vmul.f32 %v994, %v1282
    %v1347 = vmul.f32 %v995, %v1283
    %v1348 = vmul.f32 %v996, %v1284
    %v1349 = vmul.f32 %v997, %v1285
    %v1350 = vmul.f32 %v998, %v1286
    %v1351 = vmul.f32 %v999, %v1287
    %v1352 = vmul.f32 %v1000, %v1288
    %v1353 = vmul.f32 %v1001, %v1289
    %v1354 = vmul.f32 %v1002, %v1290
    %v1355 = vmul.f32 %v1003, %v1291
    %v1356 = vmul.f32 %v1004, %v1292
    %v1357 = vmul.f32 %v1005, %v1293
    %v1358 = vmul.f32 %v1006, %v1294
    %v1359 = vmul.f32 %v1007, %v1295
    %v1360 = vmul.f32 %v1008, %v1296
    %v1361 = vmul.f32 %v1009, %v1297
    %v1362 = vmul.f32 %v1010, %v1298
    %v1363 = vmul.f32 %v1011, %v1299
    %v1364 = vmul.f32 %v1012, %v1300
    %v1365 = vmul.f32 %v1013, %v1301
    %v1366 = vmul.f32 %v1014, %v1302
    %v1367 = vmul.f32 %v1015, %v1303
    %v1368 = vmul.f32 %v1016, %v1304
    %v1369 = vmul.f32 %v1017, %v1305
    %v1370 = vmul.f32 %v1018, %v1306
    %v1371 = vmul.f32 %v1019, %v1307
    %v1372 = vmul.f32 %v1020, %v1308
    %v1373 = vmul.f32 %v1021, %v1309
    %v1374 = vsub.f32 %v1310, %v1342
    %v1375 = vsub.f32 %v1311, %v1343
    %v1376 = vsub.f32 %v1312, %v1344
    %v1377 = vsub.f32 %v1313, %v1345
    %v1378 = vsub.f32 %v1314, %v1346
    %v1379 = vsub.f32 %v1315, %v1347
    %v1380 = vsub.f32 %v1316, %v1348
    %v1381 = vsub.f32 %v1317, %v1349
    %v1382 = vsub.f32 %v1318, %v1350
    %v1383 = vsub.f32 %v1319, %v1351
    %v1384 = vsub.f32 %v1320, %v1352
    %v1385 = vsub.f32 %v1321, %v1353
    %v1386 = vsub.f32 %v1322, %v1354
    %v1387 = vsub.f32 %v1323, %v1355
    %v1388 = vsub.f32 %v1324, %v1356
    %v1389 = vsub.f32 %v1325, %v1357
    %v1390 = vsub.f32 %v1326, %v1358
    %v1391 = vsub.f32 %v1327, %v1359
    %v1392 = vsub.f32 %v1328, %v1360
    %v1393 = vsub.f32 %v1329, %v1361
    %v1394 = vsub.f32 %v1330, %v1362
    %v1395 = vsub.f32 %v1331, %v1363
    %v1396 = vsub.f32 %v1332, %v1364
    %v1397 = vsub.f32 %v1333, %v1365
    %v1398 = vsub.f32 %v1334, %v1366
    %v1399 = vsub.f32 %v1335, %v1367
    %v1400 = vsub.f32 %v1336, %v1368
    %v1401 = vsub.f32 %v1337, %v1369
    %v1402 = vsub.f32 %v1338, %v1370
    %v1403 = vsub.f32 %v1339, %v1371
    %v1404 = vsub.f32 %v1340, %v1372
    %v1405 = vsub.f32 %v1341, %v1373
    %1407 = vset.pattern.permute.xlu0 0
    %1408 = vperm.xlu0 %1407, %v1278
    %v1409 = vpop.permute.xlu0 %1408
    %1412 = vset.pattern.permute.xlu0 0
    %1413 = vperm.xlu0 %1412, %v1279
    %v1414 = vpop.permute.xlu0 %1413
    %1417 = vset.pattern.permute.xlu0 0
    %1418 = vperm.xlu0 %1417, %v1280
    %v1419 = vpop.permute.xlu0 %1418
    %1422 = vset.pattern.permute.xlu0 0
    %1423 = vperm.xlu0 %1422, %v1281
    %v1424 = vpop.permute.xlu0 %1423
    %1427 = vset.pattern.permute.xlu0 0
    %1428 = vperm.xlu0 %1427, %v1282
    %v1429 = vpop.permute.xlu0 %1428
    %1432 = vset.pattern.permute.xlu0 0
    %1433 = vperm.xlu0 %1432, %v1283
    %v1434 = vpop.permute.xlu0 %1433
    %1437 = vset.pattern.permute.xlu0 0
    %1438 = vperm.xlu0 %1437, %v1284
    %v1439 = vpop.permute.xlu0 %1438
    %1442 = vset.pattern.permute.xlu0 0
    %1443 = vperm.xlu0 %1442, %v1285
    %v1444 = vpop.permute.xlu0 %1443
    %1447 = vset.pattern.permute.xlu0 0
    %1448 = vperm.xlu0 %1447, %v1286
    %v1449 = vpop.permute.xlu0 %1448
    %1452 = vset.pattern.permute.xlu0 0
    %1453 = vperm.xlu0 %1452, %v1287
    %v1454 = vpop.permute.xlu0 %1453
    %1457 = vset.pattern.permute.xlu0 0
    %1458 = vperm.xlu0 %1457, %v1288
    %v1459 = vpop.permute.xlu0 %1458
    %1462 = vset.pattern.permute.xlu0 0
    %1463 = vperm.xlu0 %1462, %v1289
    %v1464 = vpop.permute.xlu0 %1463
    %1467 = vset.pattern.permute.xlu0 0
    %1468 = vperm.xlu0 %1467, %v1290
    %v1469 = vpop.permute.xlu0 %1468
    %1472 = vset.pattern.permute.xlu0 0
    %1473 = vperm.xlu0 %1472, %v1291
    %v1474 = vpop.permute.xlu0 %1473
    %1477 = vset.pattern.permute.xlu0 0
    %1478 = vperm.xlu0 %1477, %v1292
    %v1479 = vpop.permute.xlu0 %1478
    %1482 = vset.pattern.permute.xlu0 0
    %1483 = vperm.xlu0 %1482, %v1293
    %v1484 = vpop.permute.xlu0 %1483
    %1487 = vset.pattern.permute.xlu0 0
    %1488 = vperm.xlu0 %1487, %v1294
    %v1489 = vpop.permute.xlu0 %1488
    %1492 = vset.pattern.permute.xlu0 0
    %1493 = vperm.xlu0 %1492, %v1295
    %v1494 = vpop.permute.xlu0 %1493
    %1497 = vset.pattern.permute.xlu0 0
    %1498 = vperm.xlu0 %1497, %v1296
    %v1499 = vpop.permute.xlu0 %1498
    %1502 = vset.pattern.permute.xlu0 0
    %1503 = vperm.xlu0 %1502, %v1297
    %v1504 = vpop.permute.xlu0 %1503
    %1507 = vset.pattern.permute.xlu0 0
    %1508 = vperm.xlu0 %1507, %v1298
    %v1509 = vpop.permute.xlu0 %1508
    %1512 = vset.pattern.permute.xlu0 0
    %1513 = vperm.xlu0 %1512, %v1299
    %v1514 = vpop.permute.xlu0 %1513
    %1517 = vset.pattern.permute.xlu0 0
    %1518 = vperm.xlu0 %1517, %v1300
    %v1519 = vpop.permute.xlu0 %1518
    %1522 = vset.pattern.permute.xlu0 0
    %1523 = vperm.xlu0 %1522, %v1301
    %v1524 = vpop.permute.xlu0 %1523
    %1527 = vset.pattern.permute.xlu0 0
    %1528 = vperm.xlu0 %1527, %v1302
    %v1529 = vpop.permute.xlu0 %1528
    %1532 = vset.pattern.permute.xlu0 0
    %1533 = vperm.xlu0 %1532, %v1303
    %v1534 = vpop.permute.xlu0 %1533
    %1537 = vset.pattern.permute.xlu0 0
    %1538 = vperm.xlu0 %1537, %v1304
    %v1539 = vpop.permute.xlu0 %1538
    %1542 = vset.pattern.permute.xlu0 0
    %1543 = vperm.xlu0 %1542, %v1305
    %v1544 = vpop.permute.xlu0 %1543
    %1547 = vset.pattern.permute.xlu0 0
    %1548 = vperm.xlu0 %1547, %v1306
    %v1549 = vpop.permute.xlu0 %1548
    %1552 = vset.pattern.permute.xlu0 0
    %1553 = vperm.xlu0 %1552, %v1307
    %v1554 = vpop.permute.xlu0 %1553
    %1557 = vset.pattern.permute.xlu0 0
    %1558 = vperm.xlu0 %1557, %v1308
    %v1559 = vpop.permute.xlu0 %1558
    %1562 = vset.pattern.permute.xlu0 0
    %1563 = vperm.xlu0 %1562, %v1309
    %v1564 = vpop.permute.xlu0 %1563
    %v1566 = vmul.f32 %v800, %v1409
    %v1567 = vmul.f32 %v803, %v1414
    %v1568 = vmul.f32 %v808, %v1419
    %v1569 = vmul.f32 %v811, %v1424
    %v1570 = vmul.f32 %v816, %v1429
    %v1571 = vmul.f32 %v819, %v1434
    %v1572 = vmul.f32 %v824, %v1439
    %v1573 = vmul.f32 %v827, %v1444
    %v1574 = vmul.f32 %v832, %v1449
    %v1575 = vmul.f32 %v835, %v1454
    %v1576 = vmul.f32 %v840, %v1459
    %v1577 = vmul.f32 %v843, %v1464
    %v1578 = vmul.f32 %v848, %v1469
    %v1579 = vmul.f32 %v851, %v1474
    %v1580 = vmul.f32 %v856, %v1479
    %v1581 = vmul.f32 %v859, %v1484
    %v1582 = vmul.f32 %v864, %v1489
    %v1583 = vmul.f32 %v867, %v1494
    %v1584 = vmul.f32 %v872, %v1499
    %v1585 = vmul.f32 %v875, %v1504
    %v1586 = vmul.f32 %v880, %v1509
    %v1587 = vmul.f32 %v883, %v1514
    %v1588 = vmul.f32 %v888, %v1519
    %v1589 = vmul.f32 %v891, %v1524
    %v1590 = vmul.f32 %v896, %v1529
    %v1591 = vmul.f32 %v899, %v1534
    %v1592 = vmul.f32 %v904, %v1539
    %v1593 = vmul.f32 %v907, %v1544
    %v1594 = vmul.f32 %v912, %v1549
    %v1595 = vmul.f32 %v915, %v1554
    %v1596 = vmul.f32 %v920, %v1559
    %v1597 = vmul.f32 %v923, %v1564
    %1599 = vset.pattern.permute.xlu0 0
    %1600 = vperm.xlu0 %1599, %v1374
    %v1601 = vpop.permute.xlu0 %1600
    %1604 = vset.pattern.permute.xlu0 0
    %1605 = vperm.xlu0 %1604, %v1375
    %v1606 = vpop.permute.xlu0 %1605
    %1609 = vset.pattern.permute.xlu0 0
    %1610 = vperm.xlu0 %1609, %v1376
    %v1611 = vpop.permute.xlu0 %1610
    %1614 = vset.pattern.permute.xlu0 0
    %1615 = vperm.xlu0 %1614, %v1377
    %v1616 = vpop.permute.xlu0 %1615
    %1619 = vset.pattern.permute.xlu0 0
    %1620 = vperm.xlu0 %1619, %v1378
    %v1621 = vpop.permute.xlu0 %1620
    %1624 = vset.pattern.permute.xlu0 0
    %1625 = vperm.xlu0 %1624, %v1379
    %v1626 = vpop.permute.xlu0 %1625
    %1629 = vset.pattern.permute.xlu0 0
    %1630 = vperm.xlu0 %1629, %v1380
    %v1631 = vpop.permute.xlu0 %1630
    %1634 = vset.pattern.permute.xlu0 0
    %1635 = vperm.xlu0 %1634, %v1381
    %v1636 = vpop.permute.xlu0 %1635
    %1639 = vset.pattern.permute.xlu0 0
    %1640 = vperm.xlu0 %1639, %v1382
    %v1641 = vpop.permute.xlu0 %1640
    %1644 = vset.pattern.permute.xlu0 0
    %1645 = vperm.xlu0 %1644, %v1383
    %v1646 = vpop.permute.xlu0 %1645
    %1649 = vset.pattern.permute.xlu0 0
    %1650 = vperm.xlu0 %1649, %v1384
    %v1651 = vpop.permute.xlu0 %1650
    %1654 = vset.pattern.permute.xlu0 0
    %1655 = vperm.xlu0 %1654, %v1385
    %v1656 = vpop.permute.xlu0 %1655
    %1659 = vset.pattern.permute.xlu0 0
    %1660 = vperm.xlu0 %1659, %v1386
    %v1661 = vpop.permute.xlu0 %1660
    %1664 = vset.pattern.permute.xlu0 0
    %1665 = vperm.xlu0 %1664, %v1387
    %v1666 = vpop.permute.xlu0 %1665
    %1669 = vset.pattern.permute.xlu0 0
    %1670 = vperm.xlu0 %1669, %v1388
    %v1671 = vpop.permute.xlu0 %1670
    %1674 = vset.pattern.permute.xlu0 0
    %1675 = vperm.xlu0 %1674, %v1389
    %v1676 = vpop.permute.xlu0 %1675
    %1679 = vset.pattern.permute.xlu0 0
    %1680 = vperm.xlu0 %1679, %v1390
    %v1681 = vpop.permute.xlu0 %1680
    %1684 = vset.pattern.permute.xlu0 0
    %1685 = vperm.xlu0 %1684, %v1391
    %v1686 = vpop.permute.xlu0 %1685
    %1689 = vset.pattern.permute.xlu0 0
    %1690 = vperm.xlu0 %1689, %v1392
    %v1691 = vpop.permute.xlu0 %1690
    %1694 = vset.pattern.permute.xlu0 0
    %1695 = vperm.xlu0 %1694, %v1393
    %v1696 = vpop.permute.xlu0 %1695
    %1699 = vset.pattern.permute.xlu0 0
    %1700 = vperm.xlu0 %1699, %v1394
    %v1701 = vpop.permute.xlu0 %1700
    %1704 = vset.pattern.permute.xlu0 0
    %1705 = vperm.xlu0 %1704, %v1395
    %v1706 = vpop.permute.xlu0 %1705
    %1709 = vset.pattern.permute.xlu0 0
    %1710 = vperm.xlu0 %1709, %v1396
    %v1711 = vpop.permute.xlu0 %1710
    %1714 = vset.pattern.permute.xlu0 0
    %1715 = vperm.xlu0 %1714, %v1397
    %v1716 = vpop.permute.xlu0 %1715
    %1719 = vset.pattern.permute.xlu0 0
    %1720 = vperm.xlu0 %1719, %v1398
    %v1721 = vpop.permute.xlu0 %1720
    %1724 = vset.pattern.permute.xlu0 0
    %1725 = vperm.xlu0 %1724, %v1399
    %v1726 = vpop.permute.xlu0 %1725
    %1729 = vset.pattern.permute.xlu0 0
    %1730 = vperm.xlu0 %1729, %v1400
    %v1731 = vpop.permute.xlu0 %1730
    %1734 = vset.pattern.permute.xlu0 0
    %1735 = vperm.xlu0 %1734, %v1401
    %v1736 = vpop.permute.xlu0 %1735
    %1739 = vset.pattern.permute.xlu0 0
    %1740 = vperm.xlu0 %1739, %v1402
    %v1741 = vpop.permute.xlu0 %1740
    %1744 = vset.pattern.permute.xlu0 0
    %1745 = vperm.xlu0 %1744, %v1403
    %v1746 = vpop.permute.xlu0 %1745
    %1749 = vset.pattern.permute.xlu0 0
    %1750 = vperm.xlu0 %1749, %v1404
    %v1751 = vpop.permute.xlu0 %1750
    %1754 = vset.pattern.permute.xlu0 0
    %1755 = vperm.xlu0 %1754, %v1405
    %v1756 = vpop.permute.xlu0 %1755
    %v1758 = vadd.f32 %v1566, %v1601
    %v1759 = vadd.f32 %v1567, %v1606
    %v1760 = vadd.f32 %v1568, %v1611
    %v1761 = vadd.f32 %v1569, %v1616
    %v1762 = vadd.f32 %v1570, %v1621
    %v1763 = vadd.f32 %v1571, %v1626
    %v1764 = vadd.f32 %v1572, %v1631
    %v1765 = vadd.f32 %v1573, %v1636
    %v1766 = vadd.f32 %v1574, %v1641
    %v1767 = vadd.f32 %v1575, %v1646
    %v1768 = vadd.f32 %v1576, %v1651
    %v1769 = vadd.f32 %v1577, %v1656
    %v1770 = vadd.f32 %v1578, %v1661
    %v1771 = vadd.f32 %v1579, %v1666
    %v1772 = vadd.f32 %v1580, %v1671
    %v1773 = vadd.f32 %v1581, %v1676
    %v1774 = vadd.f32 %v1582, %v1681
    %v1775 = vadd.f32 %v1583, %v1686
    %v1776 = vadd.f32 %v1584, %v1691
    %v1777 = vadd.f32 %v1585, %v1696
    %v1778 = vadd.f32 %v1586, %v1701
    %v1779 = vadd.f32 %v1587, %v1706
    %v1780 = vadd.f32 %v1588, %v1711
    %v1781 = vadd.f32 %v1589, %v1716
    %v1782 = vadd.f32 %v1590, %v1721
    %v1783 = vadd.f32 %v1591, %v1726
    %v1784 = vadd.f32 %v1592, %v1731
    %v1785 = vadd.f32 %v1593, %v1736
    %v1786 = vadd.f32 %v1594, %v1741
    %v1787 = vadd.f32 %v1595, %v1746
    %v1788 = vadd.f32 %v1596, %v1751
    %v1789 = vadd.f32 %v1597, %v1756
    %v1790 = vmax.f32 %v1758, 0.0
    %v1791 = vmax.f32 %v1759, 0.0
    %v1792 = vmax.f32 %v1760, 0.0
    %v1793 = vmax.f32 %v1761, 0.0
    %v1794 = vmax.f32 %v1762, 0.0
    %v1795 = vmax.f32 %v1763, 0.0
    %v1796 = vmax.f32 %v1764, 0.0
    %v1797 = vmax.f32 %v1765, 0.0
    %v1798 = vmax.f32 %v1766, 0.0
    %v1799 = vmax.f32 %v1767, 0.0
    %v1800 = vmax.f32 %v1768, 0.0
    %v1801 = vmax.f32 %v1769, 0.0
    %v1802 = vmax.f32 %v1770, 0.0
    %v1803 = vmax.f32 %v1771, 0.0
    %v1804 = vmax.f32 %v1772, 0.0
    %v1805 = vmax.f32 %v1773, 0.0
    %v1806 = vmax.f32 %v1774, 0.0
    %v1807 = vmax.f32 %v1775, 0.0
    %v1808 = vmax.f32 %v1776, 0.0
    %v1809 = vmax.f32 %v1777, 0.0
    %v1810 = vmax.f32 %v1778, 0.0
    %v1811 = vmax.f32 %v1779, 0.0
    %v1812 = vmax.f32 %v1780, 0.0
    %v1813 = vmax.f32 %v1781, 0.0
    %v1814 = vmax.f32 %v1782, 0.0
    %v1815 = vmax.f32 %v1783, 0.0
    %v1816 = vmax.f32 %v1784, 0.0
    %v1817 = vmax.f32 %v1785, 0.0
    %v1818 = vmax.f32 %v1786, 0.0
    %v1819 = vmax.f32 %v1787, 0.0
    %v1820 = vmax.f32 %v1788, 0.0
    %v1821 = vmax.f32 %v1789, 0.0
    %v1822 = vpack.c.bf16 %v1791, %v1790
    %v1823 = vpack.c.bf16 %v1793, %v1792
    %v1824 = vpack.c.bf16 %v1795, %v1794
    %v1825 = vpack.c.bf16 %v1797, %v1796
    %v1826 = vpack.c.bf16 %v1799, %v1798
    %v1827 = vpack.c.bf16 %v1801, %v1800
    %v1828 = vpack.c.bf16 %v1803, %v1802
    %v1829 = vpack.c.bf16 %v1805, %v1804
    %v1830 = vpack.c.bf16 %v1807, %v1806
    %v1831 = vpack.c.bf16 %v1809, %v1808
    %v1832 = vpack.c.bf16 %v1811, %v1810
    %v1833 = vpack.c.bf16 %v1813, %v1812
    %v1834 = vpack.c.bf16 %v1815, %v1814
    %v1835 = vpack.c.bf16 %v1817, %v1816
    %v1836 = vpack.c.bf16 %v1819, %v1818
    %v1837 = vpack.c.bf16 %v1821, %v1820
    %v1838 = vld [vmem:[#allocation10] sm:$0xff]
    %v1839 = vld [vmem:[#allocation10 + $0x8] sm:$0xff]
    %v1840 = vld [vmem:[#allocation10 + $0x10] sm:$0xff]
    %v1841 = vld [vmem:[#allocation10 + $0x18] sm:$0xff]
    %v1842 = vld [vmem:[#allocation10 + $0x20] sm:$0xff]
    %v1843 = vld [vmem:[#allocation10 + $0x28] sm:$0xff]
    %v1844 = vld [vmem:[#allocation10 + $0x30] sm:$0xff]
    %v1845 = vld [vmem:[#allocation10 + $0x38] sm:$0xff]
    %v1846 = vld [vmem:[#allocation10 + $0x40] sm:$0xff]
    %v1847 = vld [vmem:[#allocation10 + $0x48] sm:$0xff]
    %v1848 = vld [vmem:[#allocation10 + $0x50] sm:$0xff]
    %v1849 = vld [vmem:[#allocation10 + $0x58] sm:$0xff]
    %v1850 = vld [vmem:[#allocation10 + $0x60] sm:$0xff]
    %v1851 = vld [vmem:[#allocation10 + $0x68] sm:$0xff]
    %v1852 = vld [vmem:[#allocation10 + $0x70] sm:$0xff]
    %v1853 = vld [vmem:[#allocation10 + $0x78] sm:$0xff]
    %v1854 = vld [vmem:[#allocation10 + $0x80] sm:$0xff]
    %v1855 = vld [vmem:[#allocation10 + $0x88] sm:$0xff]
    %v1856 = vld [vmem:[#allocation10 + $0x90] sm:$0xff]
    %v1857 = vld [vmem:[#allocation10 + $0x98] sm:$0xff]
    %v1858 = vld [vmem:[#allocation10 + $0xa0] sm:$0xff]
    %v1859 = vld [vmem:[#allocation10 + $0xa8] sm:$0xff]
    %v1860 = vld [vmem:[#allocation10 + $0xb0] sm:$0xff]
    %v1861 = vld [vmem:[#allocation10 + $0xb8] sm:$0xff]
    %v1886 = vunpack.c.l.b16 %v1838
    %v1887 = vunpack.c.h.b16 %v1838
    %v1888 = vunpack.c.l.b16 %v1839
    %v1889 = vunpack.c.h.b16 %v1839
    %v1890 = vunpack.c.l.b16 %v1840
    %v1891 = vunpack.c.h.b16 %v1840
    %v1892 = vunpack.c.l.b16 %v1841
    %v1893 = vunpack.c.h.b16 %v1841
    %v1894 = vunpack.c.l.b16 %v1842
    %v1895 = vunpack.c.h.b16 %v1842
    %v1896 = vunpack.c.l.b16 %v1843
    %v1897 = vunpack.c.h.b16 %v1843
    %v1898 = vunpack.c.l.b16 %v1844
    %v1899 = vunpack.c.h.b16 %v1844
    %v1900 = vunpack.c.l.b16 %v1845
    %v1901 = vunpack.c.h.b16 %v1845
    %v1902 = vunpack.c.l.b16 %v1846
    %v1903 = vunpack.c.h.b16 %v1846
    %v1904 = vunpack.c.l.b16 %v1847
    %v1905 = vunpack.c.h.b16 %v1847
    %v1906 = vunpack.c.l.b16 %v1848
    %v1907 = vunpack.c.h.b16 %v1848
    %v1908 = vunpack.c.l.b16 %v1849
    %v1909 = vunpack.c.h.b16 %v1849
    %v1910 = vunpack.c.l.b16 %v1850
    %v1911 = vunpack.c.h.b16 %v1850
    %v1912 = vunpack.c.l.b16 %v1851
    %v1913 = vunpack.c.h.b16 %v1851
    %v1914 = vunpack.c.l.b16 %v1852
    %v1915 = vunpack.c.h.b16 %v1852
    %v1916 = vunpack.c.l.b16 %v1853
    %v1917 = vunpack.c.h.b16 %v1853
    %v1918 = vunpack.c.l.b16 %v1854
    %v1919 = vunpack.c.h.b16 %v1854
    %v1920 = vunpack.c.l.b16 %v1855
    %v1921 = vunpack.c.h.b16 %v1855
    %v1922 = vunpack.c.l.b16 %v1856
    %v1923 = vunpack.c.h.b16 %v1856
    %v1924 = vunpack.c.l.b16 %v1857
    %v1925 = vunpack.c.h.b16 %v1857
    %v1926 = vunpack.c.l.b16 %v1858
    %v1927 = vunpack.c.h.b16 %v1858
    %v1928 = vunpack.c.l.b16 %v1859
    %v1929 = vunpack.c.h.b16 %v1859
    %v1930 = vunpack.c.l.b16 %v1860
    %v1931 = vunpack.c.h.b16 %v1860
    %v1932 = vunpack.c.l.b16 %v1861
    %v1933 = vunpack.c.h.b16 %v1861
    %v1934 = vpack.c.b16 %v1888, %v1886
    %v1935 = vpack.c.b16 %v1889, %v1887
    %v1936 = vpack.c.b16 %v1892, %v1890
    %v1937 = vpack.c.b16 %v1893, %v1891
    %v1938 = vpack.c.b16 %v1896, %v1894
    %v1939 = vpack.c.b16 %v1897, %v1895
    %v1940 = vpack.c.b16 %v1900, %v1898
    %v1941 = vpack.c.b16 %v1901, %v1899
    %v1942 = vpack.c.b16 %v1904, %v1902
    %v1943 = vpack.c.b16 %v1905, %v1903
    %v1944 = vpack.c.b16 %v1908, %v1906
    %v1945 = vpack.c.b16 %v1909, %v1907
    %v1946 = vpack.c.b16 %v1912, %v1910
    %v1947 = vpack.c.b16 %v1913, %v1911
    %v1948 = vpack.c.b16 %v1916, %v1914
    %v1949 = vpack.c.b16 %v1917, %v1915
    %v1950 = vpack.c.b16 %v1920, %v1918
    %v1951 = vpack.c.b16 %v1921, %v1919
    %v1952 = vpack.c.b16 %v1924, %v1922
    %v1953 = vpack.c.b16 %v1925, %v1923
    %v1954 = vpack.c.b16 %v1928, %v1926
    %v1955 = vpack.c.b16 %v1929, %v1927
    %v1956 = vpack.c.b16 %v1932, %v1930
    %v1957 = vpack.c.b16 %v1933, %v1931
    %1982 = vmatprep.subr.bf16.mxu0 0
    %1983 = vmatpush1.bf16.msra.mxu0 %v1822
    %1984 = vmatprep.subr.bf16.mxu0 0
    %1985 = vmatpush1.bf16.msra.mxu0 %v1823
    %1986 = vmatprep.subr.bf16.mxu0 0
    %1987 = vmatpush1.bf16.msra.mxu0 %v1824
    %1988 = vmatprep.subr.bf16.mxu0 0
    %1989 = vmatpush1.bf16.msra.mxu0 %v1825
    %1990 = vmatprep.subr.bf16.mxu0 0
    %1991 = vmatpush1.bf16.msra.mxu0 %v1826
    %1992 = vmatprep.subr.bf16.mxu0 0
    %1993 = vmatpush1.bf16.msra.mxu0 %v1827
    %1994 = vmatprep.subr.bf16.mxu0 0
    %1995 = vmatpush1.bf16.msra.mxu0 %v1828
    %1996 = vmatprep.subr.bf16.mxu0 0
    %1997 = vmatpush1.bf16.msra.mxu0 %v1829
    %1998 = vmatprep.subr.bf16.mxu0 0
    %1999 = vmatpush1.bf16.msra.mxu0 %v1830
    %2000 = vmatprep.subr.bf16.mxu0 0
    %2001 = vmatpush1.bf16.msra.mxu0 %v1831
    %2002 = vmatprep.subr.bf16.mxu0 0
    %2003 = vmatpush1.bf16.msra.mxu0 %v1832
    %2004 = vmatprep.subr.bf16.mxu0 0
    %2005 = vmatpush1.bf16.msra.mxu0 %v1833
    %2006 = vmatprep.subr.bf16.mxu0 0
    %2007 = vmatpush1.bf16.msra.mxu0 %v1834
    %2008 = vmatprep.subr.bf16.mxu0 0
    %2009 = vmatpush1.bf16.msra.mxu0 %v1835
    %2010 = vmatprep.subr.bf16.mxu0 0
    %2011 = vmatpush1.bf16.msra.mxu0 %v1836
    %2012 = vmatprep.subr.bf16.mxu0 0
    %2013 = vmatpush1.bf16.msra.mxu0 %v1837
    %2014 = vmatprep.mubr.bf16.mxu0 %v1935
    %2015 = vmatmul.mubr.bf16.gmra.mrb[0].mxu0 %v1934
    %v2016 = vpop.f32.mrb[0].mxu0
    %v2017 = vadd.f32 0.0, %v2016
    %v2018 = vpop.f32.mrb[0].mxu0
    %v2019 = vpop.f32.mrb[0].mxu0
    %v2020 = vadd.f32 0.0, %v2019
    %v2021 = vpop.f32.mrb[0].mxu0
    %2022 = vmatprep.mubr.bf16.mxu0 %v1937
    %2023 = vmatmul.mubr.bf16.gmra.mrb[0].mxu0 %v1936
    %v2024 = vpop.f32.mrb[0].mxu0
    %v2025 = vadd.f32 0.0, %v2024
    %v2026 = vpop.f32.mrb[0].mxu0
    %v2027 = vpop.f32.mrb[0].mxu0
    %v2028 = vadd.f32 0.0, %v2027
    %v2029 = vpop.f32.mrb[0].mxu0
    %2030 = vmatprep.mubr.bf16.mxu0 %v1939
    %2031 = vmatmul.mubr.bf16.gmra.mrb[0].mxu0 %v1938
    %v2032 = vpop.f32.mrb[0].mxu0
    %v2033 = vadd.f32 0.0, %v2032
    %v2034 = vpop.f32.mrb[0].mxu0
    %v2035 = vpop.f32.mrb[0].mxu0
    %v2036 = vadd.f32 0.0, %v2035
    %v2037 = vpop.f32.mrb[0].mxu0
    %2038 = vmatprep.mubr.bf16.mxu0 %v1941
    %2039 = vmatmul.mubr.bf16.gmra.mrb[0].mxu0 %v1940
    %v2040 = vpop.f32.mrb[0].mxu0
    %v2041 = vadd.f32 0.0, %v2040
    %v2042 = vpop.f32.mrb[0].mxu0
    %v2043 = vpop.f32.mrb[0].mxu0
    %v2044 = vadd.f32 0.0, %v2043
    %v2045 = vpop.f32.mrb[0].mxu0
    %2046 = vmatprep.mubr.bf16.mxu0 %v1943
    %2047 = vmatmul.mubr.bf16.gmra.mrb[0].mxu0 %v1942
    %v2048 = vpop.f32.mrb[0].mxu0
    %v2049 = vadd.f32 0.0, %v2048
    %v2050 = vpop.f32.mrb[0].mxu0
    %v2051 = vpop.f32.mrb[0].mxu0
    %v2052 = vadd.f32 0.0, %v2051
    %v2053 = vpop.f32.mrb[0].mxu0
    %2054 = vmatprep.mubr.bf16.mxu0 %v1945
    %2055 = vmatmul.mubr.bf16.gmra.mrb[0].mxu0 %v1944
    %v2056 = vpop.f32.mrb[0].mxu0
    %v2057 = vadd.f32 0.0, %v2056
    %v2058 = vpop.f32.mrb[0].mxu0
    %v2059 = vpop.f32.mrb[0].mxu0
    %v2060 = vadd.f32 0.0, %v2059
    %v2061 = vpop.f32.mrb[0].mxu0
    %2062 = vmatprep.mubr.bf16.mxu0 %v1947
    %2063 = vmatmul.mubr.bf16.gmra.mrb[0].mxu0 %v1946
    %v2064 = vpop.f32.mrb[0].mxu0
    %v2065 = vadd.f32 0.0, %v2064
    %v2066 = vpop.f32.mrb[0].mxu0
    %v2067 = vpop.f32.mrb[0].mxu0
    %v2068 = vadd.f32 0.0, %v2067
    %v2069 = vpop.f32.mrb[0].mxu0
    %2070 = vmatprep.mubr.bf16.mxu0 %v1949
    %2071 = vmatmul.mubr.bf16.gmra.mrb[0].mxu0 %v1948
    %v2072 = vpop.f32.mrb[0].mxu0
    %v2073 = vadd.f32 0.0, %v2072
    %v2074 = vpop.f32.mrb[0].mxu0
    %v2075 = vpop.f32.mrb[0].mxu0
    %v2076 = vadd.f32 0.0, %v2075
    %v2077 = vpop.f32.mrb[0].mxu0
    %2078 = vmatprep.mubr.bf16.mxu0 %v1951
    %2079 = vmatmul.mubr.bf16.gmra.mrb[0].mxu0 %v1950
    %v2080 = vpop.f32.mrb[0].mxu0
    %v2081 = vadd.f32 0.0, %v2080
    %v2082 = vpop.f32.mrb[0].mxu0
    %v2083 = vpop.f32.mrb[0].mxu0
    %v2084 = vadd.f32 0.0, %v2083
    %v2085 = vpop.f32.mrb[0].mxu0
    %2086 = vmatprep.mubr.bf16.mxu0 %v1953
    %2087 = vmatmul.mubr.bf16.gmra.mrb[0].mxu0 %v1952
    %v2088 = vpop.f32.mrb[0].mxu0
    %v2089 = vadd.f32 0.0, %v2088
    %v2090 = vpop.f32.mrb[0].mxu0
    %v2091 = vpop.f32.mrb[0].mxu0
    %v2092 = vadd.f32 0.0, %v2091
    %v2093 = vpop.f32.mrb[0].mxu0
    %2094 = vmatprep.mubr.bf16.mxu0 %v1955
    %2095 = vmatmul.mubr.bf16.gmra.mrb[0].mxu0 %v1954
    %v2096 = vpop.f32.mrb[0].mxu0
    %v2097 = vadd.f32 0.0, %v2096
    %v2098 = vpop.f32.mrb[0].mxu0
    %v2099 = vpop.f32.mrb[0].mxu0
    %v2100 = vadd.f32 0.0, %v2099
    %v2101 = vpop.f32.mrb[0].mxu0
    %2102 = vmatprep.mubr.bf16.mxu0 %v1957
    %2103 = vmatmul.mubr.bf16.gmra.mrb[0].mxu0 %v1956
    %v2104 = vpop.f32.mrb[0].mxu0
    %v2105 = vadd.f32 0.0, %v2104
    %v2106 = vpop.f32.mrb[0].mxu0
    %v2107 = vpop.f32.mrb[0].mxu0
    %v2108 = vadd.f32 0.0, %v2107
    %v2109 = vpop.f32.mrb[0].mxu0
    %2110 = vdwg.mxu0
    %2111 = vadd.xlane.f32.xlu0 %v2017
    %v2112 = vpop.xlane.xlu0 %2111
    %2113 = vadd.xlane.f32.xlu0 %v2020
    %v2114 = vpop.xlane.xlu0 %2113
    %2115 = vadd.xlane.f32.xlu0 %v2025
    %v2116 = vpop.xlane.xlu0 %2115
    %2117 = vadd.xlane.f32.xlu0 %v2028
    %v2118 = vpop.xlane.xlu0 %2117
    %2119 = vadd.xlane.f32.xlu0 %v2033
    %v2120 = vpop.xlane.xlu0 %2119
    %2121 = vadd.xlane.f32.xlu0 %v2036
    %v2122 = vpop.xlane.xlu0 %2121
    %2123 = vadd.xlane.f32.xlu0 %v2041
    %v2124 = vpop.xlane.xlu0 %2123
    %2125 = vadd.xlane.f32.xlu0 %v2044
    %v2126 = vpop.xlane.xlu0 %2125
    %2127 = vadd.xlane.f32.xlu0 %v2049
    %v2128 = vpop.xlane.xlu0 %2127
    %2129 = vadd.xlane.f32.xlu0 %v2052
    %v2130 = vpop.xlane.xlu0 %2129
    %2131 = vadd.xlane.f32.xlu0 %v2057
    %v2132 = vpop.xlane.xlu0 %2131
    %2133 = vadd.xlane.f32.xlu0 %v2060
    %v2134 = vpop.xlane.xlu0 %2133
    %2135 = vadd.xlane.f32.xlu0 %v2065
    %v2136 = vpop.xlane.xlu0 %2135
    %2137 = vadd.xlane.f32.xlu0 %v2068
    %v2138 = vpop.xlane.xlu0 %2137
    %2139 = vadd.xlane.f32.xlu0 %v2073
    %v2140 = vpop.xlane.xlu0 %2139
    %2141 = vadd.xlane.f32.xlu0 %v2076
    %v2142 = vpop.xlane.xlu0 %2141
    %2143 = vadd.xlane.f32.xlu0 %v2081
    %v2144 = vpop.xlane.xlu0 %2143
    %2145 = vadd.xlane.f32.xlu0 %v2084
    %v2146 = vpop.xlane.xlu0 %2145
    %2147 = vadd.xlane.f32.xlu0 %v2089
    %v2148 = vpop.xlane.xlu0 %2147
    %2149 = vadd.xlane.f32.xlu0 %v2092
    %v2150 = vpop.xlane.xlu0 %2149
    %2151 = vadd.xlane.f32.xlu0 %v2097
    %v2152 = vpop.xlane.xlu0 %2151
    %2153 = vadd.xlane.f32.xlu0 %v2100
    %v2154 = vpop.xlane.xlu0 %2153
    %2155 = vadd.xlane.f32.xlu0 %v2105
    %v2156 = vpop.xlane.xlu0 %2155
    %2157 = vadd.xlane.f32.xlu0 %v2108
    %v2158 = vpop.xlane.xlu0 %2157
    %v2159 = vmul.f32 %v2112, 0.0078125
    %v2160 = vmul.f32 %v2114, 0.0078125
    %v2161 = vmul.f32 %v2116, 0.0078125
    %v2162 = vmul.f32 %v2118, 0.0078125
    %v2163 = vmul.f32 %v2120, 0.0078125
    %v2164 = vmul.f32 %v2122, 0.0078125
    %v2165 = vmul.f32 %v2124, 0.0078125
    %v2166 = vmul.f32 %v2126, 0.0078125
    %v2167 = vmul.f32 %v2128, 0.0078125
    %v2168 = vmul.f32 %v2130, 0.0078125
    %v2169 = vmul.f32 %v2132, 0.0078125
    %v2170 = vmul.f32 %v2134, 0.0078125
    %v2171 = vmul.f32 %v2136, 0.0078125
    %v2172 = vmul.f32 %v2138, 0.0078125
    %v2173 = vmul.f32 %v2140, 0.0078125
    %v2174 = vmul.f32 %v2142, 0.0078125
    %v2175 = vmul.f32 %v2144, 0.0078125
    %v2176 = vmul.f32 %v2146, 0.0078125
    %v2177 = vmul.f32 %v2148, 0.0078125
    %v2178 = vmul.f32 %v2150, 0.0078125
    %v2179 = vmul.f32 %v2152, 0.0078125
    %v2180 = vmul.f32 %v2154, 0.0078125
    %v2181 = vmul.f32 %v2156, 0.0078125
    %v2182 = vmul.f32 %v2158, 0.0078125
    %v2183 = vsub.f32 %v2017, %v2159
    %v2184 = vsub.f32 %v2020, %v2160
    %v2185 = vsub.f32 %v2025, %v2161
    %v2186 = vsub.f32 %v2028, %v2162
    %v2187 = vsub.f32 %v2033, %v2163
    %v2188 = vsub.f32 %v2036, %v2164
    %v2189 = vsub.f32 %v2041, %v2165
    %v2190 = vsub.f32 %v2044, %v2166
    %v2191 = vsub.f32 %v2049, %v2167
    %v2192 = vsub.f32 %v2052, %v2168
    %v2193 = vsub.f32 %v2057, %v2169
    %v2194 = vsub.f32 %v2060, %v2170
    %v2195 = vsub.f32 %v2065, %v2171
    %v2196 = vsub.f32 %v2068, %v2172
    %v2197 = vsub.f32 %v2073, %v2173
    %v2198 = vsub.f32 %v2076, %v2174
    %v2199 = vsub.f32 %v2081, %v2175
    %v2200 = vsub.f32 %v2084, %v2176
    %v2201 = vsub.f32 %v2089, %v2177
    %v2202 = vsub.f32 %v2092, %v2178
    %v2203 = vsub.f32 %v2097, %v2179
    %v2204 = vsub.f32 %v2100, %v2180
    %v2205 = vsub.f32 %v2105, %v2181
    %v2206 = vsub.f32 %v2108, %v2182
    %v2207 = vmul.f32 %v2183, %v2183
    %v2208 = vmul.f32 %v2184, %v2184
    %v2209 = vmul.f32 %v2185, %v2185
    %v2210 = vmul.f32 %v2186, %v2186
    %v2211 = vmul.f32 %v2187, %v2187
    %v2212 = vmul.f32 %v2188, %v2188
    %v2213 = vmul.f32 %v2189, %v2189
    %v2214 = vmul.f32 %v2190, %v2190
    %v2215 = vmul.f32 %v2191, %v2191
    %v2216 = vmul.f32 %v2192, %v2192
    %v2217 = vmul.f32 %v2193, %v2193
    %v2218 = vmul.f32 %v2194, %v2194
    %v2219 = vmul.f32 %v2195, %v2195
    %v2220 = vmul.f32 %v2196, %v2196
    %v2221 = vmul.f32 %v2197, %v2197
    %v2222 = vmul.f32 %v2198, %v2198
    %v2223 = vmul.f32 %v2199, %v2199
    %v2224 = vmul.f32 %v2200, %v2200
    %v2225 = vmul.f32 %v2201, %v2201
    %v2226 = vmul.f32 %v2202, %v2202
    %v2227 = vmul.f32 %v2203, %v2203
    %v2228 = vmul.f32 %v2204, %v2204
    %v2229 = vmul.f32 %v2205, %v2205
    %v2230 = vmul.f32 %v2206, %v2206
    %2231 = vadd.xlane.f32.xlu0 %v2207
    %v2232 = vpop.xlane.xlu0 %2231
    %2233 = vadd.xlane.f32.xlu0 %v2208
    %v2234 = vpop.xlane.xlu0 %2233
    %2235 = vadd.xlane.f32.xlu0 %v2209
    %v2236 = vpop.xlane.xlu0 %2235
    %2237 = vadd.xlane.f32.xlu0 %v2210
    %v2238 = vpop.xlane.xlu0 %2237
    %2239 = vadd.xlane.f32.xlu0 %v2211
    %v2240 = vpop.xlane.xlu0 %2239
    %2241 = vadd.xlane.f32.xlu0 %v2212
    %v2242 = vpop.xlane.xlu0 %2241
    %2243 = vadd.xlane.f32.xlu0 %v2213
    %v2244 = vpop.xlane.xlu0 %2243
    %2245 = vadd.xlane.f32.xlu0 %v2214
    %v2246 = vpop.xlane.xlu0 %2245
    %2247 = vadd.xlane.f32.xlu0 %v2215
    %v2248 = vpop.xlane.xlu0 %2247
    %2249 = vadd.xlane.f32.xlu0 %v2216
    %v2250 = vpop.xlane.xlu0 %2249
    %2251 = vadd.xlane.f32.xlu0 %v2217
    %v2252 = vpop.xlane.xlu0 %2251
    %2253 = vadd.xlane.f32.xlu0 %v2218
    %v2254 = vpop.xlane.xlu0 %2253
    %2255 = vadd.xlane.f32.xlu0 %v2219
    %v2256 = vpop.xlane.xlu0 %2255
    %2257 = vadd.xlane.f32.xlu0 %v2220
    %v2258 = vpop.xlane.xlu0 %2257
    %2259 = vadd.xlane.f32.xlu0 %v2221
    %v2260 = vpop.xlane.xlu0 %2259
    %2261 = vadd.xlane.f32.xlu0 %v2222
    %v2262 = vpop.xlane.xlu0 %2261
    %2263 = vadd.xlane.f32.xlu0 %v2223
    %v2264 = vpop.xlane.xlu0 %2263
    %2265 = vadd.xlane.f32.xlu0 %v2224
    %v2266 = vpop.xlane.xlu0 %2265
    %2267 = vadd.xlane.f32.xlu0 %v2225
    %v2268 = vpop.xlane.xlu0 %2267
    %2269 = vadd.xlane.f32.xlu0 %v2226
    %v2270 = vpop.xlane.xlu0 %2269
    %2271 = vadd.xlane.f32.xlu0 %v2227
    %v2272 = vpop.xlane.xlu0 %2271
    %2273 = vadd.xlane.f32.xlu0 %v2228
    %v2274 = vpop.xlane.xlu0 %2273
    %2275 = vadd.xlane.f32.xlu0 %v2229
    %v2276 = vpop.xlane.xlu0 %2275
    %2277 = vadd.xlane.f32.xlu0 %v2230
    %v2278 = vpop.xlane.xlu0 %2277
    %v2279 = vmul.f32 %v2232, 0.0078125
    %v2280 = vmul.f32 %v2234, 0.0078125
    %v2281 = vmul.f32 %v2236, 0.0078125
    %v2282 = vmul.f32 %v2238, 0.0078125
    %v2283 = vmul.f32 %v2240, 0.0078125
    %v2284 = vmul.f32 %v2242, 0.0078125
    %v2285 = vmul.f32 %v2244, 0.0078125
    %v2286 = vmul.f32 %v2246, 0.0078125
    %v2287 = vmul.f32 %v2248, 0.0078125
    %v2288 = vmul.f32 %v2250, 0.0078125
    %v2289 = vmul.f32 %v2252, 0.0078125
    %v2290 = vmul.f32 %v2254, 0.0078125
    %v2291 = vmul.f32 %v2256, 0.0078125
    %v2292 = vmul.f32 %v2258, 0.0078125
    %v2293 = vmul.f32 %v2260, 0.0078125
    %v2294 = vmul.f32 %v2262, 0.0078125
    %v2295 = vmul.f32 %v2264, 0.0078125
    %v2296 = vmul.f32 %v2266, 0.0078125
    %v2297 = vmul.f32 %v2268, 0.0078125
    %v2298 = vmul.f32 %v2270, 0.0078125
    %v2299 = vmul.f32 %v2272, 0.0078125
    %v2300 = vmul.f32 %v2274, 0.0078125
    %v2301 = vmul.f32 %v2276, 0.0078125
    %v2302 = vmul.f32 %v2278, 0.0078125
    %v2303 = vld [vmem:[#allocation11] sm:$0xff]
    %v2304 = vld [vmem:[#allocation11 + $0x8] sm:$0xff]
    %v2305 = vld [vmem:[#allocation11 + $0x10] sm:$0xff]
    %v2306 = vld [vmem:[#allocation11 + $0x18] sm:$0xff]
    %v2307 = vld [vmem:[#allocation11 + $0x20] sm:$0xff]
    %v2308 = vld [vmem:[#allocation11 + $0x28] sm:$0xff]
    %v2309 = vld [vmem:[#allocation11 + $0x30] sm:$0xff]
    %v2310 = vld [vmem:[#allocation11 + $0x38] sm:$0xff]
    %v2311 = vld [vmem:[#allocation11 + $0x40] sm:$0xff]
    %v2312 = vld [vmem:[#allocation11 + $0x48] sm:$0xff]
    %v2313 = vld [vmem:[#allocation11 + $0x50] sm:$0xff]
    %v2314 = vld [vmem:[#allocation11 + $0x58] sm:$0xff]
    %v2315 = vld [vmem:[#allocation11 + $0x60] sm:$0xff]
    %v2316 = vld [vmem:[#allocation11 + $0x68] sm:$0xff]
    %v2317 = vld [vmem:[#allocation11 + $0x70] sm:$0xff]
    %v2318 = vld [vmem:[#allocation11 + $0x78] sm:$0xff]
    %v2319 = vld [vmem:[#allocation11 + $0x80] sm:$0xff]
    %v2320 = vld [vmem:[#allocation11 + $0x88] sm:$0xff]
    %v2321 = vld [vmem:[#allocation11 + $0x90] sm:$0xff]
    %v2322 = vld [vmem:[#allocation11 + $0x98] sm:$0xff]
    %v2323 = vld [vmem:[#allocation11 + $0xa0] sm:$0xff]
    %v2324 = vld [vmem:[#allocation11 + $0xa8] sm:$0xff]
    %v2325 = vld [vmem:[#allocation11 + $0xb0] sm:$0xff]
    %v2326 = vld [vmem:[#allocation11 + $0xb8] sm:$0xff]
    %v2327 = vadd.f32 %v2279, 1e-05
    %v2328 = vadd.f32 %v2280, 1e-05
    %v2329 = vadd.f32 %v2281, 1e-05
    %v2330 = vadd.f32 %v2282, 1e-05
    %v2331 = vadd.f32 %v2283, 1e-05
    %v2332 = vadd.f32 %v2284, 1e-05
    %v2333 = vadd.f32 %v2285, 1e-05
    %v2334 = vadd.f32 %v2286, 1e-05
    %v2335 = vadd.f32 %v2287, 1e-05
    %v2336 = vadd.f32 %v2288, 1e-05
    %v2337 = vadd.f32 %v2289, 1e-05
    %v2338 = vadd.f32 %v2290, 1e-05
    %v2339 = vadd.f32 %v2291, 1e-05
    %v2340 = vadd.f32 %v2292, 1e-05
    %v2341 = vadd.f32 %v2293, 1e-05
    %v2342 = vadd.f32 %v2294, 1e-05
    %v2343 = vadd.f32 %v2295, 1e-05
    %v2344 = vadd.f32 %v2296, 1e-05
    %v2345 = vadd.f32 %v2297, 1e-05
    %v2346 = vadd.f32 %v2298, 1e-05
    %v2347 = vadd.f32 %v2299, 1e-05
    %v2348 = vadd.f32 %v2300, 1e-05
    %v2349 = vadd.f32 %v2301, 1e-05
    %v2350 = vadd.f32 %v2302, 1e-05
    %v2351 = vrsqrt.pop %v2327
    %v2352 = vrsqrt.pop %v2328
    %v2353 = vrsqrt.pop %v2329
    %v2354 = vrsqrt.pop %v2330
    %v2355 = vrsqrt.pop %v2331
    %v2356 = vrsqrt.pop %v2332
    %v2357 = vrsqrt.pop %v2333
    %v2358 = vrsqrt.pop %v2334
    %v2359 = vrsqrt.pop %v2335
    %v2360 = vrsqrt.pop %v2336
    %v2361 = vrsqrt.pop %v2337
    %v2362 = vrsqrt.pop %v2338
    %v2363 = vrsqrt.pop %v2339
    %v2364 = vrsqrt.pop %v2340
    %v2365 = vrsqrt.pop %v2341
    %v2366 = vrsqrt.pop %v2342
    %v2367 = vrsqrt.pop %v2343
    %v2368 = vrsqrt.pop %v2344
    %v2369 = vrsqrt.pop %v2345
    %v2370 = vrsqrt.pop %v2346
    %v2371 = vrsqrt.pop %v2347
    %v2372 = vrsqrt.pop %v2348
    %v2373 = vrsqrt.pop %v2349
    %v2374 = vrsqrt.pop %v2350
    %v2375 = vmul.f32 %v2303, %v2351
    %v2376 = vmul.f32 %v2304, %v2352
    %v2377 = vmul.f32 %v2305, %v2353
    %v2378 = vmul.f32 %v2306, %v2354
    %v2379 = vmul.f32 %v2307, %v2355
    %v2380 = vmul.f32 %v2308, %v2356
    %v2381 = vmul.f32 %v2309, %v2357
    %v2382 = vmul.f32 %v2310, %v2358
    %v2383 = vmul.f32 %v2311, %v2359
    %v2384 = vmul.f32 %v2312, %v2360
    %v2385 = vmul.f32 %v2313, %v2361
    %v2386 = vmul.f32 %v2314, %v2362
    %v2387 = vmul.f32 %v2315, %v2363
    %v2388 = vmul.f32 %v2316, %v2364
    %v2389 = vmul.f32 %v2317, %v2365
    %v2390 = vmul.f32 %v2318, %v2366
    %v2391 = vmul.f32 %v2319, %v2367
    %v2392 = vmul.f32 %v2320, %v2368
    %v2393 = vmul.f32 %v2321, %v2369
    %v2394 = vmul.f32 %v2322, %v2370
    %v2395 = vmul.f32 %v2323, %v2371
    %v2396 = vmul.f32 %v2324, %v2372
    %v2397 = vmul.f32 %v2325, %v2373
    %v2398 = vmul.f32 %v2326, %v2374
    %v2399 = vld [vmem:[#allocation13] sm:$0xff]
    %v2400 = vld [vmem:[#allocation13 + $0x8] sm:$0xff]
    %v2401 = vld [vmem:[#allocation13 + $0x10] sm:$0xff]
    %v2402 = vld [vmem:[#allocation13 + $0x18] sm:$0xff]
    %v2403 = vld [vmem:[#allocation13 + $0x20] sm:$0xff]
    %v2404 = vld [vmem:[#allocation13 + $0x28] sm:$0xff]
    %v2405 = vld [vmem:[#allocation13 + $0x30] sm:$0xff]
    %v2406 = vld [vmem:[#allocation13 + $0x38] sm:$0xff]
    %v2407 = vld [vmem:[#allocation13 + $0x40] sm:$0xff]
    %v2408 = vld [vmem:[#allocation13 + $0x48] sm:$0xff]
    %v2409 = vld [vmem:[#allocation13 + $0x50] sm:$0xff]
    %v2410 = vld [vmem:[#allocation13 + $0x58] sm:$0xff]
    %v2411 = vld [vmem:[#allocation13 + $0x60] sm:$0xff]
    %v2412 = vld [vmem:[#allocation13 + $0x68] sm:$0xff]
    %v2413 = vld [vmem:[#allocation13 + $0x70] sm:$0xff]
    %v2414 = vld [vmem:[#allocation13 + $0x78] sm:$0xff]
    %v2415 = vld [vmem:[#allocation13 + $0x80] sm:$0xff]
    %v2416 = vld [vmem:[#allocation13 + $0x88] sm:$0xff]
    %v2417 = vld [vmem:[#allocation13 + $0x90] sm:$0xff]
    %v2418 = vld [vmem:[#allocation13 + $0x98] sm:$0xff]
    %v2419 = vld [vmem:[#allocation13 + $0xa0] sm:$0xff]
    %v2420 = vld [vmem:[#allocation13 + $0xa8] sm:$0xff]
    %v2421 = vld [vmem:[#allocation13 + $0xb0] sm:$0xff]
    %v2422 = vld [vmem:[#allocation13 + $0xb8] sm:$0xff]
    %v2423 = vmul.f32 %v2159, %v2375
    %v2424 = vmul.f32 %v2160, %v2376
    %v2425 = vmul.f32 %v2161, %v2377
    %v2426 = vmul.f32 %v2162, %v2378
    %v2427 = vmul.f32 %v2163, %v2379
    %v2428 = vmul.f32 %v2164, %v2380
    %v2429 = vmul.f32 %v2165, %v2381
    %v2430 = vmul.f32 %v2166, %v2382
    %v2431 = vmul.f32 %v2167, %v2383
    %v2432 = vmul.f32 %v2168, %v2384
    %v2433 = vmul.f32 %v2169, %v2385
    %v2434 = vmul.f32 %v2170, %v2386
    %v2435 = vmul.f32 %v2171, %v2387
    %v2436 = vmul.f32 %v2172, %v2388
    %v2437 = vmul.f32 %v2173, %v2389
    %v2438 = vmul.f32 %v2174, %v2390
    %v2439 = vmul.f32 %v2175, %v2391
    %v2440 = vmul.f32 %v2176, %v2392
    %v2441 = vmul.f32 %v2177, %v2393
    %v2442 = vmul.f32 %v2178, %v2394
    %v2443 = vmul.f32 %v2179, %v2395
    %v2444 = vmul.f32 %v2180, %v2396
    %v2445 = vmul.f32 %v2181, %v2397
    %v2446 = vmul.f32 %v2182, %v2398
    %v2447 = vsub.f32 %v2399, %v2423
    %v2448 = vsub.f32 %v2400, %v2424
    %v2449 = vsub.f32 %v2401, %v2425
    %v2450 = vsub.f32 %v2402, %v2426
    %v2451 = vsub.f32 %v2403, %v2427
    %v2452 = vsub.f32 %v2404, %v2428
    %v2453 = vsub.f32 %v2405, %v2429
    %v2454 = vsub.f32 %v2406, %v2430
    %v2455 = vsub.f32 %v2407, %v2431
    %v2456 = vsub.f32 %v2408, %v2432
    %v2457 = vsub.f32 %v2409, %v2433
    %v2458 = vsub.f32 %v2410, %v2434
    %v2459 = vsub.f32 %v2411, %v2435
    %v2460 = vsub.f32 %v2412, %v2436
    %v2461 = vsub.f32 %v2413, %v2437
    %v2462 = vsub.f32 %v2414, %v2438
    %v2463 = vsub.f32 %v2415, %v2439
    %v2464 = vsub.f32 %v2416, %v2440
    %v2465 = vsub.f32 %v2417, %v2441
    %v2466 = vsub.f32 %v2418, %v2442
    %v2467 = vsub.f32 %v2419, %v2443
    %v2468 = vsub.f32 %v2420, %v2444
    %v2469 = vsub.f32 %v2421, %v2445
    %v2470 = vsub.f32 %v2422, %v2446
    %2472 = vset.pattern.permute.xlu0 0
    %2473 = vperm.xlu0 %2472, %v2375
    %v2474 = vpop.permute.xlu0 %2473
    %2477 = vset.pattern.permute.xlu0 0
    %2478 = vperm.xlu0 %2477, %v2376
    %v2479 = vpop.permute.xlu0 %2478
    %2482 = vset.pattern.permute.xlu0 0
    %2483 = vperm.xlu0 %2482, %v2377
    %v2484 = vpop.permute.xlu0 %2483
    %2487 = vset.pattern.permute.xlu0 0
    %2488 = vperm.xlu0 %2487, %v2378
    %v2489 = vpop.permute.xlu0 %2488
    %2492 = vset.pattern.permute.xlu0 0
    %2493 = vperm.xlu0 %2492, %v2379
    %v2494 = vpop.permute.xlu0 %2493
    %2497 = vset.pattern.permute.xlu0 0
    %2498 = vperm.xlu0 %2497, %v2380
    %v2499 = vpop.permute.xlu0 %2498
    %2502 = vset.pattern.permute.xlu0 0
    %2503 = vperm.xlu0 %2502, %v2381
    %v2504 = vpop.permute.xlu0 %2503
    %2507 = vset.pattern.permute.xlu0 0
    %2508 = vperm.xlu0 %2507, %v2382
    %v2509 = vpop.permute.xlu0 %2508
    %2512 = vset.pattern.permute.xlu0 0
    %2513 = vperm.xlu0 %2512, %v2383
    %v2514 = vpop.permute.xlu0 %2513
    %2517 = vset.pattern.permute.xlu0 0
    %2518 = vperm.xlu0 %2517, %v2384
    %v2519 = vpop.permute.xlu0 %2518
    %2522 = vset.pattern.permute.xlu0 0
    %2523 = vperm.xlu0 %2522, %v2385
    %v2524 = vpop.permute.xlu0 %2523
    %2527 = vset.pattern.permute.xlu0 0
    %2528 = vperm.xlu0 %2527, %v2386
    %v2529 = vpop.permute.xlu0 %2528
    %2532 = vset.pattern.permute.xlu0 0
    %2533 = vperm.xlu0 %2532, %v2387
    %v2534 = vpop.permute.xlu0 %2533
    %2537 = vset.pattern.permute.xlu0 0
    %2538 = vperm.xlu0 %2537, %v2388
    %v2539 = vpop.permute.xlu0 %2538
    %2542 = vset.pattern.permute.xlu0 0
    %2543 = vperm.xlu0 %2542, %v2389
    %v2544 = vpop.permute.xlu0 %2543
    %2547 = vset.pattern.permute.xlu0 0
    %2548 = vperm.xlu0 %2547, %v2390
    %v2549 = vpop.permute.xlu0 %2548
    %2552 = vset.pattern.permute.xlu0 0
    %2553 = vperm.xlu0 %2552, %v2391
    %v2554 = vpop.permute.xlu0 %2553
    %2557 = vset.pattern.permute.xlu0 0
    %2558 = vperm.xlu0 %2557, %v2392
    %v2559 = vpop.permute.xlu0 %2558
    %2562 = vset.pattern.permute.xlu0 0
    %2563 = vperm.xlu0 %2562, %v2393
    %v2564 = vpop.permute.xlu0 %2563
    %2567 = vset.pattern.permute.xlu0 0
    %2568 = vperm.xlu0 %2567, %v2394
    %v2569 = vpop.permute.xlu0 %2568
    %2572 = vset.pattern.permute.xlu0 0
    %2573 = vperm.xlu0 %2572, %v2395
    %v2574 = vpop.permute.xlu0 %2573
    %2577 = vset.pattern.permute.xlu0 0
    %2578 = vperm.xlu0 %2577, %v2396
    %v2579 = vpop.permute.xlu0 %2578
    %2582 = vset.pattern.permute.xlu0 0
    %2583 = vperm.xlu0 %2582, %v2397
    %v2584 = vpop.permute.xlu0 %2583
    %2587 = vset.pattern.permute.xlu0 0
    %2588 = vperm.xlu0 %2587, %v2398
    %v2589 = vpop.permute.xlu0 %2588
    %v2591 = vmul.f32 %v2017, %v2474
    %v2592 = vmul.f32 %v2020, %v2479
    %v2593 = vmul.f32 %v2025, %v2484
    %v2594 = vmul.f32 %v2028, %v2489
    %v2595 = vmul.f32 %v2033, %v2494
    %v2596 = vmul.f32 %v2036, %v2499
    %v2597 = vmul.f32 %v2041, %v2504
    %v2598 = vmul.f32 %v2044, %v2509
    %v2599 = vmul.f32 %v2049, %v2514
    %v2600 = vmul.f32 %v2052, %v2519
    %v2601 = vmul.f32 %v2057, %v2524
    %v2602 = vmul.f32 %v2060, %v2529
    %v2603 = vmul.f32 %v2065, %v2534
    %v2604 = vmul.f32 %v2068, %v2539
    %v2605 = vmul.f32 %v2073, %v2544
    %v2606 = vmul.f32 %v2076, %v2549
    %v2607 = vmul.f32 %v2081, %v2554
    %v2608 = vmul.f32 %v2084, %v2559
    %v2609 = vmul.f32 %v2089, %v2564
    %v2610 = vmul.f32 %v2092, %v2569
    %v2611 = vmul.f32 %v2097, %v2574
    %v2612 = vmul.f32 %v2100, %v2579
    %v2613 = vmul.f32 %v2105, %v2584
    %v2614 = vmul.f32 %v2108, %v2589
    %2616 = vset.pattern.permute.xlu0 0
    %2617 = vperm.xlu0 %2616, %v2447
    %v2618 = vpop.permute.xlu0 %2617
    %2621 = vset.pattern.permute.xlu0 0
    %2622 = vperm.xlu0 %2621, %v2448
    %v2623 = vpop.permute.xlu0 %2622
    %2626 = vset.pattern.permute.xlu0 0
    %2627 = vperm.xlu0 %2626, %v2449
    %v2628 = vpop.permute.xlu0 %2627
    %2631 = vset.pattern.permute.xlu0 0
    %2632 = vperm.xlu0 %2631, %v2450
    %v2633 = vpop.permute.xlu0 %2632
    %2636 = vset.pattern.permute.xlu0 0
    %2637 = vperm.xlu0 %2636, %v2451
    %v2638 = vpop.permute.xlu0 %2637
    %2641 = vset.pattern.permute.xlu0 0
    %2642 = vperm.xlu0 %2641, %v2452
    %v2643 = vpop.permute.xlu0 %2642
    %2646 = vset.pattern.permute.xlu0 0
    %2647 = vperm.xlu0 %2646, %v2453
    %v2648 = vpop.permute.xlu0 %2647
    %2651 = vset.pattern.permute.xlu0 0
    %2652 = vperm.xlu0 %2651, %v2454
    %v2653 = vpop.permute.xlu0 %2652
    %2656 = vset.pattern.permute.xlu0 0
    %2657 = vperm.xlu0 %2656, %v2455
    %v2658 = vpop.permute.xlu0 %2657
    %2661 = vset.pattern.permute.xlu0 0
    %2662 = vperm.xlu0 %2661, %v2456
    %v2663 = vpop.permute.xlu0 %2662
    %2666 = vset.pattern.permute.xlu0 0
    %2667 = vperm.xlu0 %2666, %v2457
    %v2668 = vpop.permute.xlu0 %2667
    %2671 = vset.pattern.permute.xlu0 0
    %2672 = vperm.xlu0 %2671, %v2458
    %v2673 = vpop.permute.xlu0 %2672
    %2676 = vset.pattern.permute.xlu0 0
    %2677 = vperm.xlu0 %2676, %v2459
    %v2678 = vpop.permute.xlu0 %2677
    %2681 = vset.pattern.permute.xlu0 0
    %2682 = vperm.xlu0 %2681, %v2460
    %v2683 = vpop.permute.xlu0 %2682
    %2686 = vset.pattern.permute.xlu0 0
    %2687 = vperm.xlu0 %2686, %v2461
    %v2688 = vpop.permute.xlu0 %2687
    %2691 = vset.pattern.permute.xlu0 0
    %2692 = vperm.xlu0 %2691, %v2462
    %v2693 = vpop.permute.xlu0 %2692
    %2696 = vset.pattern.permute.xlu0 0
    %2697 = vperm.xlu0 %2696, %v2463
    %v2698 = vpop.permute.xlu0 %2697
    %2701 = vset.pattern.permute.xlu0 0
    %2702 = vperm.xlu0 %2701, %v2464
    %v2703 = vpop.permute.xlu0 %2702
    %2706 = vset.pattern.permute.xlu0 0
    %2707 = vperm.xlu0 %2706, %v2465
    %v2708 = vpop.permute.xlu0 %2707
    %2711 = vset.pattern.permute.xlu0 0
    %2712 = vperm.xlu0 %2711, %v2466
    %v2713 = vpop.permute.xlu0 %2712
    %2716 = vset.pattern.permute.xlu0 0
    %2717 = vperm.xlu0 %2716, %v2467
    %v2718 = vpop.permute.xlu0 %2717
    %2721 = vset.pattern.permute.xlu0 0
    %2722 = vperm.xlu0 %2721, %v2468
    %v2723 = vpop.permute.xlu0 %2722
    %2726 = vset.pattern.permute.xlu0 0
    %2727 = vperm.xlu0 %2726, %v2469
    %v2728 = vpop.permute.xlu0 %2727
    %2731 = vset.pattern.permute.xlu0 0
    %2732 = vperm.xlu0 %2731, %v2470
    %v2733 = vpop.permute.xlu0 %2732
    %v2735 = vadd.f32 %v2591, %v2618
    %v2736 = vadd.f32 %v2592, %v2623
    %v2737 = vadd.f32 %v2593, %v2628
    %v2738 = vadd.f32 %v2594, %v2633
    %v2739 = vadd.f32 %v2595, %v2638
    %v2740 = vadd.f32 %v2596, %v2643
    %v2741 = vadd.f32 %v2597, %v2648
    %v2742 = vadd.f32 %v2598, %v2653
    %v2743 = vadd.f32 %v2599, %v2658
    %v2744 = vadd.f32 %v2600, %v2663
    %v2745 = vadd.f32 %v2601, %v2668
    %v2746 = vadd.f32 %v2602, %v2673
    %v2747 = vadd.f32 %v2603, %v2678
    %v2748 = vadd.f32 %v2604, %v2683
    %v2749 = vadd.f32 %v2605, %v2688
    %v2750 = vadd.f32 %v2606, %v2693
    %v2751 = vadd.f32 %v2607, %v2698
    %v2752 = vadd.f32 %v2608, %v2703
    %v2753 = vadd.f32 %v2609, %v2708
    %v2754 = vadd.f32 %v2610, %v2713
    %v2755 = vadd.f32 %v2611, %v2718
    %v2756 = vadd.f32 %v2612, %v2723
    %v2757 = vadd.f32 %v2613, %v2728
    %v2758 = vadd.f32 %v2614, %v2733
    %v2759 = vmax.f32 %v2735, 0.0
    %v2760 = vmax.f32 %v2736, 0.0
    %v2761 = vmax.f32 %v2737, 0.0
    %v2762 = vmax.f32 %v2738, 0.0
    %v2763 = vmax.f32 %v2739, 0.0
    %v2764 = vmax.f32 %v2740, 0.0
    %v2765 = vmax.f32 %v2741, 0.0
    %v2766 = vmax.f32 %v2742, 0.0
    %v2767 = vmax.f32 %v2743, 0.0
    %v2768 = vmax.f32 %v2744, 0.0
    %v2769 = vmax.f32 %v2745, 0.0
    %v2770 = vmax.f32 %v2746, 0.0
    %v2771 = vmax.f32 %v2747, 0.0
    %v2772 = vmax.f32 %v2748, 0.0
    %v2773 = vmax.f32 %v2749, 0.0
    %v2774 = vmax.f32 %v2750, 0.0
    %v2775 = vmax.f32 %v2751, 0.0
    %v2776 = vmax.f32 %v2752, 0.0
    %v2777 = vmax.f32 %v2753, 0.0
    %v2778 = vmax.f32 %v2754, 0.0
    %v2779 = vmax.f32 %v2755, 0.0
    %v2780 = vmax.f32 %v2756, 0.0
    %v2781 = vmax.f32 %v2757, 0.0
    %v2782 = vmax.f32 %v2758, 0.0
    %v2783 = vpack.c.bf16 %v2760, %v2759
    %v2784 = vpack.c.bf16 %v2762, %v2761
    %v2785 = vpack.c.bf16 %v2764, %v2763
    %v2786 = vpack.c.bf16 %v2766, %v2765
    %v2787 = vpack.c.bf16 %v2768, %v2767
    %v2788 = vpack.c.bf16 %v2770, %v2769
    %v2789 = vpack.c.bf16 %v2772, %v2771
    %v2790 = vpack.c.bf16 %v2774, %v2773
    %v2791 = vpack.c.bf16 %v2776, %v2775
    %v2792 = vpack.c.bf16 %v2778, %v2777
    %v2793 = vpack.c.bf16 %v2780, %v2779
    %v2794 = vpack.c.bf16 %v2782, %v2781
    %v2795 = vld [vmem:[#allocation14] sm:$0xff]
    %v2796 = vld [vmem:[#allocation14 + $0x8] sm:$0xff]
    %v2797 = vld [vmem:[#allocation14 + $0x10] sm:$0xff]
    %v2798 = vld [vmem:[#allocation14 + $0x18] sm:$0xff]
    %v2799 = vld [vmem:[#allocation14 + $0x20] sm:$0xff]
    %v2800 = vld [vmem:[#allocation14 + $0x28] sm:$0xff]
    %v2801 = vld [vmem:[#allocation14 + $0x30] sm:$0xff]
    %v2802 = vld [vmem:[#allocation14 + $0x38] sm:$0xff]
    %v2803 = vld [vmem:[#allocation14 + $0x40] sm:$0xff]
    %v2804 = vld [vmem:[#allocation14 + $0x48] sm:$0xff]
    %v2805 = vld [vmem:[#allocation14 + $0x50] sm:$0xff]
    %v2806 = vld [vmem:[#allocation14 + $0x58] sm:$0xff]
    %v2807 = vld [vmem:[#allocation14 + $0x60] sm:$0xff]
    %v2808 = vld [vmem:[#allocation14 + $0x68] sm:$0xff]
    %v2809 = vld [vmem:[#allocation14 + $0x70] sm:$0xff]
    %v2810 = vld [vmem:[#allocation14 + $0x78] sm:$0xff]
    %v2827 = vunpack.c.l.b16 %v2795
    %v2828 = vunpack.c.h.b16 %v2795
    %v2829 = vunpack.c.l.b16 %v2796
    %v2830 = vunpack.c.h.b16 %v2796
    %v2831 = vunpack.c.l.b16 %v2797
    %v2832 = vunpack.c.h.b16 %v2797
    %v2833 = vunpack.c.l.b16 %v2798
    %v2834 = vunpack.c.h.b16 %v2798
    %v2835 = vunpack.c.l.b16 %v2799
    %v2836 = vunpack.c.h.b16 %v2799
    %v2837 = vunpack.c.l.b16 %v2800
    %v2838 = vunpack.c.h.b16 %v2800
    %v2839 = vunpack.c.l.b16 %v2801
    %v2840 = vunpack.c.h.b16 %v2801
    %v2841 = vunpack.c.l.b16 %v2802
    %v2842 = vunpack.c.h.b16 %v2802
    %v2843 = vunpack.c.l.b16 %v2803
    %v2844 = vunpack.c.h.b16 %v2803
    %v2845 = vunpack.c.l.b16 %v2804
    %v2846 = vunpack.c.h.b16 %v2804
    %v2847 = vunpack.c.l.b16 %v2805
    %v2848 = vunpack.c.h.b16 %v2805
    %v2849 = vunpack.c.l.b16 %v2806
    %v2850 = vunpack.c.h.b16 %v2806
    %v2851 = vunpack.c.l.b16 %v2807
    %v2852 = vunpack.c.h.b16 %v2807
    %v2853 = vunpack.c.l.b16 %v2808
    %v2854 = vunpack.c.h.b16 %v2808
    %v2855 = vunpack.c.l.b16 %v2809
    %v2856 = vunpack.c.h.b16 %v2809
    %v2857 = vunpack.c.l.b16 %v2810
    %v2858 = vunpack.c.h.b16 %v2810
    %v2859 = vpack.c.b16 %v2829, %v2827
    %v2860 = vpack.c.b16 %v2830, %v2828
    %v2861 = vpack.c.b16 %v2833, %v2831
    %v2862 = vpack.c.b16 %v2834, %v2832
    %v2863 = vpack.c.b16 %v2837, %v2835
    %v2864 = vpack.c.b16 %v2838, %v2836
    %v2865 = vpack.c.b16 %v2841, %v2839
    %v2866 = vpack.c.b16 %v2842, %v2840
    %v2867 = vpack.c.b16 %v2845, %v2843
    %v2868 = vpack.c.b16 %v2846, %v2844
    %v2869 = vpack.c.b16 %v2849, %v2847
    %v2870 = vpack.c.b16 %v2850, %v2848
    %v2871 = vpack.c.b16 %v2853, %v2851
    %v2872 = vpack.c.b16 %v2854, %v2852
    %v2873 = vpack.c.b16 %v2857, %v2855
    %v2874 = vpack.c.b16 %v2858, %v2856
    %v2884 = vsel %vm508, %v2860, 0
    %v2887 = vsel %vm508, %v2862, 0
    %v2890 = vsel %vm508, %v2864, 0
    %v2893 = vsel %vm508, %v2866, 0
    %v2896 = vsel %vm508, %v2868, 0
    %v2899 = vsel %vm508, %v2870, 0
    %v2902 = vsel %vm508, %v2872, 0
    %v2905 = vsel %vm508, %v2874, 0
    %2907 = vmatprep.subr.bf16.mxu0 0
    %2908 = vmatpush1.bf16.msra.mxu0 %v2783
    %2909 = vmatprep.subr.bf16.mxu0 0
    %2910 = vmatpush1.bf16.msra.mxu0 %v2784
    %2911 = vmatprep.subr.bf16.mxu0 0
    %2912 = vmatpush1.bf16.msra.mxu0 %v2785
    %2913 = vmatprep.subr.bf16.mxu0 0
    %2914 = vmatpush1.bf16.msra.mxu0 %v2786
    %2915 = vmatprep.subr.bf16.mxu0 0
    %2916 = vmatpush1.bf16.msra.mxu0 %v2787
    %2917 = vmatprep.subr.bf16.mxu0 0
    %2918 = vmatpush1.bf16.msra.mxu0 %v2788
    %2919 = vmatprep.subr.bf16.mxu0 0
    %2920 = vmatpush1.bf16.msra.mxu0 %v2789
    %2921 = vmatprep.subr.bf16.mxu0 0
    %2922 = vmatpush1.bf16.msra.mxu0 %v2790
    %2923 = vmatprep.subr.bf16.mxu0 0
    %2924 = vmatpush1.bf16.msra.mxu0 %v2791
    %2925 = vmatprep.subr.bf16.mxu0 0
    %2926 = vmatpush1.bf16.msra.mxu0 %v2792
    %2927 = vmatprep.subr.bf16.mxu0 0
    %2928 = vmatpush1.bf16.msra.mxu0 %v2793
    %2929 = vmatprep.subr.bf16.mxu0 0
    %2930 = vmatpush1.bf16.msra.mxu0 %v2794
    %2931 = vmatprep.subr.bf16.mxu0 0
    %2932 = vmatpush1.bf16.msra.mxu0 0
    %2933 = vmatprep.subr.bf16.mxu0 0
    %2934 = vmatpush1.bf16.msra.mxu0 0
    %2935 = vmatprep.subr.bf16.mxu0 0
    %2936 = vmatpush1.bf16.msra.mxu0 0
    %2937 = vmatprep.subr.bf16.mxu0 0
    %2938 = vmatpush1.bf16.msra.mxu0 0
    %2939 = vmatprep.mubr.bf16.mxu0 %v2884
    %2940 = vmatmul.mubr.bf16.gmra.mrb[0].mxu0 %v2859
    %v2941 = vpop.f32.mrb[0].mxu0
    %v2942 = vadd.f32 0.0, %v2941
    %v2943 = vpop.f32.mrb[0].mxu0
    %v2944 = vpop.f32.mrb[0].mxu0
    %v2945 = vadd.f32 0.0, %v2944
    %v2946 = vpop.f32.mrb[0].mxu0
    %2947 = vmatprep.mubr.bf16.mxu0 %v2887
    %2948 = vmatmul.mubr.bf16.gmra.mrb[0].mxu0 %v2861
    %v2949 = vpop.f32.mrb[0].mxu0
    %v2950 = vadd.f32 0.0, %v2949
    %v2951 = vpop.f32.mrb[0].mxu0
    %v2952 = vpop.f32.mrb[0].mxu0
    %v2953 = vadd.f32 0.0, %v2952
    %v2954 = vpop.f32.mrb[0].mxu0
    %2955 = vmatprep.mubr.bf16.mxu0 %v2890
    %2956 = vmatmul.mubr.bf16.gmra.mrb[0].mxu0 %v2863
    %v2957 = vpop.f32.mrb[0].mxu0
    %v2958 = vadd.f32 0.0, %v2957
    %v2959 = vpop.f32.mrb[0].mxu0
    %v2960 = vpop.f32.mrb[0].mxu0
    %v2961 = vadd.f32 0.0, %v2960
    %v2962 = vpop.f32.mrb[0].mxu0
    %2963 = vmatprep.mubr.bf16.mxu0 %v2893
    %2964 = vmatmul.mubr.bf16.gmra.mrb[0].mxu0 %v2865
    %v2965 = vpop.f32.mrb[0].mxu0
    %v2966 = vadd.f32 0.0, %v2965
    %v2967 = vpop.f32.mrb[0].mxu0
    %v2968 = vpop.f32.mrb[0].mxu0
    %v2969 = vadd.f32 0.0, %v2968
    %v2970 = vpop.f32.mrb[0].mxu0
    %2971 = vmatprep.mubr.bf16.mxu0 %v2896
    %2972 = vmatmul.mubr.bf16.gmra.mrb[0].mxu0 %v2867
    %v2973 = vpop.f32.mrb[0].mxu0
    %v2974 = vadd.f32 0.0, %v2973
    %v2975 = vpop.f32.mrb[0].mxu0
    %v2976 = vpop.f32.mrb[0].mxu0
    %v2977 = vadd.f32 0.0, %v2976
    %v2978 = vpop.f32.mrb[0].mxu0
    %2979 = vmatprep.mubr.bf16.mxu0 %v2899
    %2980 = vmatmul.mubr.bf16.gmra.mrb[0].mxu0 %v2869
    %v2981 = vpop.f32.mrb[0].mxu0
    %v2982 = vadd.f32 0.0, %v2981
    %v2983 = vpop.f32.mrb[0].mxu0
    %v2984 = vpop.f32.mrb[0].mxu0
    %v2985 = vadd.f32 0.0, %v2984
    %v2986 = vpop.f32.mrb[0].mxu0
    %2987 = vmatprep.mubr.bf16.mxu0 %v2902
    %2988 = vmatmul.mubr.bf16.gmra.mrb[0].mxu0 %v2871
    %v2989 = vpop.f32.mrb[0].mxu0
    %v2990 = vadd.f32 0.0, %v2989
    %v2991 = vpop.f32.mrb[0].mxu0
    %v2992 = vpop.f32.mrb[0].mxu0
    %v2993 = vadd.f32 0.0, %v2992
    %v2994 = vpop.f32.mrb[0].mxu0
    %2995 = vmatprep.mubr.bf16.mxu0 %v2905
    %2996 = vmatmul.mubr.bf16.gmra.mrb[0].mxu0 %v2873
    %v2997 = vpop.f32.mrb[0].mxu0
    %v2998 = vadd.f32 0.0, %v2997
    %v2999 = vpop.f32.mrb[0].mxu0
    %v3000 = vpop.f32.mrb[0].mxu0
    %v3001 = vadd.f32 0.0, %v3000
    %v3002 = vpop.f32.mrb[0].mxu0
    %3003 = vdwg.mxu0
    %3004 = vadd.xlane.f32.xlu0 %v2942
    %v3005 = vpop.xlane.xlu0 %3004
    %3006 = vadd.xlane.f32.xlu0 %v2945
    %v3007 = vpop.xlane.xlu0 %3006
    %3008 = vadd.xlane.f32.xlu0 %v2950
    %v3009 = vpop.xlane.xlu0 %3008
    %3010 = vadd.xlane.f32.xlu0 %v2953
    %v3011 = vpop.xlane.xlu0 %3010
    %3012 = vadd.xlane.f32.xlu0 %v2958
    %v3013 = vpop.xlane.xlu0 %3012
    %3014 = vadd.xlane.f32.xlu0 %v2961
    %v3015 = vpop.xlane.xlu0 %3014
    %3016 = vadd.xlane.f32.xlu0 %v2966
    %v3017 = vpop.xlane.xlu0 %3016
    %3018 = vadd.xlane.f32.xlu0 %v2969
    %v3019 = vpop.xlane.xlu0 %3018
    %3020 = vadd.xlane.f32.xlu0 %v2974
    %v3021 = vpop.xlane.xlu0 %3020
    %3022 = vadd.xlane.f32.xlu0 %v2977
    %v3023 = vpop.xlane.xlu0 %3022
    %3024 = vadd.xlane.f32.xlu0 %v2982
    %v3025 = vpop.xlane.xlu0 %3024
    %3026 = vadd.xlane.f32.xlu0 %v2985
    %v3027 = vpop.xlane.xlu0 %3026
    %3028 = vadd.xlane.f32.xlu0 %v2990
    %v3029 = vpop.xlane.xlu0 %3028
    %3030 = vadd.xlane.f32.xlu0 %v2993
    %v3031 = vpop.xlane.xlu0 %3030
    %3032 = vadd.xlane.f32.xlu0 %v2998
    %v3033 = vpop.xlane.xlu0 %3032
    %3034 = vadd.xlane.f32.xlu0 %v3001
    %v3035 = vpop.xlane.xlu0 %3034
    %v3036 = vmul.f32 %v3005, 0.0078125
    %v3037 = vmul.f32 %v3007, 0.0078125
    %v3038 = vmul.f32 %v3009, 0.0078125
    %v3039 = vmul.f32 %v3011, 0.0078125
    %v3040 = vmul.f32 %v3013, 0.0078125
    %v3041 = vmul.f32 %v3015, 0.0078125
    %v3042 = vmul.f32 %v3017, 0.0078125
    %v3043 = vmul.f32 %v3019, 0.0078125
    %v3044 = vmul.f32 %v3021, 0.0078125
    %v3045 = vmul.f32 %v3023, 0.0078125
    %v3046 = vmul.f32 %v3025, 0.0078125
    %v3047 = vmul.f32 %v3027, 0.0078125
    %v3048 = vmul.f32 %v3029, 0.0078125
    %v3049 = vmul.f32 %v3031, 0.0078125
    %v3050 = vmul.f32 %v3033, 0.0078125
    %v3051 = vmul.f32 %v3035, 0.0078125
    %v3052 = vsub.f32 %v2942, %v3036
    %v3053 = vsub.f32 %v2945, %v3037
    %v3054 = vsub.f32 %v2950, %v3038
    %v3055 = vsub.f32 %v2953, %v3039
    %v3056 = vsub.f32 %v2958, %v3040
    %v3057 = vsub.f32 %v2961, %v3041
    %v3058 = vsub.f32 %v2966, %v3042
    %v3059 = vsub.f32 %v2969, %v3043
    %v3060 = vsub.f32 %v2974, %v3044
    %v3061 = vsub.f32 %v2977, %v3045
    %v3062 = vsub.f32 %v2982, %v3046
    %v3063 = vsub.f32 %v2985, %v3047
    %v3064 = vsub.f32 %v2990, %v3048
    %v3065 = vsub.f32 %v2993, %v3049
    %v3066 = vsub.f32 %v2998, %v3050
    %v3067 = vsub.f32 %v3001, %v3051
    %v3068 = vmul.f32 %v3052, %v3052
    %v3069 = vmul.f32 %v3053, %v3053
    %v3070 = vmul.f32 %v3054, %v3054
    %v3071 = vmul.f32 %v3055, %v3055
    %v3072 = vmul.f32 %v3056, %v3056
    %v3073 = vmul.f32 %v3057, %v3057
    %v3074 = vmul.f32 %v3058, %v3058
    %v3075 = vmul.f32 %v3059, %v3059
    %v3076 = vmul.f32 %v3060, %v3060
    %v3077 = vmul.f32 %v3061, %v3061
    %v3078 = vmul.f32 %v3062, %v3062
    %v3079 = vmul.f32 %v3063, %v3063
    %v3080 = vmul.f32 %v3064, %v3064
    %v3081 = vmul.f32 %v3065, %v3065
    %v3082 = vmul.f32 %v3066, %v3066
    %v3083 = vmul.f32 %v3067, %v3067
    %3084 = vadd.xlane.f32.xlu0 %v3068
    %v3085 = vpop.xlane.xlu0 %3084
    %3086 = vadd.xlane.f32.xlu0 %v3069
    %v3087 = vpop.xlane.xlu0 %3086
    %3088 = vadd.xlane.f32.xlu0 %v3070
    %v3089 = vpop.xlane.xlu0 %3088
    %3090 = vadd.xlane.f32.xlu0 %v3071
    %v3091 = vpop.xlane.xlu0 %3090
    %3092 = vadd.xlane.f32.xlu0 %v3072
    %v3093 = vpop.xlane.xlu0 %3092
    %3094 = vadd.xlane.f32.xlu0 %v3073
    %v3095 = vpop.xlane.xlu0 %3094
    %3096 = vadd.xlane.f32.xlu0 %v3074
    %v3097 = vpop.xlane.xlu0 %3096
    %3098 = vadd.xlane.f32.xlu0 %v3075
    %v3099 = vpop.xlane.xlu0 %3098
    %3100 = vadd.xlane.f32.xlu0 %v3076
    %v3101 = vpop.xlane.xlu0 %3100
    %3102 = vadd.xlane.f32.xlu0 %v3077
    %v3103 = vpop.xlane.xlu0 %3102
    %3104 = vadd.xlane.f32.xlu0 %v3078
    %v3105 = vpop.xlane.xlu0 %3104
    %3106 = vadd.xlane.f32.xlu0 %v3079
    %v3107 = vpop.xlane.xlu0 %3106
    %3108 = vadd.xlane.f32.xlu0 %v3080
    %v3109 = vpop.xlane.xlu0 %3108
    %3110 = vadd.xlane.f32.xlu0 %v3081
    %v3111 = vpop.xlane.xlu0 %3110
    %3112 = vadd.xlane.f32.xlu0 %v3082
    %v3113 = vpop.xlane.xlu0 %3112
    %3114 = vadd.xlane.f32.xlu0 %v3083
    %v3115 = vpop.xlane.xlu0 %3114
    %v3116 = vmul.f32 %v3085, 0.0078125
    %v3117 = vmul.f32 %v3087, 0.0078125
    %v3118 = vmul.f32 %v3089, 0.0078125
    %v3119 = vmul.f32 %v3091, 0.0078125
    %v3120 = vmul.f32 %v3093, 0.0078125
    %v3121 = vmul.f32 %v3095, 0.0078125
    %v3122 = vmul.f32 %v3097, 0.0078125
    %v3123 = vmul.f32 %v3099, 0.0078125
    %v3124 = vmul.f32 %v3101, 0.0078125
    %v3125 = vmul.f32 %v3103, 0.0078125
    %v3126 = vmul.f32 %v3105, 0.0078125
    %v3127 = vmul.f32 %v3107, 0.0078125
    %v3128 = vmul.f32 %v3109, 0.0078125
    %v3129 = vmul.f32 %v3111, 0.0078125
    %v3130 = vmul.f32 %v3113, 0.0078125
    %v3131 = vmul.f32 %v3115, 0.0078125
    %v3132 = vld [vmem:[#allocation16] sm:$0xff]
    %v3133 = vld [vmem:[#allocation16 + $0x8] sm:$0xff]
    %v3134 = vld [vmem:[#allocation16 + $0x10] sm:$0xff]
    %v3135 = vld [vmem:[#allocation16 + $0x18] sm:$0xff]
    %v3136 = vld [vmem:[#allocation16 + $0x20] sm:$0xff]
    %v3137 = vld [vmem:[#allocation16 + $0x28] sm:$0xff]
    %v3138 = vld [vmem:[#allocation16 + $0x30] sm:$0xff]
    %v3139 = vld [vmem:[#allocation16 + $0x38] sm:$0xff]
    %v3140 = vld [vmem:[#allocation16 + $0x40] sm:$0xff]
    %v3141 = vld [vmem:[#allocation16 + $0x48] sm:$0xff]
    %v3142 = vld [vmem:[#allocation16 + $0x50] sm:$0xff]
    %v3143 = vld [vmem:[#allocation16 + $0x58] sm:$0xff]
    %v3144 = vld [vmem:[#allocation16 + $0x60] sm:$0xff]
    %v3145 = vld [vmem:[#allocation16 + $0x68] sm:$0xff]
    %v3146 = vld [vmem:[#allocation16 + $0x70] sm:$0xff]
    %v3147 = vld [vmem:[#allocation16 + $0x78] sm:$0xff]
    %v3148 = vadd.f32 %v3116, 1e-05
    %v3149 = vadd.f32 %v3117, 1e-05
    %v3150 = vadd.f32 %v3118, 1e-05
    %v3151 = vadd.f32 %v3119, 1e-05
    %v3152 = vadd.f32 %v3120, 1e-05
    %v3153 = vadd.f32 %v3121, 1e-05
    %v3154 = vadd.f32 %v3122, 1e-05
    %v3155 = vadd.f32 %v3123, 1e-05
    %v3156 = vadd.f32 %v3124, 1e-05
    %v3157 = vadd.f32 %v3125, 1e-05
    %v3158 = vadd.f32 %v3126, 1e-05
    %v3159 = vadd.f32 %v3127, 1e-05
    %v3160 = vadd.f32 %v3128, 1e-05
    %v3161 = vadd.f32 %v3129, 1e-05
    %v3162 = vadd.f32 %v3130, 1e-05
    %v3163 = vadd.f32 %v3131, 1e-05
    %v3164 = vrsqrt.pop %v3148
    %v3165 = vrsqrt.pop %v3149
    %v3166 = vrsqrt.pop %v3150
    %v3167 = vrsqrt.pop %v3151
    %v3168 = vrsqrt.pop %v3152
    %v3169 = vrsqrt.pop %v3153
    %v3170 = vrsqrt.pop %v3154
    %v3171 = vrsqrt.pop %v3155
    %v3172 = vrsqrt.pop %v3156
    %v3173 = vrsqrt.pop %v3157
    %v3174 = vrsqrt.pop %v3158
    %v3175 = vrsqrt.pop %v3159
    %v3176 = vrsqrt.pop %v3160
    %v3177 = vrsqrt.pop %v3161
    %v3178 = vrsqrt.pop %v3162
    %v3179 = vrsqrt.pop %v3163
    %v3180 = vmul.f32 %v3132, %v3164
    %v3181 = vmul.f32 %v3133, %v3165
    %v3182 = vmul.f32 %v3134, %v3166
    %v3183 = vmul.f32 %v3135, %v3167
    %v3184 = vmul.f32 %v3136, %v3168
    %v3185 = vmul.f32 %v3137, %v3169
    %v3186 = vmul.f32 %v3138, %v3170
    %v3187 = vmul.f32 %v3139, %v3171
    %v3188 = vmul.f32 %v3140, %v3172
    %v3189 = vmul.f32 %v3141, %v3173
    %v3190 = vmul.f32 %v3142, %v3174
    %v3191 = vmul.f32 %v3143, %v3175
    %v3192 = vmul.f32 %v3144, %v3176
    %v3193 = vmul.f32 %v3145, %v3177
    %v3194 = vmul.f32 %v3146, %v3178
    %v3195 = vmul.f32 %v3147, %v3179
    %v3196 = vld [vmem:[#allocation17] sm:$0xff]
    %v3197 = vld [vmem:[#allocation17 + $0x8] sm:$0xff]
    %v3198 = vld [vmem:[#allocation17 + $0x10] sm:$0xff]
    %v3199 = vld [vmem:[#allocation17 + $0x18] sm:$0xff]
    %v3200 = vld [vmem:[#allocation17 + $0x20] sm:$0xff]
    %v3201 = vld [vmem:[#allocation17 + $0x28] sm:$0xff]
    %v3202 = vld [vmem:[#allocation17 + $0x30] sm:$0xff]
    %v3203 = vld [vmem:[#allocation17 + $0x38] sm:$0xff]
    %v3204 = vld [vmem:[#allocation17 + $0x40] sm:$0xff]
    %v3205 = vld [vmem:[#allocation17 + $0x48] sm:$0xff]
    %v3206 = vld [vmem:[#allocation17 + $0x50] sm:$0xff]
    %v3207 = vld [vmem:[#allocation17 + $0x58] sm:$0xff]
    %v3208 = vld [vmem:[#allocation17 + $0x60] sm:$0xff]
    %v3209 = vld [vmem:[#allocation17 + $0x68] sm:$0xff]
    %v3210 = vld [vmem:[#allocation17 + $0x70] sm:$0xff]
    %v3211 = vld [vmem:[#allocation17 + $0x78] sm:$0xff]
    %v3212 = vmul.f32 %v3036, %v3180
    %v3213 = vmul.f32 %v3037, %v3181
    %v3214 = vmul.f32 %v3038, %v3182
    %v3215 = vmul.f32 %v3039, %v3183
    %v3216 = vmul.f32 %v3040, %v3184
    %v3217 = vmul.f32 %v3041, %v3185
    %v3218 = vmul.f32 %v3042, %v3186
    %v3219 = vmul.f32 %v3043, %v3187
    %v3220 = vmul.f32 %v3044, %v3188
    %v3221 = vmul.f32 %v3045, %v3189
    %v3222 = vmul.f32 %v3046, %v3190
    %v3223 = vmul.f32 %v3047, %v3191
    %v3224 = vmul.f32 %v3048, %v3192
    %v3225 = vmul.f32 %v3049, %v3193
    %v3226 = vmul.f32 %v3050, %v3194
    %v3227 = vmul.f32 %v3051, %v3195
    %v3228 = vsub.f32 %v3196, %v3212
    %v3229 = vsub.f32 %v3197, %v3213
    %v3230 = vsub.f32 %v3198, %v3214
    %v3231 = vsub.f32 %v3199, %v3215
    %v3232 = vsub.f32 %v3200, %v3216
    %v3233 = vsub.f32 %v3201, %v3217
    %v3234 = vsub.f32 %v3202, %v3218
    %v3235 = vsub.f32 %v3203, %v3219
    %v3236 = vsub.f32 %v3204, %v3220
    %v3237 = vsub.f32 %v3205, %v3221
    %v3238 = vsub.f32 %v3206, %v3222
    %v3239 = vsub.f32 %v3207, %v3223
    %v3240 = vsub.f32 %v3208, %v3224
    %v3241 = vsub.f32 %v3209, %v3225
    %v3242 = vsub.f32 %v3210, %v3226
    %v3243 = vsub.f32 %v3211, %v3227
    %3245 = vset.pattern.permute.xlu0 0
    %3246 = vperm.xlu0 %3245, %v3180
    %v3247 = vpop.permute.xlu0 %3246
    %3250 = vset.pattern.permute.xlu0 0
    %3251 = vperm.xlu0 %3250, %v3181
    %v3252 = vpop.permute.xlu0 %3251
    %3255 = vset.pattern.permute.xlu0 0
    %3256 = vperm.xlu0 %3255, %v3182
    %v3257 = vpop.permute.xlu0 %3256
    %3260 = vset.pattern.permute.xlu0 0
    %3261 = vperm.xlu0 %3260, %v3183
    %v3262 = vpop.permute.xlu0 %3261
    %3265 = vset.pattern.permute.xlu0 0
    %3266 = vperm.xlu0 %3265, %v3184
    %v3267 = vpop.permute.xlu0 %3266
    %3270 = vset.pattern.permute.xlu0 0
    %3271 = vperm.xlu0 %3270, %v3185
    %v3272 = vpop.permute.xlu0 %3271
    %3275 = vset.pattern.permute.xlu0 0
    %3276 = vperm.xlu0 %3275, %v3186
    %v3277 = vpop.permute.xlu0 %3276
    %3280 = vset.pattern.permute.xlu0 0
    %3281 = vperm.xlu0 %3280, %v3187
    %v3282 = vpop.permute.xlu0 %3281
    %3285 = vset.pattern.permute.xlu0 0
    %3286 = vperm.xlu0 %3285, %v3188
    %v3287 = vpop.permute.xlu0 %3286
    %3290 = vset.pattern.permute.xlu0 0
    %3291 = vperm.xlu0 %3290, %v3189
    %v3292 = vpop.permute.xlu0 %3291
    %3295 = vset.pattern.permute.xlu0 0
    %3296 = vperm.xlu0 %3295, %v3190
    %v3297 = vpop.permute.xlu0 %3296
    %3300 = vset.pattern.permute.xlu0 0
    %3301 = vperm.xlu0 %3300, %v3191
    %v3302 = vpop.permute.xlu0 %3301
    %3305 = vset.pattern.permute.xlu0 0
    %3306 = vperm.xlu0 %3305, %v3192
    %v3307 = vpop.permute.xlu0 %3306
    %3310 = vset.pattern.permute.xlu0 0
    %3311 = vperm.xlu0 %3310, %v3193
    %v3312 = vpop.permute.xlu0 %3311
    %3315 = vset.pattern.permute.xlu0 0
    %3316 = vperm.xlu0 %3315, %v3194
    %v3317 = vpop.permute.xlu0 %3316
    %3320 = vset.pattern.permute.xlu0 0
    %3321 = vperm.xlu0 %3320, %v3195
    %v3322 = vpop.permute.xlu0 %3321
    %v3324 = vmul.f32 %v2942, %v3247
    %v3325 = vmul.f32 %v2945, %v3252
    %v3326 = vmul.f32 %v2950, %v3257
    %v3327 = vmul.f32 %v2953, %v3262
    %v3328 = vmul.f32 %v2958, %v3267
    %v3329 = vmul.f32 %v2961, %v3272
    %v3330 = vmul.f32 %v2966, %v3277
    %v3331 = vmul.f32 %v2969, %v3282
    %v3332 = vmul.f32 %v2974, %v3287
    %v3333 = vmul.f32 %v2977, %v3292
    %v3334 = vmul.f32 %v2982, %v3297
    %v3335 = vmul.f32 %v2985, %v3302
    %v3336 = vmul.f32 %v2990, %v3307
    %v3337 = vmul.f32 %v2993, %v3312
    %v3338 = vmul.f32 %v2998, %v3317
    %v3339 = vmul.f32 %v3001, %v3322
    %3341 = vset.pattern.permute.xlu0 0
    %3342 = vperm.xlu0 %3341, %v3228
    %v3343 = vpop.permute.xlu0 %3342
    %3346 = vset.pattern.permute.xlu0 0
    %3347 = vperm.xlu0 %3346, %v3229
    %v3348 = vpop.permute.xlu0 %3347
    %3351 = vset.pattern.permute.xlu0 0
    %3352 = vperm.xlu0 %3351, %v3230
    %v3353 = vpop.permute.xlu0 %3352
    %3356 = vset.pattern.permute.xlu0 0
    %3357 = vperm.xlu0 %3356, %v3231
    %v3358 = vpop.permute.xlu0 %3357
    %3361 = vset.pattern.permute.xlu0 0
    %3362 = vperm.xlu0 %3361, %v3232
    %v3363 = vpop.permute.xlu0 %3362
    %3366 = vset.pattern.permute.xlu0 0
    %3367 = vperm.xlu0 %3366, %v3233
    %v3368 = vpop.permute.xlu0 %3367
    %3371 = vset.pattern.permute.xlu0 0
    %3372 = vperm.xlu0 %3371, %v3234
    %v3373 = vpop.permute.xlu0 %3372
    %3376 = vset.pattern.permute.xlu0 0
    %3377 = vperm.xlu0 %3376, %v3235
    %v3378 = vpop.permute.xlu0 %3377
    %3381 = vset.pattern.permute.xlu0 0
    %3382 = vperm.xlu0 %3381, %v3236
    %v3383 = vpop.permute.xlu0 %3382
    %3386 = vset.pattern.permute.xlu0 0
    %3387 = vperm.xlu0 %3386, %v3237
    %v3388 = vpop.permute.xlu0 %3387
    %3391 = vset.pattern.permute.xlu0 0
    %3392 = vperm.xlu0 %3391, %v3238
    %v3393 = vpop.permute.xlu0 %3392
    %3396 = vset.pattern.permute.xlu0 0
    %3397 = vperm.xlu0 %3396, %v3239
    %v3398 = vpop.permute.xlu0 %3397
    %3401 = vset.pattern.permute.xlu0 0
    %3402 = vperm.xlu0 %3401, %v3240
    %v3403 = vpop.permute.xlu0 %3402
    %3406 = vset.pattern.permute.xlu0 0
    %3407 = vperm.xlu0 %3406, %v3241
    %v3408 = vpop.permute.xlu0 %3407
    %3411 = vset.pattern.permute.xlu0 0
    %3412 = vperm.xlu0 %3411, %v3242
    %v3413 = vpop.permute.xlu0 %3412
    %3416 = vset.pattern.permute.xlu0 0
    %3417 = vperm.xlu0 %3416, %v3243
    %v3418 = vpop.permute.xlu0 %3417
    %v3420 = vadd.f32 %v3324, %v3343
    %v3421 = vadd.f32 %v3325, %v3348
    %v3422 = vadd.f32 %v3326, %v3353
    %v3423 = vadd.f32 %v3327, %v3358
    %v3424 = vadd.f32 %v3328, %v3363
    %v3425 = vadd.f32 %v3329, %v3368
    %v3426 = vadd.f32 %v3330, %v3373
    %v3427 = vadd.f32 %v3331, %v3378
    %v3428 = vadd.f32 %v3332, %v3383
    %v3429 = vadd.f32 %v3333, %v3388
    %v3430 = vadd.f32 %v3334, %v3393
    %v3431 = vadd.f32 %v3335, %v3398
    %v3432 = vadd.f32 %v3336, %v3403
    %v3433 = vadd.f32 %v3337, %v3408
    %v3434 = vadd.f32 %v3338, %v3413
    %v3435 = vadd.f32 %v3339, %v3418
    %v3436 = vmax.f32 %v3420, 0.0
    %v3437 = vmax.f32 %v3421, 0.0
    %v3438 = vmax.f32 %v3422, 0.0
    %v3439 = vmax.f32 %v3423, 0.0
    %v3440 = vmax.f32 %v3424, 0.0
    %v3441 = vmax.f32 %v3425, 0.0
    %v3442 = vmax.f32 %v3426, 0.0
    %v3443 = vmax.f32 %v3427, 0.0
    %v3444 = vmax.f32 %v3428, 0.0
    %v3445 = vmax.f32 %v3429, 0.0
    %v3446 = vmax.f32 %v3430, 0.0
    %v3447 = vmax.f32 %v3431, 0.0
    %v3448 = vmax.f32 %v3432, 0.0
    %v3449 = vmax.f32 %v3433, 0.0
    %v3450 = vmax.f32 %v3434, 0.0
    %v3451 = vmax.f32 %v3435, 0.0
    %v3452 = vpack.c.bf16 %v3437, %v3436
    %v3453 = vpack.c.bf16 %v3439, %v3438
    %v3454 = vpack.c.bf16 %v3441, %v3440
    %v3455 = vpack.c.bf16 %v3443, %v3442
    %v3456 = vpack.c.bf16 %v3445, %v3444
    %v3457 = vpack.c.bf16 %v3447, %v3446
    %v3458 = vpack.c.bf16 %v3449, %v3448
    %v3459 = vpack.c.bf16 %v3451, %v3450
    %v3460 = vld [vmem:[#allocation19] sm:$0xf]
    %v3461 = vld [vmem:[#allocation19 + $0x4] sm:$0xf]
    %v3462 = vld [vmem:[#allocation19 + $0x8] sm:$0xf]
    %v3463 = vld [vmem:[#allocation19 + $0xc] sm:$0xf]
    %v3464 = vld [vmem:[#allocation19 + $0x10] sm:$0xf]
    %v3465 = vld [vmem:[#allocation19 + $0x14] sm:$0xf]
    %v3466 = vld [vmem:[#allocation19 + $0x18] sm:$0xf]
    %v3467 = vld [vmem:[#allocation19 + $0x1c] sm:$0xf]
    %v3476 = vunpack.c.l.b16 %v3460
    %v3477 = vunpack.c.l.b16 %v3461
    %v3478 = vunpack.c.l.b16 %v3462
    %v3479 = vunpack.c.l.b16 %v3463
    %v3480 = vunpack.c.l.b16 %v3464
    %v3481 = vunpack.c.l.b16 %v3465
    %v3482 = vunpack.c.l.b16 %v3466
    %v3483 = vunpack.c.l.b16 %v3467
    %v3484 = vpack.c.b16 %v3477, %v3476
    %v3485 = vpack.c.b16 %v3479, %v3478
    %v3486 = vpack.c.b16 %v3481, %v3480
    %v3487 = vpack.c.b16 %v3483, %v3482
    %3492 = vmatprep.subr.bf16.mxu0 0
    %3493 = vmatpush1.bf16.msra.mxu0 %v3452
    %3494 = vmatprep.subr.bf16.mxu0 0
    %3495 = vmatpush1.bf16.msra.mxu0 %v3453
    %3496 = vmatprep.subr.bf16.mxu0 0
    %3497 = vmatpush1.bf16.msra.mxu0 %v3454
    %3498 = vmatprep.subr.bf16.mxu0 0
    %3499 = vmatpush1.bf16.msra.mxu0 %v3455
    %3500 = vmatprep.subr.bf16.mxu0 0
    %3501 = vmatpush1.bf16.msra.mxu0 %v3456
    %3502 = vmatprep.subr.bf16.mxu0 0
    %3503 = vmatpush1.bf16.msra.mxu0 %v3457
    %3504 = vmatprep.subr.bf16.mxu0 0
    %3505 = vmatpush1.bf16.msra.mxu0 %v3458
    %3506 = vmatprep.subr.bf16.mxu0 0
    %3507 = vmatpush1.bf16.msra.mxu0 %v3459
    %3508 = vmatprep.subr.bf16.mxu0 0
    %3509 = vmatpush1.bf16.msra.mxu0 0
    %3510 = vmatprep.subr.bf16.mxu0 0
    %3511 = vmatpush1.bf16.msra.mxu0 0
    %3512 = vmatprep.subr.bf16.mxu0 0
    %3513 = vmatpush1.bf16.msra.mxu0 0
    %3514 = vmatprep.subr.bf16.mxu0 0
    %3515 = vmatpush1.bf16.msra.mxu0 0
    %3516 = vmatprep.subr.bf16.mxu0 0
    %3517 = vmatpush1.bf16.msra.mxu0 0
    %3518 = vmatprep.subr.bf16.mxu0 0
    %3519 = vmatpush1.bf16.msra.mxu0 0
    %3520 = vmatprep.subr.bf16.mxu0 0
    %3521 = vmatpush1.bf16.msra.mxu0 0
    %3522 = vmatprep.subr.bf16.mxu0 0
    %3523 = vmatpush1.bf16.msra.mxu0 0
    %3524 = vmatprep.mubr.bf16.mxu0 0
    %3525 = vmatmul.mubr.bf16.gmra.mrb[0].mxu0 %v3484
    %v3526 = vpop.f32.mrb[0].mxu0
    %v3527 = vadd.f32 0.0, %v3526
    %v3528 = vpop.f32.mrb[0].mxu0
    %v3529 = vpop.f32.mrb[0].mxu0
    %v3530 = vadd.f32 0.0, %v3529
    %v3531 = vpop.f32.mrb[0].mxu0
    %3532 = vmatprep.mubr.bf16.mxu0 0
    %3533 = vmatmul.mubr.bf16.gmra.mrb[0].mxu0 %v3485
    %v3534 = vpop.f32.mrb[0].mxu0
    %v3535 = vadd.f32 0.0, %v3534
    %v3536 = vpop.f32.mrb[0].mxu0
    %v3537 = vpop.f32.mrb[0].mxu0
    %v3538 = vadd.f32 0.0, %v3537
    %v3539 = vpop.f32.mrb[0].mxu0
    %3540 = vmatprep.mubr.bf16.mxu0 0
    %3541 = vmatmul.mubr.bf16.gmra.mrb[0].mxu0 %v3486
    %v3542 = vpop.f32.mrb[0].mxu0
    %v3543 = vadd.f32 0.0, %v3542
    %v3544 = vpop.f32.mrb[0].mxu0
    %v3545 = vpop.f32.mrb[0].mxu0
    %v3546 = vadd.f32 0.0, %v3545
    %v3547 = vpop.f32.mrb[0].mxu0
    %3548 = vmatprep.mubr.bf16.mxu0 0
    %3549 = vmatmul.mubr.bf16.gmra.mrb[0].mxu0 %v3487
    %v3550 = vpop.f32.mrb[0].mxu0
    %v3551 = vadd.f32 0.0, %v3550
    %v3552 = vpop.f32.mrb[0].mxu0
    %v3553 = vpop.f32.mrb[0].mxu0
    %v3554 = vadd.f32 0.0, %v3553
    %v3555 = vpop.f32.mrb[0].mxu0
    %3556 = vdwg.mxu0
    %3557 = vadd.xlane.f32.xlu0 %v3527
    %v3558 = vpop.xlane.xlu0 %3557
    %3559 = vadd.xlane.f32.xlu0 %v3530
    %v3560 = vpop.xlane.xlu0 %3559
    %3561 = vadd.xlane.f32.xlu0 %v3535
    %v3562 = vpop.xlane.xlu0 %3561
    %3563 = vadd.xlane.f32.xlu0 %v3538
    %v3564 = vpop.xlane.xlu0 %3563
    %3565 = vadd.xlane.f32.xlu0 %v3543
    %v3566 = vpop.xlane.xlu0 %3565
    %3567 = vadd.xlane.f32.xlu0 %v3546
    %v3568 = vpop.xlane.xlu0 %3567
    %3569 = vadd.xlane.f32.xlu0 %v3551
    %v3570 = vpop.xlane.xlu0 %3569
    %3571 = vadd.xlane.f32.xlu0 %v3554
    %v3572 = vpop.xlane.xlu0 %3571
    %v3573 = vmul.f32 %v3558, 0.0078125
    %v3574 = vmul.f32 %v3560, 0.0078125
    %v3575 = vmul.f32 %v3562, 0.0078125
    %v3576 = vmul.f32 %v3564, 0.0078125
    %v3577 = vmul.f32 %v3566, 0.0078125
    %v3578 = vmul.f32 %v3568, 0.0078125
    %v3579 = vmul.f32 %v3570, 0.0078125
    %v3580 = vmul.f32 %v3572, 0.0078125
    %v3581 = vsub.f32 %v3527, %v3573
    %v3582 = vsub.f32 %v3530, %v3574
    %v3583 = vsub.f32 %v3535, %v3575
    %v3584 = vsub.f32 %v3538, %v3576
    %v3585 = vsub.f32 %v3543, %v3577
    %v3586 = vsub.f32 %v3546, %v3578
    %v3587 = vsub.f32 %v3551, %v3579
    %v3588 = vsub.f32 %v3554, %v3580
    %v3589 = vmul.f32 %v3581, %v3581
    %v3590 = vmul.f32 %v3582, %v3582
    %v3591 = vmul.f32 %v3583, %v3583
    %v3592 = vmul.f32 %v3584, %v3584
    %v3593 = vmul.f32 %v3585, %v3585
    %v3594 = vmul.f32 %v3586, %v3586
    %v3595 = vmul.f32 %v3587, %v3587
    %v3596 = vmul.f32 %v3588, %v3588
    %3597 = vadd.xlane.f32.xlu0 %v3589
    %v3598 = vpop.xlane.xlu0 %3597
    %3599 = vadd.xlane.f32.xlu0 %v3590
    %v3600 = vpop.xlane.xlu0 %3599
    %3601 = vadd.xlane.f32.xlu0 %v3591
    %v3602 = vpop.xlane.xlu0 %3601
    %3603 = vadd.xlane.f32.xlu0 %v3592
    %v3604 = vpop.xlane.xlu0 %3603
    %3605 = vadd.xlane.f32.xlu0 %v3593
    %v3606 = vpop.xlane.xlu0 %3605
    %3607 = vadd.xlane.f32.xlu0 %v3594
    %v3608 = vpop.xlane.xlu0 %3607
    %3609 = vadd.xlane.f32.xlu0 %v3595
    %v3610 = vpop.xlane.xlu0 %3609
    %3611 = vadd.xlane.f32.xlu0 %v3596
    %v3612 = vpop.xlane.xlu0 %3611
    %v3613 = vmul.f32 %v3598, 0.0078125
    %v3614 = vmul.f32 %v3600, 0.0078125
    %v3615 = vmul.f32 %v3602, 0.0078125
    %v3616 = vmul.f32 %v3604, 0.0078125
    %v3617 = vmul.f32 %v3606, 0.0078125
    %v3618 = vmul.f32 %v3608, 0.0078125
    %v3619 = vmul.f32 %v3610, 0.0078125
    %v3620 = vmul.f32 %v3612, 0.0078125
    %v3621 = vld [vmem:[#allocation20] sm:$0xff]
    %v3622 = vld [vmem:[#allocation20 + $0x8] sm:$0xff]
    %v3623 = vld [vmem:[#allocation20 + $0x10] sm:$0xff]
    %v3624 = vld [vmem:[#allocation20 + $0x18] sm:$0xff]
    %v3625 = vld [vmem:[#allocation20 + $0x20] sm:$0xff]
    %v3626 = vld [vmem:[#allocation20 + $0x28] sm:$0xff]
    %v3627 = vld [vmem:[#allocation20 + $0x30] sm:$0xff]
    %v3628 = vld [vmem:[#allocation20 + $0x38] sm:$0xff]
    %v3629 = vadd.f32 %v3613, 1e-05
    %v3630 = vadd.f32 %v3614, 1e-05
    %v3631 = vadd.f32 %v3615, 1e-05
    %v3632 = vadd.f32 %v3616, 1e-05
    %v3633 = vadd.f32 %v3617, 1e-05
    %v3634 = vadd.f32 %v3618, 1e-05
    %v3635 = vadd.f32 %v3619, 1e-05
    %v3636 = vadd.f32 %v3620, 1e-05
    %v3637 = vrsqrt.pop %v3629
    %v3638 = vrsqrt.pop %v3630
    %v3639 = vrsqrt.pop %v3631
    %v3640 = vrsqrt.pop %v3632
    %v3641 = vrsqrt.pop %v3633
    %v3642 = vrsqrt.pop %v3634
    %v3643 = vrsqrt.pop %v3635
    %v3644 = vrsqrt.pop %v3636
    %v3645 = vmul.f32 %v3621, %v3637
    %v3646 = vmul.f32 %v3622, %v3638
    %v3647 = vmul.f32 %v3623, %v3639
    %v3648 = vmul.f32 %v3624, %v3640
    %v3649 = vmul.f32 %v3625, %v3641
    %v3650 = vmul.f32 %v3626, %v3642
    %v3651 = vmul.f32 %v3627, %v3643
    %v3652 = vmul.f32 %v3628, %v3644
    %v3653 = vld [vmem:[#allocation22] sm:$0xff]
    %v3654 = vld [vmem:[#allocation22 + $0x8] sm:$0xff]
    %v3655 = vld [vmem:[#allocation22 + $0x10] sm:$0xff]
    %v3656 = vld [vmem:[#allocation22 + $0x18] sm:$0xff]
    %v3657 = vld [vmem:[#allocation22 + $0x20] sm:$0xff]
    %v3658 = vld [vmem:[#allocation22 + $0x28] sm:$0xff]
    %v3659 = vld [vmem:[#allocation22 + $0x30] sm:$0xff]
    %v3660 = vld [vmem:[#allocation22 + $0x38] sm:$0xff]
    %v3661 = vmul.f32 %v3573, %v3645
    %v3662 = vmul.f32 %v3574, %v3646
    %v3663 = vmul.f32 %v3575, %v3647
    %v3664 = vmul.f32 %v3576, %v3648
    %v3665 = vmul.f32 %v3577, %v3649
    %v3666 = vmul.f32 %v3578, %v3650
    %v3667 = vmul.f32 %v3579, %v3651
    %v3668 = vmul.f32 %v3580, %v3652
    %v3669 = vsub.f32 %v3653, %v3661
    %v3670 = vsub.f32 %v3654, %v3662
    %v3671 = vsub.f32 %v3655, %v3663
    %v3672 = vsub.f32 %v3656, %v3664
    %v3673 = vsub.f32 %v3657, %v3665
    %v3674 = vsub.f32 %v3658, %v3666
    %v3675 = vsub.f32 %v3659, %v3667
    %v3676 = vsub.f32 %v3660, %v3668
    %3678 = vset.pattern.permute.xlu0 0
    %3679 = vperm.xlu0 %3678, %v3645
    %v3680 = vpop.permute.xlu0 %3679
    %3683 = vset.pattern.permute.xlu0 0
    %3684 = vperm.xlu0 %3683, %v3646
    %v3685 = vpop.permute.xlu0 %3684
    %3688 = vset.pattern.permute.xlu0 0
    %3689 = vperm.xlu0 %3688, %v3647
    %v3690 = vpop.permute.xlu0 %3689
    %3693 = vset.pattern.permute.xlu0 0
    %3694 = vperm.xlu0 %3693, %v3648
    %v3695 = vpop.permute.xlu0 %3694
    %3698 = vset.pattern.permute.xlu0 0
    %3699 = vperm.xlu0 %3698, %v3649
    %v3700 = vpop.permute.xlu0 %3699
    %3703 = vset.pattern.permute.xlu0 0
    %3704 = vperm.xlu0 %3703, %v3650
    %v3705 = vpop.permute.xlu0 %3704
    %3708 = vset.pattern.permute.xlu0 0
    %3709 = vperm.xlu0 %3708, %v3651
    %v3710 = vpop.permute.xlu0 %3709
    %3713 = vset.pattern.permute.xlu0 0
    %3714 = vperm.xlu0 %3713, %v3652
    %v3715 = vpop.permute.xlu0 %3714
    %v3717 = vmul.f32 %v3527, %v3680
    %v3718 = vmul.f32 %v3530, %v3685
    %v3719 = vmul.f32 %v3535, %v3690
    %v3720 = vmul.f32 %v3538, %v3695
    %v3721 = vmul.f32 %v3543, %v3700
    %v3722 = vmul.f32 %v3546, %v3705
    %v3723 = vmul.f32 %v3551, %v3710
    %v3724 = vmul.f32 %v3554, %v3715
    %3726 = vset.pattern.permute.xlu0 0
    %3727 = vperm.xlu0 %3726, %v3669
    %v3728 = vpop.permute.xlu0 %3727
    %3731 = vset.pattern.permute.xlu0 0
    %3732 = vperm.xlu0 %3731, %v3670
    %v3733 = vpop.permute.xlu0 %3732
    %3736 = vset.pattern.permute.xlu0 0
    %3737 = vperm.xlu0 %3736, %v3671
    %v3738 = vpop.permute.xlu0 %3737
    %3741 = vset.pattern.permute.xlu0 0
    %3742 = vperm.xlu0 %3741, %v3672
    %v3743 = vpop.permute.xlu0 %3742
    %3746 = vset.pattern.permute.xlu0 0
    %3747 = vperm.xlu0 %3746, %v3673
    %v3748 = vpop.permute.xlu0 %3747
    %3751 = vset.pattern.permute.xlu0 0
    %3752 = vperm.xlu0 %3751, %v3674
    %v3753 = vpop.permute.xlu0 %3752
    %3756 = vset.pattern.permute.xlu0 0
    %3757 = vperm.xlu0 %3756, %v3675
    %v3758 = vpop.permute.xlu0 %3757
    %3761 = vset.pattern.permute.xlu0 0
    %3762 = vperm.xlu0 %3761, %v3676
    %v3763 = vpop.permute.xlu0 %3762
    %v3765 = vadd.f32 %v3717, %v3728
    %v3766 = vadd.f32 %v3718, %v3733
    %v3767 = vadd.f32 %v3719, %v3738
    %v3768 = vadd.f32 %v3720, %v3743
    %v3769 = vadd.f32 %v3721, %v3748
    %v3770 = vadd.f32 %v3722, %v3753
    %v3771 = vadd.f32 %v3723, %v3758
    %v3772 = vadd.f32 %v3724, %v3763
    %v3773 = vmax.f32 %v3765, 0.0
    %v3774 = vmax.f32 %v3766, 0.0
    %v3775 = vmax.f32 %v3767, 0.0
    %v3776 = vmax.f32 %v3768, 0.0
    %v3777 = vmax.f32 %v3769, 0.0
    %v3778 = vmax.f32 %v3770, 0.0
    %v3779 = vmax.f32 %v3771, 0.0
    %v3780 = vmax.f32 %v3772, 0.0
    %v3781 = vld [vmem:[#allocation23] sm:$0x7]
    %v3782 = vld [vmem:[#allocation25] sm:$0x7]
    %3784 = vset.pattern.permute.xlu0 0
    %3785 = vperm.xlu0 %3784, %v3782
    %v3786 = vpop.permute.xlu0 %3785
    %v3789 = vsel %vm508, %v3781, 0
    %3791 = vmatprep.subr.mxu0 0.0
    %3792 = vmatpush1.msra.mxu0 %v3773
    %3793 = vmatprep.subr.mxu0 0.0
    %3794 = vmatpush1.msra.mxu0 %v3774
    %3795 = vmatprep.subr.mxu0 0.0
    %3796 = vmatpush1.msra.mxu0 %v3775
    %3797 = vmatprep.subr.mxu0 0.0
    %3798 = vmatpush1.msra.mxu0 %v3776
    %3799 = vmatprep.subr.mxu0 0.0
    %3800 = vmatpush1.msra.mxu0 %v3777
    %3801 = vmatprep.subr.mxu0 0.0
    %3802 = vmatpush1.msra.mxu0 %v3778
    %3803 = vmatprep.subr.mxu0 0.0
    %3804 = vmatpush1.msra.mxu0 %v3779
    %3805 = vmatprep.subr.mxu0 0.0
    %3806 = vmatpush1.msra.mxu0 %v3780
    %3807 = vmatprep.subr.mxu0 0.0
    %3808 = vmatpush1.msra.mxu0 0.0
    %3809 = vmatprep.subr.mxu0 0.0
    %3810 = vmatpush1.msra.mxu0 0.0
    %3811 = vmatprep.subr.mxu0 0.0
    %3812 = vmatpush1.msra.mxu0 0.0
    %3813 = vmatprep.subr.mxu0 0.0
    %3814 = vmatpush1.msra.mxu0 0.0
    %3815 = vmatprep.subr.mxu0 0.0
    %3816 = vmatpush1.msra.mxu0 0.0
    %3817 = vmatprep.subr.mxu0 0.0
    %3818 = vmatpush1.msra.mxu0 0.0
    %3819 = vmatprep.subr.mxu0 0.0
    %3820 = vmatpush1.msra.mxu0 0.0
    %3821 = vmatprep.subr.mxu0 0.0
    %3822 = vmatpush1.msra.mxu0 0.0
    %3823 = vmatprep.subr.mxu0 0.0
    %3824 = vmatpush1.msra.mxu0 0.0
    %3825 = vmatprep.subr.mxu0 0.0
    %3826 = vmatpush1.msra.mxu0 0.0
    %3827 = vmatprep.subr.mxu0 0.0
    %3828 = vmatpush1.msra.mxu0 0.0
    %3829 = vmatprep.subr.mxu0 0.0
    %3830 = vmatpush1.msra.mxu0 0.0
    %3831 = vmatprep.subr.mxu0 0.0
    %3832 = vmatpush1.msra.mxu0 0.0
    %3833 = vmatprep.subr.mxu0 0.0
    %3834 = vmatpush1.msra.mxu0 0.0
    %3835 = vmatprep.subr.mxu0 0.0
    %3836 = vmatpush1.msra.mxu0 0.0
    %3837 = vmatprep.subr.mxu0 0.0
    %3838 = vmatpush1.msra.mxu0 0.0
    %3839 = vmatprep.subr.mxu0 0.0
    %3840 = vmatpush1.msra.mxu0 0.0
    %3841 = vmatprep.subr.mxu0 0.0
    %3842 = vmatpush1.msra.mxu0 0.0
    %3843 = vmatprep.subr.mxu0 0.0
    %3844 = vmatpush1.msra.mxu0 0.0
    %3845 = vmatprep.subr.mxu0 0.0
    %3846 = vmatpush1.msra.mxu0 0.0
    %3847 = vmatprep.subr.mxu0 0.0
    %3848 = vmatpush1.msra.mxu0 0.0
    %3849 = vmatprep.subr.mxu0 0.0
    %3850 = vmatpush1.msra.mxu0 0.0
    %3851 = vmatprep.subr.mxu0 0.0
    %3852 = vmatpush1.msra.mxu0 0.0
    %3853 = vmatprep.subr.mxu0 0.0
    %3854 = vmatpush1.msra.mxu0 0.0
    %3855 = vmatprep.mubr.f32.mxu0 0.0
    %3856 = vmatmul.mubr.f32.gmra.mrb[0].mxu0 %v3789
    %v3857 = vpop.f32.mrb[0].mxu0
    %v3858 = vadd.f32 %v3786, %v3857
    %v3859 = vpop.f32.mrb[0].mxu0
    %3860 = vdwg.mxu0
    %v3861 = vtanh.pop %v3858
    %3862 = vst [vmem:[#allocation26] sm:$0x7] %v3861
    // Predicated region
    $region122: #{deformnet_forward.1} parent=1 // pred_check
      _
    $region123: #{deformnet_forward.1} parent=1 // pred_check_branch
      %3864 = sbr.rel (0) target = $region125
    $region124: #{deformnet_forward.1} parent=1 // pred_region
      %s3866 = ssub.s32 64, 64
      %3867 = vsyncadd [#allocation4], %s3866
      %s3869 = sshll.u32 [#allocation26], 4
      %s3870 = int_to_ptr.vmem [resolvable:$true] %s3869
      %3872 = dma.vmem_to_hbm [thread:$0]  %s3870, 64, %s15, [#allocation4]
    $region125: #{deformnet_forward.1} parent=1 // pred_fallthru
      _
    // Predicated region
    $region126: #{deformnet_forward.1} parent=1 // pred_check
      _
    $region127: #{deformnet_forward.1} parent=1 // pred_check_branch
      %3874 = sbr.rel (0) target = $region129
    $region128: #{deformnet_forward.1} parent=1 // pred_region
      %3875 = dma.done [#allocation4], 64
    $region129: #{deformnet_forward.1} parent=1 // pred_fallthru
      _
    %3876 = vsyncpa [#allocation3], 1
    %3877 = vsyncpa [#allocation6], 1
    %3878 = vsyncpa [#allocation9], 1
    %3879 = vsyncpa [#allocation12], 1
    %3880 = vsyncpa [#allocation15], 1
    %3881 = vsyncpa [#allocation18], 1
    %3882 = vsyncpa [#allocation21], 1
    %3883 = vsyncpa [#allocation24], 1
    %3884 = vsyncpa [#allocation4], 1

</llo_original>
